<compile_context>
chip_gen: v6e
topology: v6e:2x2x1
jax: 0.10.0
libtpu: 0.0.40
codegen_flags: <defaults>
</compile_context>

<pallas_src>
import numpy as np

import jax
import jax.numpy as jnp
from jax.experimental import pallas as pl
from jax.experimental.pallas import tpu as pltpu

D_MODEL = 32
NUM_HEADS = 4
HEAD_DIM = D_MODEL // NUM_HEADS      # 8
EXP = NUM_HEADS * D_MODEL            # 128: expanded (i, j, d) lanes per position
HH = NUM_HEADS * NUM_HEADS           # 16: flattened (i, j) head pairs per position
EPS = 1e-5                           # nn.LayerNorm default


def _build_head_mix_constants():
    """Constant 0/1 matrices that vectorize the per-position head-mixing attention.

    Expanded lane index c = i*32 + j*8 + d (i = query head, j = key/value head,
    d = per-head dim); flattened pair index m = i*4 + j.
    """
    c = np.arange(EXP)
    i_of_c = c // D_MODEL
    j_of_c = (c % D_MODEL) // HEAD_DIM
    d_of_c = c % HEAD_DIM
    m_of_c = i_of_c * NUM_HEADS + j_of_c
    r = np.arange(D_MODEL)
    mm = np.arange(HH)

    # q-expansion: (q @ G)[l, c] = q[l, i*8 + d]
    g = (r[:, None] == (i_of_c * HEAD_DIM + d_of_c)[None, :]).astype(np.float32)
    # k/v-expansion: (k @ T)[l, c] = k[l, j*8 + d]   (T = [I I I I])
    t = (r[:, None] == (c % D_MODEL)[None, :]).astype(np.float32)
    # segmented energy sum over d, with 1/sqrt(d_model) folded in:
    #   ((qs*kt) @ S)[l, m] = energy[l, i, j] / sqrt(d_model)
    s = ((m_of_c[:, None] == mm[None, :]).astype(np.float64)
         / np.sqrt(D_MODEL)).astype(np.float32)
    # softmax group-sum over j (block-diagonal 4x4 ones)
    a = ((mm[:, None] // NUM_HEADS) == (mm[None, :] // NUM_HEADS)).astype(np.float32)
    # attention expansion: (attn @ W)[l, c] = attn[l, i, j]
    w = (mm[:, None] == m_of_c[None, :]).astype(np.float32)
    # output gather: ((ae*ve) @ Z)[l, i*8+d] = sum_j attn[l,i,j] * v[l, j*8+d]
    z = np.ascontiguousarray(g.T)
    # per-position LayerNorm mean (segmented mean over 32-lane groups)
    m_ln = np.full((D_MODEL, D_MODEL), 1.0 / D_MODEL, np.float32)
    return g, t, s, a, w, z, m_ln


def mha_kernel(x_ref, wqkv_ref, bqkv_ref, s_ref, a_ref, w_ref, z_ref,
               mln_ref, wo_ref, bo_ref, o_ref):
    f32 = jnp.float32
    dq = x_ref.shape[1] // 3                       # 32*P lanes per q/k/v slab

    # q|k|v arrive as one lane-dense slab; slicing at 128-lane boundaries is free.
    xq = x_ref[:, 0:dq]
    xk = x_ref[:, dq:2 * dq]
    xv = x_ref[:, 2 * dq:3 * dq]

    # Head-expanded projections (head-broadcast constants folded into the
    # block-diagonal weights in the wrapper):
    #   qs[row, p*128 + i*32 + j*8 + d] = q[pos, i*8 + d]
    #   kt[row, p*128 + i*32 + j*8 + d] = k[pos, j*8 + d]   (same for ve / v)
    qs = jnp.dot(xq, wqkv_ref[0], preferred_element_type=f32) + bqkv_ref[0]
    kt = jnp.dot(xk, wqkv_ref[1], preferred_element_type=f32) + bqkv_ref[1]
    ve = jnp.dot(xv, wqkv_ref[2], preferred_element_type=f32) + bqkv_ref[2]

    # energy[pos, i, j] / sqrt(d_model), flattened to 16 lanes per position.
    e = jnp.dot(qs * kt, s_ref[...], preferred_element_type=f32)

    # Softmax over j.  The row-global max is a valid stabilizer (it is a
    # constant shift inside every 4-lane softmax group); energies are O(1)
    # here so no group's exp-sum underflows to zero.
    m = jnp.max(e, axis=-1, keepdims=True)
    p = jnp.exp(e - m)
    gs = jnp.dot(p, a_ref[...], preferred_element_type=f32)    # per-group sums
    inv = pl.reciprocal(gs, approx=True)                       # EUP slot
    inv = inv * (2.0 - gs * inv)                               # Newton step -> f32-exact
    attn = p * inv

    # out[pos, i*8+d] = sum_j attn[pos, i, j] * v[pos, j*8+d]
    ae = jnp.dot(attn, w_ref[...], preferred_element_type=f32)
    out = jnp.dot(ae * ve, z_ref[...], preferred_element_type=f32)

    # Dropout(0.1): identity under inference semantics.
    # TODO(synk): training-mode stochastic dropout not implemented.
    # TODO(synk): optional attention mask argument not implemented (mask=None path).

    # Per-position LayerNorm via the segmented-mean matrix (gamma/beta folded
    # into wo_ref / bo_ref in the wrapper).
    mu = jnp.dot(out, mln_ref[...], preferred_element_type=f32)
    xc = out - mu
    var = jnp.dot(xc * xc, mln_ref[...], preferred_element_type=f32)
    normed = xc * jax.lax.rsqrt(var + EPS)

    y = jnp.dot(normed, wo_ref[...], preferred_element_type=f32) + bo_ref[...]
    o_ref[...] = y.astype(o_ref.dtype)


def _rup(x, m):
    return -(-x // m) * m


def _tpu_meta():
    """(vmem_capacity_bytes, num_tensorcores) with conservative fallbacks."""
    vmem_cap = 128 * (1 << 20)
    n_tc = 1
    try:
        info = pltpu.get_tpu_info()
        cap = getattr(info, "vmem_capacity_bytes", None)
        if cap:
            vmem_cap = int(cap)
    except Exception:
        pass
    try:
        kind = str(jax.devices()[0].device_kind).lower()
        if "v7" in kind or "tpu7" in kind:
            n_tc = 2
            vmem_cap = min(vmem_cap, 64 * (1 << 20))
    except Exception:
        pass
    return vmem_cap, n_tc


def multi_head_attention(query, key, value, params, row_tile=4096, pack=8):
    """Pallas forward of the quirky MultiHeadAttention (mask=None, eval mode).

    row_tile: target number of *positions* per grid step.
    pack:     positions packed per lane row (multiple of 4 keeps slabs
              128-lane aligned; 8 also makes the softmax intermediates dense).
    """
    N, L, dm = query.shape
    assert dm == D_MODEL
    # The reference einsum semantics require matching q/k/v sequence lengths.
    assert key.shape == (N, L, dm) and value.shape == (N, L, dm)
    P = int(pack)
    assert P > 0 and P % 4 == 0

    g, t, s, a, w, z, m_ln = _build_head_mix_constants()

    def bd_np(mat):                                    # block-diag, P copies (numpy)
        return np.kron(np.eye(P, dtype=np.float32), mat)

    s_c = jnp.asarray(bd_np(s))                        # (128P, 16P)
    a_c = jnp.asarray(bd_np(a))                        # (16P, 16P)
    w_c = jnp.asarray(bd_np(w))                        # (16P, 128P)
    z_c = jnp.asarray(bd_np(z))                        # (128P, 32P)
    mln_c = jnp.asarray(bd_np(m_ln))                   # (32P, 32P)

    eye_p = jnp.eye(P, dtype=jnp.float32)

    def bd(mat):                                       # block-diag, P copies (traced)
        return jnp.kron(eye_p, mat)

    g_j, t_j = jnp.asarray(g), jnp.asarray(t)
    # Projection weights fused with the head-broadcast constants, then
    # block-diagonalised for the packed layout; stacked into one resident array.
    wqkv = jnp.stack([bd(params["wq"].T @ g_j),
                      bd(params["wk"].T @ t_j),
                      bd(params["wv"].T @ t_j)])                        # (3, 32P, 128P)
    bqkv = jnp.stack([jnp.tile((params["bq"] @ g_j)[None, :], (1, P)),
                      jnp.tile((params["bk"] @ t_j)[None, :], (1, P)),
                      jnp.tile((params["bv"] @ t_j)[None, :], (1, P))])  # (3, 1, 128P)
    # LayerNorm affine folded into the output projection.
    wo_c = bd(params["gamma"][:, None] * params["wo"].T)                 # (32P, 32P)
    bo_c = jnp.tile((params["beta"] @ params["wo"].T + params["bo"])[None, :],
                    (1, P))                                              # (1, 32P)

    # ---- pack positions: (R, 32) -> (Rp, 32P); q|k|v concatenated along lanes.
    R = N * L
    Rp = -(-R // P)
    xs = []
    for arr in (query, key, value):
        x2 = arr.reshape(R, dm).astype(jnp.float32)
        if Rp * P != R:
            x2 = jnp.pad(x2, ((0, Rp * P - R), (0, 0)))
        xs.append(x2.reshape(Rp, P * dm))
    x_all = jnp.concatenate(xs, axis=1)                                  # (Rp, 96P)

    # ---- per-chip tile sizing.
    vmem_cap, n_tc = _tpu_meta()
    vmem_limit = max(32 << 20, min(vmem_cap - (16 << 20), 48 << 20))
    const_bytes = 2 * 4 * sum(int(np.prod(c.shape)) for c in
                              (wqkv, bqkv, s_c, a_c, w_c, z_c, mln_c, wo_c, bo_c))
    # double-buffered row I/O + ~6 live f32 temporaries of width 128P per row
    per_row_bytes = 4 * (2 * (3 * dm * P + dm * P) + 6 * 4 * dm * P)
    budget = max(vmem_limit - const_bytes - (4 << 20), 2 << 20)
    tr_cap = max(8, (budget // per_row_bytes) // 8 * 8)
    tr_target = max(8, _rup(max(row_tile // P, 1), 8))
    tr = min(tr_target, tr_cap, _rup(Rp, 8))
    steps = -(-Rp // tr)
    if n_tc >= 2 and Rp > 8 and steps % 2 == 1:
        # v7x: keep an even number of balanced row tiles so both TensorCores work.
        tr = _rup(-(-Rp // (steps + 1)), 8)
        steps = -(-Rp // tr)
    rp_pad = steps * tr
    if rp_pad != Rp:
        x_all = jnp.pad(x_all, ((0, rp_pad - Rp), (0, 0)))

    row_in = pl.BlockSpec((tr, 3 * dm * P), lambda r: (r, 0))
    row_out = pl.BlockSpec((tr, dm * P), lambda r: (r, 0))

    def resident(shape):                               # constant block, fetched once
        if len(shape) == 2:
            return pl.BlockSpec(shape, lambda r: (0, 0))
        return pl.BlockSpec(shape, lambda r: (0, 0, 0))

    out = pl.pallas_call(
        mha_kernel,
        out_shape=jax.ShapeDtypeStruct((rp_pad, dm * P), jnp.float32),
        grid=(steps,),
        in_specs=[row_in,
                  resident(wqkv.shape), resident(bqkv.shape),
                  resident(s_c.shape), resident(a_c.shape),
                  resident(w_c.shape), resident(z_c.shape),
                  resident(mln_c.shape), resident(wo_c.shape),
                  resident(bo_c.shape)],
        out_specs=row_out,
        compiler_params=pltpu.CompilerParams(
            dimension_semantics=("parallel",),
            vmem_limit_bytes=int(vmem_limit)),
    )(x_all, wqkv, bqkv, s_c, a_c, w_c, z_c, mln_c, wo_c, bo_c)

    return out[:Rp].reshape(Rp * P, dm)[:R].reshape(N, L, dm)


def reference(query, key, value, params):
    """Pure-JAX transliteration of the PyTorch forward (same einsum strings)."""
    N, Lq, dm = query.shape
    H, D = NUM_HEADS, HEAD_DIM
    q = query @ params["wq"].T + params["bq"]
    k = key @ params["wk"].T + params["bk"]
    v = value @ params["wv"].T + params["bv"]
    q = q.reshape(N, Lq, H, D).transpose(0, 2, 1, 3)
    k = k.reshape(N, key.shape[1], H, D).transpose(0, 2, 1, 3)
    v = v.reshape(N, value.shape[1], H, D).transpose(0, 2, 1, 3)
    energy = jnp.einsum("nqhd,nkhd->nhqk", q, k)
    attention = jax.nn.softmax(energy / (dm ** 0.5), axis=3)
    out = jnp.einsum("nhql,nlhd->nqhd", attention, v)
    out = out.transpose(0, 2, 1, 3).reshape(N, Lq, dm)
    # dropout = identity (eval)
    mu = out.mean(-1, keepdims=True)
    var = ((out - mu) ** 2).mean(-1, keepdims=True)
    out = (out - mu) / jnp.sqrt(var + EPS) * params["gamma"] + params["beta"]
    return out @ params["wo"].T + params["bo"]


if __name__ == "__main__":
    N, L = 2, 8
    key0 = jax.random.PRNGKey(0)
    ks = jax.random.split(key0, 16)

    params = {
        "wq": 0.05 * jax.random.normal(ks[0], (D_MODEL, D_MODEL), jnp.float32),
        "bq": 0.05 * jax.random.normal(ks[1], (D_MODEL,), jnp.float32),
        "wk": 0.05 * jax.random.normal(ks[2], (D_MODEL, D_MODEL), jnp.float32),
        "bk": 0.05 * jax.random.normal(ks[3], (D_MODEL,), jnp.float32),
        "wv": 0.05 * jax.random.normal(ks[4], (D_MODEL, D_MODEL), jnp.float32),
        "bv": 0.05 * jax.random.normal(ks[5], (D_MODEL,), jnp.float32),
        "wo": 0.05 * jax.random.normal(ks[6], (D_MODEL, D_MODEL), jnp.float32),
        "bo": 0.05 * jax.random.normal(ks[7], (D_MODEL,), jnp.float32),
        "gamma": 1.0 + 0.1 * jax.random.normal(ks[8], (D_MODEL,), jnp.float32),
        "beta": 0.05 * jax.random.normal(ks[9], (D_MODEL,), jnp.float32),
    }

    query = jax.random.normal(ks[10], (N, L, D_MODEL), jnp.float32)
    keyx = jax.random.normal(ks[11], (N, L, D_MODEL), jnp.float32)
    value = jax.random.normal(ks[12], (N, L, D_MODEL), jnp.float32)

    out = jax.block_until_ready(multi_head_attention(query, keyx, value, params))
    ref = reference(query, keyx, value, params)
    assert out.shape == (N, L, D_MODEL)
    assert jnp.allclose(out, ref, rtol=1e-4, atol=1e-4), (
        f"max abs err {float(jnp.max(jnp.abs(out - ref)))}")

    # A second, unaligned shape to exercise the position/row padding paths.
    q2 = jax.random.normal(ks[13], (3, 13, D_MODEL), jnp.float32)
    k2 = jax.random.normal(ks[14], (3, 13, D_MODEL), jnp.float32)
    v2 = jax.random.normal(ks[15], (3, 13, D_MODEL), jnp.float32)
    out2 = jax.block_until_ready(multi_head_attention(q2, k2, v2, params))
    ref2 = reference(q2, k2, v2, params)
    assert jnp.allclose(out2, ref2, rtol=1e-4, atol=1e-4), (
        f"max abs err {float(jnp.max(jnp.abs(out2 - ref2)))}")

    print("KERNEL_OK")
</pallas_src>

<mosaic_0001>
module attributes {stable_mosaic.version = 11 : i64} {
  func.func @mha_kernel(%arg0: i32, %arg1: memref<8x768xf32, #tpu.memory_space<vmem>>, %arg2: memref<3x256x1024xf32, #tpu.memory_space<vmem>>, %arg3: memref<3x1x1024xf32, #tpu.memory_space<vmem>>, %arg4: memref<1024x128xf32, #tpu.memory_space<vmem>>, %arg5: memref<128x128xf32, #tpu.memory_space<vmem>>, %arg6: memref<128x1024xf32, #tpu.memory_space<vmem>>, %arg7: memref<1024x256xf32, #tpu.memory_space<vmem>>, %arg8: memref<256x256xf32, #tpu.memory_space<vmem>>, %arg9: memref<256x256xf32, #tpu.memory_space<vmem>>, %arg10: memref<1x256xf32, #tpu.memory_space<vmem>>, %arg11: memref<8x256xf32, #tpu.memory_space<vmem>>) attributes {dimension_semantics = [#tpu.dimension_semantics<parallel>], iteration_bounds = array<i64: 1>, scalar_prefetch = 0 : i64, scratch_operands = 0 : i64, tpu.core_type = #tpu.core_type<tc>, window_params = [{transform_indices = @transform_0, window_bounds = array<i64: 8, 768>}, {pipeline_mode = #tpu.pipeline_mode<synchronous>, transform_indices = @transform_1, window_bounds = array<i64: 3, 256, 1024>}, {pipeline_mode = #tpu.pipeline_mode<synchronous>, transform_indices = @transform_2, window_bounds = array<i64: 3, 1, 1024>}, {pipeline_mode = #tpu.pipeline_mode<synchronous>, transform_indices = @transform_3, window_bounds = array<i64: 1024, 128>}, {pipeline_mode = #tpu.pipeline_mode<synchronous>, transform_indices = @transform_4, window_bounds = array<i64: 128, 128>}, {pipeline_mode = #tpu.pipeline_mode<synchronous>, transform_indices = @transform_5, window_bounds = array<i64: 128, 1024>}, {pipeline_mode = #tpu.pipeline_mode<synchronous>, transform_indices = @transform_6, window_bounds = array<i64: 1024, 256>}, {pipeline_mode = #tpu.pipeline_mode<synchronous>, transform_indices = @transform_7, window_bounds = array<i64: 256, 256>}, {pipeline_mode = #tpu.pipeline_mode<synchronous>, transform_indices = @transform_8, window_bounds = array<i64: 256, 256>}, {pipeline_mode = #tpu.pipeline_mode<synchronous>, transform_indices = @transform_9, window_bounds = array<i64: 1, 256>}, {transform_indices = @transform_10, window_bounds = array<i64: 8, 256>}]} {
    %c0 = arith.constant 0 : index
    %c0_0 = arith.constant 0 : index
    %0 = vector.load %arg1[%c0, %c0_0] : memref<8x768xf32, #tpu.memory_space<vmem>>, vector<8x256xf32>
    %c0_1 = arith.constant 0 : index
    %c256 = arith.constant 256 : index
    %1 = vector.load %arg1[%c0_1, %c256] : memref<8x768xf32, #tpu.memory_space<vmem>>, vector<8x256xf32>
    %c0_2 = arith.constant 0 : index
    %c512 = arith.constant 512 : index
    %2 = vector.load %arg1[%c0_2, %c512] : memref<8x768xf32, #tpu.memory_space<vmem>>, vector<8x256xf32>
    %c0_3 = arith.constant 0 : index
    %c0_4 = arith.constant 0 : index
    %c0_5 = arith.constant 0 : index
    %3 = vector.load %arg2[%c0_3, %c0_4, %c0_5] : memref<3x256x1024xf32, #tpu.memory_space<vmem>>, vector<1x256x1024xf32>
    %4 = vector.shape_cast %3 : vector<1x256x1024xf32> to vector<256x1024xf32>
    %cst = arith.constant dense<0.000000e+00> : vector<8x1024xf32>
    %5 = tpu.matmul %0, %4, %cst {dimension_numbers = #tpu.dot_dimension_numbers<[1], [0], [0], [1], [0, 0, 1, 1], [], []>} : vector<8x256xf32>, vector<256x1024xf32>, vector<8x1024xf32> -> vector<8x1024xf32>
    %c0_6 = arith.constant 0 : index
    %c0_7 = arith.constant 0 : index
    %c0_8 = arith.constant 0 : index
    %6 = vector.load %arg3[%c0_6, %c0_7, %c0_8] : memref<3x1x1024xf32, #tpu.memory_space<vmem>>, vector<1x1x1024xf32>
    %7 = vector.shape_cast %6 : vector<1x1x1024xf32> to vector<1x1024xf32>
    %8 = vector.broadcast %7 : vector<1x1024xf32> to vector<8x1024xf32>
    %9 = arith.addf %5, %8 : vector<8x1024xf32>
    %c1 = arith.constant 1 : index
    %c0_9 = arith.constant 0 : index
    %c0_10 = arith.constant 0 : index
    %10 = vector.load %arg2[%c1, %c0_9, %c0_10] : memref<3x256x1024xf32, #tpu.memory_space<vmem>>, vector<1x256x1024xf32>
    %11 = vector.shape_cast %10 : vector<1x256x1024xf32> to vector<256x1024xf32>
    %cst_11 = arith.constant dense<0.000000e+00> : vector<8x1024xf32>
    %12 = tpu.matmul %1, %11, %cst_11 {dimension_numbers = #tpu.dot_dimension_numbers<[1], [0], [0], [1], [0, 0, 1, 1], [], []>} : vector<8x256xf32>, vector<256x1024xf32>, vector<8x1024xf32> -> vector<8x1024xf32>
    %c1_12 = arith.constant 1 : index
    %c0_13 = arith.constant 0 : index
    %c0_14 = arith.constant 0 : index
    %13 = vector.load %arg3[%c1_12, %c0_13, %c0_14] : memref<3x1x1024xf32, #tpu.memory_space<vmem>>, vector<1x1x1024xf32>
    %14 = vector.shape_cast %13 : vector<1x1x1024xf32> to vector<1x1024xf32>
    %15 = vector.broadcast %14 : vector<1x1024xf32> to vector<8x1024xf32>
    %16 = arith.addf %12, %15 : vector<8x1024xf32>
    %c2 = arith.constant 2 : index
    %c0_15 = arith.constant 0 : index
    %c0_16 = arith.constant 0 : index
    %17 = vector.load %arg2[%c2, %c0_15, %c0_16] : memref<3x256x1024xf32, #tpu.memory_space<vmem>>, vector<1x256x1024xf32>
    %18 = vector.shape_cast %17 : vector<1x256x1024xf32> to vector<256x1024xf32>
    %cst_17 = arith.constant dense<0.000000e+00> : vector<8x1024xf32>
    %19 = tpu.matmul %2, %18, %cst_17 {dimension_numbers = #tpu.dot_dimension_numbers<[1], [0], [0], [1], [0, 0, 1, 1], [], []>} : vector<8x256xf32>, vector<256x1024xf32>, vector<8x1024xf32> -> vector<8x1024xf32>
    %c2_18 = arith.constant 2 : index
    %c0_19 = arith.constant 0 : index
    %c0_20 = arith.constant 0 : index
    %20 = vector.load %arg3[%c2_18, %c0_19, %c0_20] : memref<3x1x1024xf32, #tpu.memory_space<vmem>>, vector<1x1x1024xf32>
    %21 = vector.shape_cast %20 : vector<1x1x1024xf32> to vector<1x1024xf32>
    %22 = vector.broadcast %21 : vector<1x1024xf32> to vector<8x1024xf32>
    %23 = arith.addf %19, %22 : vector<8x1024xf32>
    %24 = arith.mulf %9, %16 : vector<8x1024xf32>
    %c0_21 = arith.constant 0 : index
    %c0_22 = arith.constant 0 : index
    %25 = vector.load %arg4[%c0_21, %c0_22] : memref<1024x128xf32, #tpu.memory_space<vmem>>, vector<1024x128xf32>
    %cst_23 = arith.constant dense<0.000000e+00> : vector<8x128xf32>
    %26 = tpu.matmul %24, %25, %cst_23 {dimension_numbers = #tpu.dot_dimension_numbers<[1], [0], [0], [1], [0, 0, 1, 1], [], []>} : vector<8x1024xf32>, vector<1024x128xf32>, vector<8x128xf32> -> vector<8x128xf32>
    %cst_24 = arith.constant dense<0xFF800000> : vector<8xf32>
    %27 = vector.multi_reduction <maximumf>, %26, %cst_24 [1] : vector<8x128xf32> to vector<8xf32>
    %28 = vector.shape_cast %27 : vector<8xf32> to vector<8x1xf32>
    %29 = vector.broadcast %28 : vector<8x1xf32> to vector<8x128xf32>
    %30 = arith.subf %26, %29 : vector<8x128xf32>
    %31 = math.exp %30 : vector<8x128xf32>
    %c0_25 = arith.constant 0 : index
    %c0_26 = arith.constant 0 : index
    %32 = vector.load %arg5[%c0_25, %c0_26] : memref<128x128xf32, #tpu.memory_space<vmem>>, vector<128x128xf32>
    %cst_27 = arith.constant dense<0.000000e+00> : vector<8x128xf32>
    %33 = tpu.matmul %31, %32, %cst_27 {dimension_numbers = #tpu.dot_dimension_numbers<[1], [0], [0], [1], [0, 0, 1, 1], [], []>} : vector<8x128xf32>, vector<128x128xf32>, vector<8x128xf32> -> vector<8x128xf32>
    %34 = tpu.reciprocal %33 {approx = true} : vector<8x128xf32> -> vector<8x128xf32>
    %35 = arith.mulf %33, %34 : vector<8x128xf32>
    %cst_28 = arith.constant 2.000000e+00 : f32
    %36 = vector.broadcast %cst_28 : f32 to vector<8x128xf32>
    %37 = arith.subf %36, %35 : vector<8x128xf32>
    %38 = arith.mulf %34, %37 : vector<8x128xf32>
    %39 = arith.mulf %31, %38 : vector<8x128xf32>
    %c0_29 = arith.constant 0 : index
    %c0_30 = arith.constant 0 : index
    %40 = vector.load %arg6[%c0_29, %c0_30] : memref<128x1024xf32, #tpu.memory_space<vmem>>, vector<128x1024xf32>
    %cst_31 = arith.constant dense<0.000000e+00> : vector<8x1024xf32>
    %41 = tpu.matmul %39, %40, %cst_31 {dimension_numbers = #tpu.dot_dimension_numbers<[1], [0], [0], [1], [0, 0, 1, 1], [], []>} : vector<8x128xf32>, vector<128x1024xf32>, vector<8x1024xf32> -> vector<8x1024xf32>
    %42 = arith.mulf %41, %23 : vector<8x1024xf32>
    %c0_32 = arith.constant 0 : index
    %c0_33 = arith.constant 0 : index
    %43 = vector.load %arg7[%c0_32, %c0_33] : memref<1024x256xf32, #tpu.memory_space<vmem>>, vector<1024x256xf32>
    %cst_34 = arith.constant dense<0.000000e+00> : vector<8x256xf32>
    %44 = tpu.matmul %42, %43, %cst_34 {dimension_numbers = #tpu.dot_dimension_numbers<[1], [0], [0], [1], [0, 0, 1, 1], [], []>} : vector<8x1024xf32>, vector<1024x256xf32>, vector<8x256xf32> -> vector<8x256xf32>
    %c0_35 = arith.constant 0 : index
    %c0_36 = arith.constant 0 : index
    %45 = vector.load %arg8[%c0_35, %c0_36] : memref<256x256xf32, #tpu.memory_space<vmem>>, vector<256x256xf32>
    %cst_37 = arith.constant dense<0.000000e+00> : vector<8x256xf32>
    %46 = tpu.matmul %44, %45, %cst_37 {dimension_numbers = #tpu.dot_dimension_numbers<[1], [0], [0], [1], [0, 0, 1, 1], [], []>} : vector<8x256xf32>, vector<256x256xf32>, vector<8x256xf32> -> vector<8x256xf32>
    %47 = arith.subf %44, %46 : vector<8x256xf32>
    %48 = arith.mulf %47, %47 : vector<8x256xf32>
    %c0_38 = arith.constant 0 : index
    %c0_39 = arith.constant 0 : index
    %49 = vector.load %arg8[%c0_38, %c0_39] : memref<256x256xf32, #tpu.memory_space<vmem>>, vector<256x256xf32>
    %cst_40 = arith.constant dense<0.000000e+00> : vector<8x256xf32>
    %50 = tpu.matmul %48, %49, %cst_40 {dimension_numbers = #tpu.dot_dimension_numbers<[1], [0], [0], [1], [0, 0, 1, 1], [], []>} : vector<8x256xf32>, vector<256x256xf32>, vector<8x256xf32> -> vector<8x256xf32>
    %cst_41 = arith.constant 9.99999974E-6 : f32
    %51 = vector.broadcast %cst_41 : f32 to vector<8x256xf32>
    %52 = arith.addf %50, %51 : vector<8x256xf32>
    %53 = math.rsqrt %52 : vector<8x256xf32>
    %54 = arith.mulf %47, %53 : vector<8x256xf32>
    %c0_42 = arith.constant 0 : index
    %c0_43 = arith.constant 0 : index
    %55 = vector.load %arg9[%c0_42, %c0_43] : memref<256x256xf32, #tpu.memory_space<vmem>>, vector<256x256xf32>
    %cst_44 = arith.constant dense<0.000000e+00> : vector<8x256xf32>
    %56 = tpu.matmul %54, %55, %cst_44 {dimension_numbers = #tpu.dot_dimension_numbers<[1], [0], [0], [1], [0, 0, 1, 1], [], []>} : vector<8x256xf32>, vector<256x256xf32>, vector<8x256xf32> -> vector<8x256xf32>
    %c0_45 = arith.constant 0 : index
    %c0_46 = arith.constant 0 : index
    %57 = vector.load %arg10[%c0_45, %c0_46] : memref<1x256xf32, #tpu.memory_space<vmem>>, vector<1x256xf32>
    %58 = vector.broadcast %57 : vector<1x256xf32> to vector<8x256xf32>
    %59 = arith.addf %56, %58 : vector<8x256xf32>
    %c0_47 = arith.constant 0 : index
    %c0_48 = arith.constant 0 : index
    %60 = vector.load %arg11[%c0_47, %c0_48] : memref<8x256xf32, #tpu.memory_space<vmem>>, vector<8x256xf32>
    tpu.vector_store %arg11[%c0_47, %c0_48], %59 {strides = array<i32>} : memref<8x256xf32, #tpu.memory_space<vmem>>, vector<8x256xf32>,
    return
  }
  func.func @transform_0(%arg0: i32) -> (i32, i32) {
    %c0_i32 = arith.constant 0 : i32
    %c0_i32_0 = arith.constant 0 : i32
    return %arg0, %c0_i32 : i32, i32
  }
  func.func @transform_1(%arg0: i32) -> (i32, i32, i32) {
    %c0_i32 = arith.constant 0 : i32
    %c0_i32_0 = arith.constant 0 : i32
    %c0_i32_1 = arith.constant 0 : i32
    %c0_i32_2 = arith.constant 0 : i32
    return %c0_i32, %c0_i32_0, %c0_i32_1 : i32, i32, i32
  }
  func.func @transform_2(%arg0: i32) -> (i32, i32, i32) {
    %c0_i32 = arith.constant 0 : i32
    %c0_i32_0 = arith.constant 0 : i32
    %c0_i32_1 = arith.constant 0 : i32
    %c0_i32_2 = arith.constant 0 : i32
    return %c0_i32, %c0_i32_0, %c0_i32_1 : i32, i32, i32
  }
  func.func @transform_3(%arg0: i32) -> (i32, i32) {
    %c0_i32 = arith.constant 0 : i32
    %c0_i32_0 = arith.constant 0 : i32
    %c0_i32_1 = arith.constant 0 : i32
    return %c0_i32, %c0_i32_0 : i32, i32
  }
  func.func @transform_4(%arg0: i32) -> (i32, i32) {
    %c0_i32 = arith.constant 0 : i32
    %c0_i32_0 = arith.constant 0 : i32
    %c0_i32_1 = arith.constant 0 : i32
    return %c0_i32, %c0_i32_0 : i32, i32
  }
  func.func @transform_5(%arg0: i32) -> (i32, i32) {
    %c0_i32 = arith.constant 0 : i32
    %c0_i32_0 = arith.constant 0 : i32
    %c0_i32_1 = arith.constant 0 : i32
    return %c0_i32, %c0_i32_0 : i32, i32
  }
  func.func @transform_6(%arg0: i32) -> (i32, i32) {
    %c0_i32 = arith.constant 0 : i32
    %c0_i32_0 = arith.constant 0 : i32
    %c0_i32_1 = arith.constant 0 : i32
    return %c0_i32, %c0_i32_0 : i32, i32
  }
  func.func @transform_7(%arg0: i32) -> (i32, i32) {
    %c0_i32 = arith.constant 0 : i32
    %c0_i32_0 = arith.constant 0 : i32
    %c0_i32_1 = arith.constant 0 : i32
    return %c0_i32, %c0_i32_0 : i32, i32
  }
  func.func @transform_8(%arg0: i32) -> (i32, i32) {
    %c0_i32 = arith.constant 0 : i32
    %c0_i32_0 = arith.constant 0 : i32
    %c0_i32_1 = arith.constant 0 : i32
    return %c0_i32, %c0_i32_0 : i32, i32
  }
  func.func @transform_9(%arg0: i32) -> (i32, i32) {
    %c0_i32 = arith.constant 0 : i32
    %c0_i32_0 = arith.constant 0 : i32
    %c0_i32_1 = arith.constant 0 : i32
    return %c0_i32, %c0_i32_0 : i32, i32
  }
  func.func @transform_10(%arg0: i32) -> (i32, i32) {
    %c0_i32 = arith.constant 0 : i32
    %c0_i32_0 = arith.constant 0 : i32
    return %arg0, %c0_i32 : i32, i32
  }
}

</mosaic_0001>

<llo_original>
// kernel: tpu_custom_call.1
$region0: #{tpu_custom_call.1}
  #allocation0 [shape = 'u32[]', space=smem, size = 0x4, offset = 0x4, fixed_abs, tag = 'smem constant byte address 0x4 - core index']
  #allocation1 [shape = 'u32[144,128]{1,0:T(1,128)}', space=vmem, size = 0x12000, scoped, tag = 'internal scratch']
  %s0 = inlined_call_operand.hbm [shape: f32[8,768], index: 0, kind: input, shape index: {}]
  %s1 = inlined_call_operand.hbm [shape: f32[3,256,1024], index: 1, kind: input, shape index: {}]
  %s2 = inlined_call_operand.hbm [shape: f32[3,1,1024], index: 2, kind: input, shape index: {}]
  %s3 = inlined_call_operand.hbm [shape: f32[1024,128], index: 3, kind: input, shape index: {}]
  %s4 = inlined_call_operand.hbm [shape: f32[128,128], index: 4, kind: input, shape index: {}]
  %s5 = inlined_call_operand.hbm [shape: f32[128,1024], index: 5, kind: input, shape index: {}]
  %s6 = inlined_call_operand.hbm [shape: f32[1024,256], index: 6, kind: input, shape index: {}]
  %s7 = inlined_call_operand.hbm [shape: f32[256,256], index: 7, kind: input, shape index: {}]
  %s8 = inlined_call_operand.hbm [shape: f32[256,256], index: 8, kind: input, shape index: {}]
  %s9 = inlined_call_operand.hbm [shape: f32[1,256], index: 9, kind: input, shape index: {}]
  %s10 = inlined_call_operand.hbm [shape: f32[8,256], index: 10, kind: output, shape index: {}]
  %s11 = sld [smem:[#allocation0]]
  $region90: #{tpu_custom_call.1} parent=0
    _
  %s13 = ssub.s32 1, %s11
  %s14 = scalar_select 0, %s13, %s11
  $region1: #{tpu_custom_call.1} parent=0
    #allocation2 [shape = 'u8[24576]{0}', space=vmem, size = 0x6000, scoped, tag = 'input window, operand 0, single buffered']
    #allocation3 [shape = 's32[1]{0}', space=sflag, size = 0x4, scoped, tag = 'scoped memory for tpu_custom_call.1']
    #allocation4 [shape = 's32[1]{0}', space=sflag, size = 0x4, scoped, tag = 'scoped memory for tpu_custom_call.1']
    #allocation5 [shape = 'u8[3145728]{0}', space=vmem, size = 0x300000, scoped, tag = 'input window, operand 1, single buffered']
    #allocation6 [shape = 's32[1]{0}', space=sflag, size = 0x4, scoped, tag = 'scoped memory for tpu_custom_call.1']
    #allocation7 [shape = 'u8[12288]{0}', space=vmem, size = 0x3000, scoped, tag = 'input window, operand 2, single buffered']
    #allocation8 [shape = 'u8[524288]{0}', space=vmem, size = 0x80000, scoped, tag = 'input window, operand 3, single buffered']
    #allocation9 [shape = 's32[1]{0}', space=sflag, size = 0x4, scoped, tag = 'scoped memory for tpu_custom_call.1']
    #allocation10 [shape = 'u8[65536]{0}', space=vmem, size = 0x10000, scoped, tag = 'input window, operand 4, single buffered']
    #allocation11 [shape = 'u8[524288]{0}', space=vmem, size = 0x80000, scoped, tag = 'input window, operand 5, single buffered']
    #allocation12 [shape = 's32[1]{0}', space=sflag, size = 0x4, scoped, tag = 'scoped memory for tpu_custom_call.1']
    #allocation13 [shape = 'u8[1048576]{0}', space=vmem, size = 0x100000, scoped, tag = 'input window, operand 6, single buffered']
    #allocation14 [shape = 'u8[262144]{0}', space=vmem, size = 0x40000, scoped, tag = 'input window, operand 7, single buffered']
    #allocation15 [shape = 's32[1]{0}', space=sflag, size = 0x4, scoped, tag = 'scoped memory for tpu_custom_call.1']
    #allocation16 [shape = 'u8[262144]{0}', space=vmem, size = 0x40000, scoped, tag = 'input window, operand 8, single buffered']
    #allocation17 [shape = 'u8[1024]{0}', space=vmem, size = 0x400, scoped, tag = 'input window, operand 9, single buffered']
    #allocation18 [shape = 's32[1]{0}', space=sflag, size = 0x4, scoped, tag = 'scoped memory for tpu_custom_call.1']
    #allocation19 [shape = 'u8[8192]{0}', space=vmem, size = 0x2000, scoped, tag = 'output window, operand 0, single buffered']
    %15 = vsyncpa [#allocation3], 0
    %16 = vsyncpa [#allocation6], 0
    %17 = vsyncpa [#allocation9], 0
    %18 = vsyncpa [#allocation12], 0
    %19 = vsyncpa [#allocation15], 0
    %20 = vsyncpa [#allocation18], 0
    %21 = vsyncpa [#allocation4], 0
    // Predicated region
    $region2: #{tpu_custom_call.1} parent=1 // pred_check
      _
    $region3: #{tpu_custom_call.1} parent=1 // pred_check_branch
      %23 = sbr.rel (0) target = $region5
    $region4: #{tpu_custom_call.1} parent=1 // pred_region
      %s25 = ssub.s32 768, 768
      %26 = vsyncadd [#allocation3], %s25
      %s28 = sshll.u32 [#allocation2], 4
      %s29 = int_to_ptr.vmem [resolvable:$true] %s28
      %31 = dma.hbm_to_vmem [thread:$0]  %s0, 768, %s29, [#allocation3]
    $region5: #{tpu_custom_call.1} parent=1 // pred_fallthru
      _
    // Predicated region
    $region6: #{tpu_custom_call.1} parent=1 // pred_check
      _
    $region7: #{tpu_custom_call.1} parent=1 // pred_check_branch
      %33 = sbr.rel (0) target = $region9
    $region8: #{tpu_custom_call.1} parent=1 // pred_region
      %s35 = ssub.s32 98304, 98304
      %36 = vsyncadd [#allocation6], %s35
      %s37 = sshll.u32 [#allocation5], 4
      %s38 = int_to_ptr.vmem [resolvable:$true] %s37
      %43 = dma.hbm_to_vmem [thread:$0]  %s1, 98304, %s38, [#allocation6], 1024, 1024, 64
    $region9: #{tpu_custom_call.1} parent=1 // pred_fallthru
      _
    // Predicated region
    $region10: #{tpu_custom_call.1} parent=1 // pred_check
      _
    $region11: #{tpu_custom_call.1} parent=1 // pred_check_branch
      %45 = sbr.rel (0) target = $region13
    $region12: #{tpu_custom_call.1} parent=1 // pred_region
      %s47 = ssub.s32 384, 384
      %48 = vsyncadd [#allocation6], %s47
      %s49 = sshll.u32 [#allocation7], 4
      %s50 = int_to_ptr.vmem [resolvable:$true] %s49
      %55 = dma.hbm_to_vmem [thread:$0]  %s2, 384, %s50, [#allocation6], 128, 128, 8
    $region13: #{tpu_custom_call.1} parent=1 // pred_fallthru
      _
    // Predicated region
    $region14: #{tpu_custom_call.1} parent=1 // pred_check
      _
    $region15: #{tpu_custom_call.1} parent=1 // pred_check_branch
      %57 = sbr.rel (0) target = $region17
    $region16: #{tpu_custom_call.1} parent=1 // pred_region
      %s59 = ssub.s32 16384, 16384
      %60 = vsyncadd [#allocation9], %s59
      %s61 = sshll.u32 [#allocation8], 4
      %s62 = int_to_ptr.vmem [resolvable:$true] %s61
      %67 = dma.hbm_to_vmem [thread:$0]  %s3, 16384, %s62, [#allocation9], 128, 128, 8
    $region17: #{tpu_custom_call.1} parent=1 // pred_fallthru
      _
    // Predicated region
    $region18: #{tpu_custom_call.1} parent=1 // pred_check
      _
    $region19: #{tpu_custom_call.1} parent=1 // pred_check_branch
      %69 = sbr.rel (0) target = $region21
    $region20: #{tpu_custom_call.1} parent=1 // pred_region
      %s71 = ssub.s32 2048, 2048
      %72 = vsyncadd [#allocation9], %s71
      %s73 = sshll.u32 [#allocation10], 4
      %s74 = int_to_ptr.vmem [resolvable:$true] %s73
      %79 = dma.hbm_to_vmem [thread:$0]  %s4, 2048, %s74, [#allocation9], 128, 128, 8
    $region21: #{tpu_custom_call.1} parent=1 // pred_fallthru
      _
    // Predicated region
    $region22: #{tpu_custom_call.1} parent=1 // pred_check
      _
    $region23: #{tpu_custom_call.1} parent=1 // pred_check_branch
      %81 = sbr.rel (0) target = $region25
    $region24: #{tpu_custom_call.1} parent=1 // pred_region
      %s83 = ssub.s32 16384, 16384
      %84 = vsyncadd [#allocation12], %s83
      %s85 = sshll.u32 [#allocation11], 4
      %s86 = int_to_ptr.vmem [resolvable:$true] %s85
      %91 = dma.hbm_to_vmem [thread:$0]  %s5, 16384, %s86, [#allocation12], 1024, 1024, 64
    $region25: #{tpu_custom_call.1} parent=1 // pred_fallthru
      _
    // Predicated region
    $region26: #{tpu_custom_call.1} parent=1 // pred_check
      _
    $region27: #{tpu_custom_call.1} parent=1 // pred_check_branch
      %93 = sbr.rel (0) target = $region29
    $region28: #{tpu_custom_call.1} parent=1 // pred_region
      %s95 = ssub.s32 32768, 32768
      %96 = vsyncadd [#allocation12], %s95
      %s97 = sshll.u32 [#allocation13], 4
      %s98 = int_to_ptr.vmem [resolvable:$true] %s97
      %103 = dma.hbm_to_vmem [thread:$0]  %s6, 32768, %s98, [#allocation12], 256, 256, 16
    $region29: #{tpu_custom_call.1} parent=1 // pred_fallthru
      _
    // Predicated region
    $region30: #{tpu_custom_call.1} parent=1 // pred_check
      _
    $region31: #{tpu_custom_call.1} parent=1 // pred_check_branch
      %105 = sbr.rel (0) target = $region33
    $region32: #{tpu_custom_call.1} parent=1 // pred_region
      %s107 = ssub.s32 8192, 8192
      %108 = vsyncadd [#allocation15], %s107
      %s109 = sshll.u32 [#allocation14], 4
      %s110 = int_to_ptr.vmem [resolvable:$true] %s109
      %115 = dma.hbm_to_vmem [thread:$0]  %s7, 8192, %s110, [#allocation15], 256, 256, 16
    $region33: #{tpu_custom_call.1} parent=1 // pred_fallthru
      _
    // Predicated region
    $region34: #{tpu_custom_call.1} parent=1 // pred_check
      _
    $region35: #{tpu_custom_call.1} parent=1 // pred_check_branch
      %117 = sbr.rel (0) target = $region37
    $region36: #{tpu_custom_call.1} parent=1 // pred_region
      %s119 = ssub.s32 8192, 8192
      %120 = vsyncadd [#allocation15], %s119
      %s121 = sshll.u32 [#allocation16], 4
      %s122 = int_to_ptr.vmem [resolvable:$true] %s121
      %127 = dma.hbm_to_vmem [thread:$0]  %s8, 8192, %s122, [#allocation15], 256, 256, 16
    $region37: #{tpu_custom_call.1} parent=1 // pred_fallthru
      _
    // Predicated region
    $region38: #{tpu_custom_call.1} parent=1 // pred_check
      _
    $region39: #{tpu_custom_call.1} parent=1 // pred_check_branch
      %129 = sbr.rel (0) target = $region41
    $region40: #{tpu_custom_call.1} parent=1 // pred_region
      %s131 = ssub.s32 32, 32
      %132 = vsyncadd [#allocation18], %s131
      %s134 = sshll.u32 [#allocation17], 4
      %s135 = int_to_ptr.vmem [resolvable:$true] %s134
      %137 = dma.hbm_to_vmem [thread:$0]  %s9, 32, %s135, [#allocation18]
    $region41: #{tpu_custom_call.1} parent=1 // pred_fallthru
      _
    // Predicated region
    $region42: #{tpu_custom_call.1} parent=1 // pred_check
      _
    $region43: #{tpu_custom_call.1} parent=1 // pred_check_branch
      %139 = sbr.rel (0) target = $region45
    $region44: #{tpu_custom_call.1} parent=1 // pred_region
      %140 = dma.done [#allocation3], 768
    $region45: #{tpu_custom_call.1} parent=1 // pred_fallthru
      _
    // Predicated region
    $region46: #{tpu_custom_call.1} parent=1 // pred_check
      _
    $region47: #{tpu_custom_call.1} parent=1 // pred_check_branch
      %142 = sbr.rel (0) target = $region49
    $region48: #{tpu_custom_call.1} parent=1 // pred_region
      %143 = dma.done [#allocation6], 98304
    $region49: #{tpu_custom_call.1} parent=1 // pred_fallthru
      _
    // Predicated region
    $region50: #{tpu_custom_call.1} parent=1 // pred_check
      _
    $region51: #{tpu_custom_call.1} parent=1 // pred_check_branch
      %145 = sbr.rel (0) target = $region53
    $region52: #{tpu_custom_call.1} parent=1 // pred_region
      %146 = dma.done [#allocation6], 384
    $region53: #{tpu_custom_call.1} parent=1 // pred_fallthru
      _
    // Predicated region
    $region54: #{tpu_custom_call.1} parent=1 // pred_check
      _
    $region55: #{tpu_custom_call.1} parent=1 // pred_check_branch
      %148 = sbr.rel (0) target = $region57
    $region56: #{tpu_custom_call.1} parent=1 // pred_region
      %149 = dma.done [#allocation9], 16384
    $region57: #{tpu_custom_call.1} parent=1 // pred_fallthru
      _
    // Predicated region
    $region58: #{tpu_custom_call.1} parent=1 // pred_check
      _
    $region59: #{tpu_custom_call.1} parent=1 // pred_check_branch
      %151 = sbr.rel (0) target = $region61
    $region60: #{tpu_custom_call.1} parent=1 // pred_region
      %152 = dma.done [#allocation9], 2048
    $region61: #{tpu_custom_call.1} parent=1 // pred_fallthru
      _
    // Predicated region
    $region62: #{tpu_custom_call.1} parent=1 // pred_check
      _
    $region63: #{tpu_custom_call.1} parent=1 // pred_check_branch
      %154 = sbr.rel (0) target = $region65
    $region64: #{tpu_custom_call.1} parent=1 // pred_region
      %155 = dma.done [#allocation12], 16384
    $region65: #{tpu_custom_call.1} parent=1 // pred_fallthru
      _
    // Predicated region
    $region66: #{tpu_custom_call.1} parent=1 // pred_check
      _
    $region67: #{tpu_custom_call.1} parent=1 // pred_check_branch
      %157 = sbr.rel (0) target = $region69
    $region68: #{tpu_custom_call.1} parent=1 // pred_region
      %158 = dma.done [#allocation12], 32768
    $region69: #{tpu_custom_call.1} parent=1 // pred_fallthru
      _
    // Predicated region
    $region70: #{tpu_custom_call.1} parent=1 // pred_check
      _
    $region71: #{tpu_custom_call.1} parent=1 // pred_check_branch
      %160 = sbr.rel (0) target = $region73
    $region72: #{tpu_custom_call.1} parent=1 // pred_region
      %161 = dma.done [#allocation15], 8192
    $region73: #{tpu_custom_call.1} parent=1 // pred_fallthru
      _
    // Predicated region
    $region74: #{tpu_custom_call.1} parent=1 // pred_check
      _
    $region75: #{tpu_custom_call.1} parent=1 // pred_check_branch
      %163 = sbr.rel (0) target = $region77
    $region76: #{tpu_custom_call.1} parent=1 // pred_region
      %164 = dma.done [#allocation15], 8192
    $region77: #{tpu_custom_call.1} parent=1 // pred_fallthru
      _
    // Predicated region
    $region78: #{tpu_custom_call.1} parent=1 // pred_check
      _
    $region79: #{tpu_custom_call.1} parent=1 // pred_check_branch
      %166 = sbr.rel (0) target = $region81
    $region80: #{tpu_custom_call.1} parent=1 // pred_region
      %167 = dma.done [#allocation18], 32
    $region81: #{tpu_custom_call.1} parent=1 // pred_fallthru
      _
    %v168 = vld [vmem:[#allocation2] sm:$0xff]
    %v169 = vld [vmem:[#allocation2 + $0x8] sm:$0xff]
    %v170 = vld [vmem:[#allocation2 + $0x10] sm:$0xff]
    %v171 = vld [vmem:[#allocation2 + $0x18] sm:$0xff]
    %v172 = vld [vmem:[#allocation2 + $0x20] sm:$0xff]
    %v173 = vld [vmem:[#allocation2 + $0x28] sm:$0xff]
    %v174 = vld [vmem:[#allocation5] sm:$0xff]
    %v175 = vld [vmem:[#allocation5 + $0x8] sm:$0xff]
    %v176 = vld [vmem:[#allocation5 + $0x10] sm:$0xff]
    %v177 = vld [vmem:[#allocation5 + $0x18] sm:$0xff]
    %v178 = vld [vmem:[#allocation5 + $0x20] sm:$0xff]
    %v179 = vld [vmem:[#allocation5 + $0x28] sm:$0xff]
    %v180 = vld [vmem:[#allocation5 + $0x30] sm:$0xff]
    %v181 = vld [vmem:[#allocation5 + $0x38] sm:$0xff]
    %v182 = vld [vmem:[#allocation5 + $0x40] sm:$0xff]
    %v183 = vld [vmem:[#allocation5 + $0x48] sm:$0xff]
    %v184 = vld [vmem:[#allocation5 + $0x50] sm:$0xff]
    %v185 = vld [vmem:[#allocation5 + $0x58] sm:$0xff]
    %v186 = vld [vmem:[#allocation5 + $0x60] sm:$0xff]
    %v187 = vld [vmem:[#allocation5 + $0x68] sm:$0xff]
    %v188 = vld [vmem:[#allocation5 + $0x70] sm:$0xff]
    %v189 = vld [vmem:[#allocation5 + $0x78] sm:$0xff]
    %v190 = vld [vmem:[#allocation5 + $0x80] sm:$0xff]
    %v191 = vld [vmem:[#allocation5 + $0x88] sm:$0xff]
    %v192 = vld [vmem:[#allocation5 + $0x90] sm:$0xff]
    %v193 = vld [vmem:[#allocation5 + $0x98] sm:$0xff]
    %v194 = vld [vmem:[#allocation5 + $0xa0] sm:$0xff]
    %v195 = vld [vmem:[#allocation5 + $0xa8] sm:$0xff]
    %v196 = vld [vmem:[#allocation5 + $0xb0] sm:$0xff]
    %v197 = vld [vmem:[#allocation5 + $0xb8] sm:$0xff]
    %v198 = vld [vmem:[#allocation5 + $0xc0] sm:$0xff]
    %v199 = vld [vmem:[#allocation5 + $0xc8] sm:$0xff]
    %v200 = vld [vmem:[#allocation5 + $0xd0] sm:$0xff]
    %v201 = vld [vmem:[#allocation5 + $0xd8] sm:$0xff]
    %v202 = vld [vmem:[#allocation5 + $0xe0] sm:$0xff]
    %v203 = vld [vmem:[#allocation5 + $0xe8] sm:$0xff]
    %v204 = vld [vmem:[#allocation5 + $0xf0] sm:$0xff]
    %v205 = vld [vmem:[#allocation5 + $0xf8] sm:$0xff]
    %v206 = vld [vmem:[#allocation5 + $0x100] sm:$0xff]
    %v207 = vld [vmem:[#allocation5 + $0x108] sm:$0xff]
    %v208 = vld [vmem:[#allocation5 + $0x110] sm:$0xff]
    %v209 = vld [vmem:[#allocation5 + $0x118] sm:$0xff]
    %v210 = vld [vmem:[#allocation5 + $0x120] sm:$0xff]
    %v211 = vld [vmem:[#allocation5 + $0x128] sm:$0xff]
    %v212 = vld [vmem:[#allocation5 + $0x130] sm:$0xff]
    %v213 = vld [vmem:[#allocation5 + $0x138] sm:$0xff]
    %v214 = vld [vmem:[#allocation5 + $0x140] sm:$0xff]
    %v215 = vld [vmem:[#allocation5 + $0x148] sm:$0xff]
    %v216 = vld [vmem:[#allocation5 + $0x150] sm:$0xff]
    %v217 = vld [vmem:[#allocation5 + $0x158] sm:$0xff]
    %v218 = vld [vmem:[#allocation5 + $0x160] sm:$0xff]
    %v219 = vld [vmem:[#allocation5 + $0x168] sm:$0xff]
    %v220 = vld [vmem:[#allocation5 + $0x170] sm:$0xff]
    %v221 = vld [vmem:[#allocation5 + $0x178] sm:$0xff]
    %v222 = vld [vmem:[#allocation5 + $0x180] sm:$0xff]
    %v223 = vld [vmem:[#allocation5 + $0x188] sm:$0xff]
    %v224 = vld [vmem:[#allocation5 + $0x190] sm:$0xff]
    %v225 = vld [vmem:[#allocation5 + $0x198] sm:$0xff]
    %v226 = vld [vmem:[#allocation5 + $0x1a0] sm:$0xff]
    %v227 = vld [vmem:[#allocation5 + $0x1a8] sm:$0xff]
    %v228 = vld [vmem:[#allocation5 + $0x1b0] sm:$0xff]
    %v229 = vld [vmem:[#allocation5 + $0x1b8] sm:$0xff]
    %v230 = vld [vmem:[#allocation5 + $0x1c0] sm:$0xff]
    %v231 = vld [vmem:[#allocation5 + $0x1c8] sm:$0xff]
    %v232 = vld [vmem:[#allocation5 + $0x1d0] sm:$0xff]
    %v233 = vld [vmem:[#allocation5 + $0x1d8] sm:$0xff]
    %v234 = vld [vmem:[#allocation5 + $0x1e0] sm:$0xff]
    %v235 = vld [vmem:[#allocation5 + $0x1e8] sm:$0xff]
    %v236 = vld [vmem:[#allocation5 + $0x1f0] sm:$0xff]
    %v237 = vld [vmem:[#allocation5 + $0x1f8] sm:$0xff]
    %v238 = vld [vmem:[#allocation5 + $0x200] sm:$0xff]
    %v239 = vld [vmem:[#allocation5 + $0x208] sm:$0xff]
    %v240 = vld [vmem:[#allocation5 + $0x210] sm:$0xff]
    %v241 = vld [vmem:[#allocation5 + $0x218] sm:$0xff]
    %v242 = vld [vmem:[#allocation5 + $0x220] sm:$0xff]
    %v243 = vld [vmem:[#allocation5 + $0x228] sm:$0xff]
    %v244 = vld [vmem:[#allocation5 + $0x230] sm:$0xff]
    %v245 = vld [vmem:[#allocation5 + $0x238] sm:$0xff]
    %v246 = vld [vmem:[#allocation5 + $0x240] sm:$0xff]
    %v247 = vld [vmem:[#allocation5 + $0x248] sm:$0xff]
    %v248 = vld [vmem:[#allocation5 + $0x250] sm:$0xff]
    %v249 = vld [vmem:[#allocation5 + $0x258] sm:$0xff]
    %v250 = vld [vmem:[#allocation5 + $0x260] sm:$0xff]
    %v251 = vld [vmem:[#allocation5 + $0x268] sm:$0xff]
    %v252 = vld [vmem:[#allocation5 + $0x270] sm:$0xff]
    %v253 = vld [vmem:[#allocation5 + $0x278] sm:$0xff]
    %v254 = vld [vmem:[#allocation5 + $0x280] sm:$0xff]
    %v255 = vld [vmem:[#allocation5 + $0x288] sm:$0xff]
    %v256 = vld [vmem:[#allocation5 + $0x290] sm:$0xff]
    %v257 = vld [vmem:[#allocation5 + $0x298] sm:$0xff]
    %v258 = vld [vmem:[#allocation5 + $0x2a0] sm:$0xff]
    %v259 = vld [vmem:[#allocation5 + $0x2a8] sm:$0xff]
    %v260 = vld [vmem:[#allocation5 + $0x2b0] sm:$0xff]
    %v261 = vld [vmem:[#allocation5 + $0x2b8] sm:$0xff]
    %v262 = vld [vmem:[#allocation5 + $0x2c0] sm:$0xff]
    %v263 = vld [vmem:[#allocation5 + $0x2c8] sm:$0xff]
    %v264 = vld [vmem:[#allocation5 + $0x2d0] sm:$0xff]
    %v265 = vld [vmem:[#allocation5 + $0x2d8] sm:$0xff]
    %v266 = vld [vmem:[#allocation5 + $0x2e0] sm:$0xff]
    %v267 = vld [vmem:[#allocation5 + $0x2e8] sm:$0xff]
    %v268 = vld [vmem:[#allocation5 + $0x2f0] sm:$0xff]
    %v269 = vld [vmem:[#allocation5 + $0x2f8] sm:$0xff]
    %v270 = vld [vmem:[#allocation5 + $0x300] sm:$0xff]
    %v271 = vld [vmem:[#allocation5 + $0x308] sm:$0xff]
    %v272 = vld [vmem:[#allocation5 + $0x310] sm:$0xff]
    %v273 = vld [vmem:[#allocation5 + $0x318] sm:$0xff]
    %v274 = vld [vmem:[#allocation5 + $0x320] sm:$0xff]
    %v275 = vld [vmem:[#allocation5 + $0x328] sm:$0xff]
    %v276 = vld [vmem:[#allocation5 + $0x330] sm:$0xff]
    %v277 = vld [vmem:[#allocation5 + $0x338] sm:$0xff]
    %v278 = vld [vmem:[#allocation5 + $0x340] sm:$0xff]
    %v279 = vld [vmem:[#allocation5 + $0x348] sm:$0xff]
    %v280 = vld [vmem:[#allocation5 + $0x350] sm:$0xff]
    %v281 = vld [vmem:[#allocation5 + $0x358] sm:$0xff]
    %v282 = vld [vmem:[#allocation5 + $0x360] sm:$0xff]
    %v283 = vld [vmem:[#allocation5 + $0x368] sm:$0xff]
    %v284 = vld [vmem:[#allocation5 + $0x370] sm:$0xff]
    %v285 = vld [vmem:[#allocation5 + $0x378] sm:$0xff]
    %v286 = vld [vmem:[#allocation5 + $0x380] sm:$0xff]
    %v287 = vld [vmem:[#allocation5 + $0x388] sm:$0xff]
    %v288 = vld [vmem:[#allocation5 + $0x390] sm:$0xff]
    %v289 = vld [vmem:[#allocation5 + $0x398] sm:$0xff]
    %v290 = vld [vmem:[#allocation5 + $0x3a0] sm:$0xff]
    %v291 = vld [vmem:[#allocation5 + $0x3a8] sm:$0xff]
    %v292 = vld [vmem:[#allocation5 + $0x3b0] sm:$0xff]
    %v293 = vld [vmem:[#allocation5 + $0x3b8] sm:$0xff]
    %v294 = vld [vmem:[#allocation5 + $0x3c0] sm:$0xff]
    %v295 = vld [vmem:[#allocation5 + $0x3c8] sm:$0xff]
    %v296 = vld [vmem:[#allocation5 + $0x3d0] sm:$0xff]
    %v297 = vld [vmem:[#allocation5 + $0x3d8] sm:$0xff]
    %v298 = vld [vmem:[#allocation5 + $0x3e0] sm:$0xff]
    %v299 = vld [vmem:[#allocation5 + $0x3e8] sm:$0xff]
    %v300 = vld [vmem:[#allocation5 + $0x3f0] sm:$0xff]
    %v301 = vld [vmem:[#allocation5 + $0x3f8] sm:$0xff]
    %v302 = vld [vmem:[#allocation5 + $0x400] sm:$0xff]
    %v303 = vld [vmem:[#allocation5 + $0x408] sm:$0xff]
    %v304 = vld [vmem:[#allocation5 + $0x410] sm:$0xff]
    %v305 = vld [vmem:[#allocation5 + $0x418] sm:$0xff]
    %v306 = vld [vmem:[#allocation5 + $0x420] sm:$0xff]
    %v307 = vld [vmem:[#allocation5 + $0x428] sm:$0xff]
    %v308 = vld [vmem:[#allocation5 + $0x430] sm:$0xff]
    %v309 = vld [vmem:[#allocation5 + $0x438] sm:$0xff]
    %v310 = vld [vmem:[#allocation5 + $0x440] sm:$0xff]
    %v311 = vld [vmem:[#allocation5 + $0x448] sm:$0xff]
    %v312 = vld [vmem:[#allocation5 + $0x450] sm:$0xff]
    %v313 = vld [vmem:[#allocation5 + $0x458] sm:$0xff]
    %v314 = vld [vmem:[#allocation5 + $0x460] sm:$0xff]
    %v315 = vld [vmem:[#allocation5 + $0x468] sm:$0xff]
    %v316 = vld [vmem:[#allocation5 + $0x470] sm:$0xff]
    %v317 = vld [vmem:[#allocation5 + $0x478] sm:$0xff]
    %v318 = vld [vmem:[#allocation5 + $0x480] sm:$0xff]
    %v319 = vld [vmem:[#allocation5 + $0x488] sm:$0xff]
    %v320 = vld [vmem:[#allocation5 + $0x490] sm:$0xff]
    %v321 = vld [vmem:[#allocation5 + $0x498] sm:$0xff]
    %v322 = vld [vmem:[#allocation5 + $0x4a0] sm:$0xff]
    %v323 = vld [vmem:[#allocation5 + $0x4a8] sm:$0xff]
    %v324 = vld [vmem:[#allocation5 + $0x4b0] sm:$0xff]
    %v325 = vld [vmem:[#allocation5 + $0x4b8] sm:$0xff]
    %v326 = vld [vmem:[#allocation5 + $0x4c0] sm:$0xff]
    %v327 = vld [vmem:[#allocation5 + $0x4c8] sm:$0xff]
    %v328 = vld [vmem:[#allocation5 + $0x4d0] sm:$0xff]
    %v329 = vld [vmem:[#allocation5 + $0x4d8] sm:$0xff]
    %v330 = vld [vmem:[#allocation5 + $0x4e0] sm:$0xff]
    %v331 = vld [vmem:[#allocation5 + $0x4e8] sm:$0xff]
    %v332 = vld [vmem:[#allocation5 + $0x4f0] sm:$0xff]
    %v333 = vld [vmem:[#allocation5 + $0x4f8] sm:$0xff]
    %v334 = vld [vmem:[#allocation5 + $0x500] sm:$0xff]
    %v335 = vld [vmem:[#allocation5 + $0x508] sm:$0xff]
    %v336 = vld [vmem:[#allocation5 + $0x510] sm:$0xff]
    %v337 = vld [vmem:[#allocation5 + $0x518] sm:$0xff]
    %v338 = vld [vmem:[#allocation5 + $0x520] sm:$0xff]
    %v339 = vld [vmem:[#allocation5 + $0x528] sm:$0xff]
    %v340 = vld [vmem:[#allocation5 + $0x530] sm:$0xff]
    %v341 = vld [vmem:[#allocation5 + $0x538] sm:$0xff]
    %v342 = vld [vmem:[#allocation5 + $0x540] sm:$0xff]
    %v343 = vld [vmem:[#allocation5 + $0x548] sm:$0xff]
    %v344 = vld [vmem:[#allocation5 + $0x550] sm:$0xff]
    %v345 = vld [vmem:[#allocation5 + $0x558] sm:$0xff]
    %v346 = vld [vmem:[#allocation5 + $0x560] sm:$0xff]
    %v347 = vld [vmem:[#allocation5 + $0x568] sm:$0xff]
    %v348 = vld [vmem:[#allocation5 + $0x570] sm:$0xff]
    %v349 = vld [vmem:[#allocation5 + $0x578] sm:$0xff]
    %v350 = vld [vmem:[#allocation5 + $0x580] sm:$0xff]
    %v351 = vld [vmem:[#allocation5 + $0x588] sm:$0xff]
    %v352 = vld [vmem:[#allocation5 + $0x590] sm:$0xff]
    %v353 = vld [vmem:[#allocation5 + $0x598] sm:$0xff]
    %v354 = vld [vmem:[#allocation5 + $0x5a0] sm:$0xff]
    %v355 = vld [vmem:[#allocation5 + $0x5a8] sm:$0xff]
    %v356 = vld [vmem:[#allocation5 + $0x5b0] sm:$0xff]
    %v357 = vld [vmem:[#allocation5 + $0x5b8] sm:$0xff]
    %v358 = vld [vmem:[#allocation5 + $0x5c0] sm:$0xff]
    %v359 = vld [vmem:[#allocation5 + $0x5c8] sm:$0xff]
    %v360 = vld [vmem:[#allocation5 + $0x5d0] sm:$0xff]
    %v361 = vld [vmem:[#allocation5 + $0x5d8] sm:$0xff]
    %v362 = vld [vmem:[#allocation5 + $0x5e0] sm:$0xff]
    %v363 = vld [vmem:[#allocation5 + $0x5e8] sm:$0xff]
    %v364 = vld [vmem:[#allocation5 + $0x5f0] sm:$0xff]
    %v365 = vld [vmem:[#allocation5 + $0x5f8] sm:$0xff]
    %v366 = vld [vmem:[#allocation5 + $0x600] sm:$0xff]
    %v367 = vld [vmem:[#allocation5 + $0x608] sm:$0xff]
    %v368 = vld [vmem:[#allocation5 + $0x610] sm:$0xff]
    %v369 = vld [vmem:[#allocation5 + $0x618] sm:$0xff]
    %v370 = vld [vmem:[#allocation5 + $0x620] sm:$0xff]
    %v371 = vld [vmem:[#allocation5 + $0x628] sm:$0xff]
    %v372 = vld [vmem:[#allocation5 + $0x630] sm:$0xff]
    %v373 = vld [vmem:[#allocation5 + $0x638] sm:$0xff]
    %v374 = vld [vmem:[#allocation5 + $0x640] sm:$0xff]
    %v375 = vld [vmem:[#allocation5 + $0x648] sm:$0xff]
    %v376 = vld [vmem:[#allocation5 + $0x650] sm:$0xff]
    %v377 = vld [vmem:[#allocation5 + $0x658] sm:$0xff]
    %v378 = vld [vmem:[#allocation5 + $0x660] sm:$0xff]
    %v379 = vld [vmem:[#allocation5 + $0x668] sm:$0xff]
    %v380 = vld [vmem:[#allocation5 + $0x670] sm:$0xff]
    %v381 = vld [vmem:[#allocation5 + $0x678] sm:$0xff]
    %v382 = vld [vmem:[#allocation5 + $0x680] sm:$0xff]
    %v383 = vld [vmem:[#allocation5 + $0x688] sm:$0xff]
    %v384 = vld [vmem:[#allocation5 + $0x690] sm:$0xff]
    %v385 = vld [vmem:[#allocation5 + $0x698] sm:$0xff]
    %v386 = vld [vmem:[#allocation5 + $0x6a0] sm:$0xff]
    %v387 = vld [vmem:[#allocation5 + $0x6a8] sm:$0xff]
    %v388 = vld [vmem:[#allocation5 + $0x6b0] sm:$0xff]
    %v389 = vld [vmem:[#allocation5 + $0x6b8] sm:$0xff]
    %v390 = vld [vmem:[#allocation5 + $0x6c0] sm:$0xff]
    %v391 = vld [vmem:[#allocation5 + $0x6c8] sm:$0xff]
    %v392 = vld [vmem:[#allocation5 + $0x6d0] sm:$0xff]
    %v393 = vld [vmem:[#allocation5 + $0x6d8] sm:$0xff]
    %v394 = vld [vmem:[#allocation5 + $0x6e0] sm:$0xff]
    %v395 = vld [vmem:[#allocation5 + $0x6e8] sm:$0xff]
    %v396 = vld [vmem:[#allocation5 + $0x6f0] sm:$0xff]
    %v397 = vld [vmem:[#allocation5 + $0x6f8] sm:$0xff]
    %v398 = vld [vmem:[#allocation5 + $0x700] sm:$0xff]
    %v399 = vld [vmem:[#allocation5 + $0x708] sm:$0xff]
    %v400 = vld [vmem:[#allocation5 + $0x710] sm:$0xff]
    %v401 = vld [vmem:[#allocation5 + $0x718] sm:$0xff]
    %v402 = vld [vmem:[#allocation5 + $0x720] sm:$0xff]
    %v403 = vld [vmem:[#allocation5 + $0x728] sm:$0xff]
    %v404 = vld [vmem:[#allocation5 + $0x730] sm:$0xff]
    %v405 = vld [vmem:[#allocation5 + $0x738] sm:$0xff]
    %v406 = vld [vmem:[#allocation5 + $0x740] sm:$0xff]
    %v407 = vld [vmem:[#allocation5 + $0x748] sm:$0xff]
    %v408 = vld [vmem:[#allocation5 + $0x750] sm:$0xff]
    %v409 = vld [vmem:[#allocation5 + $0x758] sm:$0xff]
    %v410 = vld [vmem:[#allocation5 + $0x760] sm:$0xff]
    %v411 = vld [vmem:[#allocation5 + $0x768] sm:$0xff]
    %v412 = vld [vmem:[#allocation5 + $0x770] sm:$0xff]
    %v413 = vld [vmem:[#allocation5 + $0x778] sm:$0xff]
    %v414 = vld [vmem:[#allocation5 + $0x780] sm:$0xff]
    %v415 = vld [vmem:[#allocation5 + $0x788] sm:$0xff]
    %v416 = vld [vmem:[#allocation5 + $0x790] sm:$0xff]
    %v417 = vld [vmem:[#allocation5 + $0x798] sm:$0xff]
    %v418 = vld [vmem:[#allocation5 + $0x7a0] sm:$0xff]
    %v419 = vld [vmem:[#allocation5 + $0x7a8] sm:$0xff]
    %v420 = vld [vmem:[#allocation5 + $0x7b0] sm:$0xff]
    %v421 = vld [vmem:[#allocation5 + $0x7b8] sm:$0xff]
    %v422 = vld [vmem:[#allocation5 + $0x7c0] sm:$0xff]
    %v423 = vld [vmem:[#allocation5 + $0x7c8] sm:$0xff]
    %v424 = vld [vmem:[#allocation5 + $0x7d0] sm:$0xff]
    %v425 = vld [vmem:[#allocation5 + $0x7d8] sm:$0xff]
    %v426 = vld [vmem:[#allocation5 + $0x7e0] sm:$0xff]
    %v427 = vld [vmem:[#allocation5 + $0x7e8] sm:$0xff]
    %v428 = vld [vmem:[#allocation5 + $0x7f0] sm:$0xff]
    %v429 = vld [vmem:[#allocation5 + $0x7f8] sm:$0xff]
    %v430 = vld [vmem:[#allocation7] sm:$0xff]
    %v432 = vlaneseq
    %v433 = vshrl.u32 %v432, 7
    %v434 = vsub.s32 0, %v433
    %v435 = vrot.slane %v430, %v434
    %v436 = vlaneseq
    %v437 = vshrl.u32 %v436, 7
    %v438 = vsub.s32 1, %v437
    %v439 = vrot.slane %v430, %v438
    %v440 = vlaneseq
    %v441 = vshrl.u32 %v440, 7
    %v442 = vsub.s32 2, %v441
    %v443 = vrot.slane %v430, %v442
    %v444 = vlaneseq
    %v445 = vshrl.u32 %v444, 7
    %v446 = vsub.s32 3, %v445
    %v447 = vrot.slane %v430, %v446
    %v448 = vlaneseq
    %v449 = vshrl.u32 %v448, 7
    %v450 = vsub.s32 4, %v449
    %v451 = vrot.slane %v430, %v450
    %v452 = vlaneseq
    %v453 = vshrl.u32 %v452, 7
    %v454 = vsub.s32 5, %v453
    %v455 = vrot.slane %v430, %v454
    %v456 = vlaneseq
    %v457 = vshrl.u32 %v456, 7
    %v458 = vsub.s32 6, %v457
    %v459 = vrot.slane %v430, %v458
    %v460 = vlaneseq
    %v461 = vshrl.u32 %v460, 7
    %v462 = vsub.s32 7, %v461
    %v463 = vrot.slane %v430, %v462
    %472 = vmatprep.subr.mxu0 %v295
    %473 = vmatpush1.msra.mxu0 %v294
    %474 = vmatprep.subr.mxu0 %v287
    %475 = vmatpush1.msra.mxu0 %v286
    %476 = vmatprep.subr.mxu0 %v279
    %477 = vmatpush1.msra.mxu0 %v278
    %478 = vmatprep.subr.mxu0 %v271
    %479 = vmatpush1.msra.mxu0 %v270
    %480 = vmatprep.subr.mxu0 %v263
    %481 = vmatpush1.msra.mxu0 %v262
    %482 = vmatprep.subr.mxu0 %v255
    %483 = vmatpush1.msra.mxu0 %v254
    %484 = vmatprep.subr.mxu0 %v247
    %485 = vmatpush1.msra.mxu0 %v246
    %486 = vmatprep.subr.mxu0 %v239
    %487 = vmatpush1.msra.mxu0 %v238
    %488 = vmatprep.subr.mxu0 %v231
    %489 = vmatpush1.msra.mxu0 %v230
    %490 = vmatprep.subr.mxu0 %v223
    %491 = vmatpush1.msra.mxu0 %v222
    %492 = vmatprep.subr.mxu0 %v215
    %493 = vmatpush1.msra.mxu0 %v214
    %494 = vmatprep.subr.mxu0 %v207
    %495 = vmatpush1.msra.mxu0 %v206
    %496 = vmatprep.subr.mxu0 %v199
    %497 = vmatpush1.msra.mxu0 %v198
    %498 = vmatprep.subr.mxu0 %v191
    %499 = vmatpush1.msra.mxu0 %v190
    %500 = vmatprep.subr.mxu0 %v183
    %501 = vmatpush1.msra.mxu0 %v182
    %502 = vmatprep.subr.mxu0 %v175
    %503 = vmatpush1.msra.mxu0 %v174
    %504 = vmatprep.subr.mxu0 %v423
    %505 = vmatpush2.msra.mxu0 %v422
    %506 = vmatprep.subr.mxu0 %v415
    %507 = vmatpush2.msra.mxu0 %v414
    %508 = vmatprep.subr.mxu0 %v407
    %509 = vmatpush2.msra.mxu0 %v406
    %510 = vmatprep.subr.mxu0 %v399
    %511 = vmatpush2.msra.mxu0 %v398
    %512 = vmatprep.subr.mxu0 %v391
    %513 = vmatpush2.msra.mxu0 %v390
    %514 = vmatprep.subr.mxu0 %v383
    %515 = vmatpush2.msra.mxu0 %v382
    %516 = vmatprep.subr.mxu0 %v375
    %517 = vmatpush2.msra.mxu0 %v374
    %518 = vmatprep.subr.mxu0 %v367
    %519 = vmatpush2.msra.mxu0 %v366
    %520 = vmatprep.subr.mxu0 %v359
    %521 = vmatpush2.msra.mxu0 %v358
    %522 = vmatprep.subr.mxu0 %v351
    %523 = vmatpush2.msra.mxu0 %v350
    %524 = vmatprep.subr.mxu0 %v343
    %525 = vmatpush2.msra.mxu0 %v342
    %526 = vmatprep.subr.mxu0 %v335
    %527 = vmatpush2.msra.mxu0 %v334
    %528 = vmatprep.subr.mxu0 %v327
    %529 = vmatpush2.msra.mxu0 %v326
    %530 = vmatprep.subr.mxu0 %v319
    %531 = vmatpush2.msra.mxu0 %v318
    %532 = vmatprep.subr.mxu0 %v311
    %533 = vmatpush2.msra.mxu0 %v310
    %534 = vmatprep.subr.mxu0 %v303
    %535 = vmatpush2.msra.mxu0 %v302
    %536 = vmatprep.mubr.f32.mxu0 %v169
    %537 = vmatmul.mubr.f32.gmra.mxu0 %v168
    %v538 = vpop.f32.mrf.mxu0
    %v539 = vadd.f32 %v435, %v538
    %v540 = vpop.f32.mrf.mxu0
    %v541 = vadd.f32 %v439, %v540
    %542 = vdwg.mxu0
    %543 = vmatprep.subr.mxu0 %v297
    %544 = vmatpush1.msra.mxu0 %v296
    %545 = vmatprep.subr.mxu0 %v289
    %546 = vmatpush1.msra.mxu0 %v288
    %547 = vmatprep.subr.mxu0 %v281
    %548 = vmatpush1.msra.mxu0 %v280
    %549 = vmatprep.subr.mxu0 %v273
    %550 = vmatpush1.msra.mxu0 %v272
    %551 = vmatprep.subr.mxu0 %v265
    %552 = vmatpush1.msra.mxu0 %v264
    %553 = vmatprep.subr.mxu0 %v257
    %554 = vmatpush1.msra.mxu0 %v256
    %555 = vmatprep.subr.mxu0 %v249
    %556 = vmatpush1.msra.mxu0 %v248
    %557 = vmatprep.subr.mxu0 %v241
    %558 = vmatpush1.msra.mxu0 %v240
    %559 = vmatprep.subr.mxu0 %v233
    %560 = vmatpush1.msra.mxu0 %v232
    %561 = vmatprep.subr.mxu0 %v225
    %562 = vmatpush1.msra.mxu0 %v224
    %563 = vmatprep.subr.mxu0 %v217
    %564 = vmatpush1.msra.mxu0 %v216
    %565 = vmatprep.subr.mxu0 %v209
    %566 = vmatpush1.msra.mxu0 %v208
    %567 = vmatprep.subr.mxu0 %v201
    %568 = vmatpush1.msra.mxu0 %v200
    %569 = vmatprep.subr.mxu0 %v193
    %570 = vmatpush1.msra.mxu0 %v192
    %571 = vmatprep.subr.mxu0 %v185
    %572 = vmatpush1.msra.mxu0 %v184
    %573 = vmatprep.subr.mxu0 %v177
    %574 = vmatpush1.msra.mxu0 %v176
    %575 = vmatprep.subr.mxu0 %v425
    %576 = vmatpush2.msra.mxu0 %v424
    %577 = vmatprep.subr.mxu0 %v417
    %578 = vmatpush2.msra.mxu0 %v416
    %579 = vmatprep.subr.mxu0 %v409
    %580 = vmatpush2.msra.mxu0 %v408
    %581 = vmatprep.subr.mxu0 %v401
    %582 = vmatpush2.msra.mxu0 %v400
    %583 = vmatprep.subr.mxu0 %v393
    %584 = vmatpush2.msra.mxu0 %v392
    %585 = vmatprep.subr.mxu0 %v385
    %586 = vmatpush2.msra.mxu0 %v384
    %587 = vmatprep.subr.mxu0 %v377
    %588 = vmatpush2.msra.mxu0 %v376
    %589 = vmatprep.subr.mxu0 %v369
    %590 = vmatpush2.msra.mxu0 %v368
    %591 = vmatprep.subr.mxu0 %v361
    %592 = vmatpush2.msra.mxu0 %v360
    %593 = vmatprep.subr.mxu0 %v353
    %594 = vmatpush2.msra.mxu0 %v352
    %595 = vmatprep.subr.mxu0 %v345
    %596 = vmatpush2.msra.mxu0 %v344
    %597 = vmatprep.subr.mxu0 %v337
    %598 = vmatpush2.msra.mxu0 %v336
    %599 = vmatprep.subr.mxu0 %v329
    %600 = vmatpush2.msra.mxu0 %v328
    %601 = vmatprep.subr.mxu0 %v321
    %602 = vmatpush2.msra.mxu0 %v320
    %603 = vmatprep.subr.mxu0 %v313
    %604 = vmatpush2.msra.mxu0 %v312
    %605 = vmatprep.subr.mxu0 %v305
    %606 = vmatpush2.msra.mxu0 %v304
    %607 = vmatprep.mubr.f32.mxu0 %v169
    %608 = vmatmul.mubr.f32.gmra.mxu0 %v168
    %v609 = vpop.f32.mrf.mxu0
    %v610 = vadd.f32 %v443, %v609
    %v611 = vpop.f32.mrf.mxu0
    %v612 = vadd.f32 %v447, %v611
    %613 = vdwg.mxu0
    %614 = vmatprep.subr.mxu0 %v299
    %615 = vmatpush1.msra.mxu0 %v298
    %616 = vmatprep.subr.mxu0 %v291
    %617 = vmatpush1.msra.mxu0 %v290
    %618 = vmatprep.subr.mxu0 %v283
    %619 = vmatpush1.msra.mxu0 %v282
    %620 = vmatprep.subr.mxu0 %v275
    %621 = vmatpush1.msra.mxu0 %v274
    %622 = vmatprep.subr.mxu0 %v267
    %623 = vmatpush1.msra.mxu0 %v266
    %624 = vmatprep.subr.mxu0 %v259
    %625 = vmatpush1.msra.mxu0 %v258
    %626 = vmatprep.subr.mxu0 %v251
    %627 = vmatpush1.msra.mxu0 %v250
    %628 = vmatprep.subr.mxu0 %v243
    %629 = vmatpush1.msra.mxu0 %v242
    %630 = vmatprep.subr.mxu0 %v235
    %631 = vmatpush1.msra.mxu0 %v234
    %632 = vmatprep.subr.mxu0 %v227
    %633 = vmatpush1.msra.mxu0 %v226
    %634 = vmatprep.subr.mxu0 %v219
    %635 = vmatpush1.msra.mxu0 %v218
    %636 = vmatprep.subr.mxu0 %v211
    %637 = vmatpush1.msra.mxu0 %v210
    %638 = vmatprep.subr.mxu0 %v203
    %639 = vmatpush1.msra.mxu0 %v202
    %640 = vmatprep.subr.mxu0 %v195
    %641 = vmatpush1.msra.mxu0 %v194
    %642 = vmatprep.subr.mxu0 %v187
    %643 = vmatpush1.msra.mxu0 %v186
    %644 = vmatprep.subr.mxu0 %v179
    %645 = vmatpush1.msra.mxu0 %v178
    %646 = vmatprep.subr.mxu0 %v427
    %647 = vmatpush2.msra.mxu0 %v426
    %648 = vmatprep.subr.mxu0 %v419
    %649 = vmatpush2.msra.mxu0 %v418
    %650 = vmatprep.subr.mxu0 %v411
    %651 = vmatpush2.msra.mxu0 %v410
    %652 = vmatprep.subr.mxu0 %v403
    %653 = vmatpush2.msra.mxu0 %v402
    %654 = vmatprep.subr.mxu0 %v395
    %655 = vmatpush2.msra.mxu0 %v394
    %656 = vmatprep.subr.mxu0 %v387
    %657 = vmatpush2.msra.mxu0 %v386
    %658 = vmatprep.subr.mxu0 %v379
    %659 = vmatpush2.msra.mxu0 %v378
    %660 = vmatprep.subr.mxu0 %v371
    %661 = vmatpush2.msra.mxu0 %v370
    %662 = vmatprep.subr.mxu0 %v363
    %663 = vmatpush2.msra.mxu0 %v362
    %664 = vmatprep.subr.mxu0 %v355
    %665 = vmatpush2.msra.mxu0 %v354
    %666 = vmatprep.subr.mxu0 %v347
    %667 = vmatpush2.msra.mxu0 %v346
    %668 = vmatprep.subr.mxu0 %v339
    %669 = vmatpush2.msra.mxu0 %v338
    %670 = vmatprep.subr.mxu0 %v331
    %671 = vmatpush2.msra.mxu0 %v330
    %672 = vmatprep.subr.mxu0 %v323
    %673 = vmatpush2.msra.mxu0 %v322
    %674 = vmatprep.subr.mxu0 %v315
    %675 = vmatpush2.msra.mxu0 %v314
    %676 = vmatprep.subr.mxu0 %v307
    %677 = vmatpush2.msra.mxu0 %v306
    %678 = vmatprep.mubr.f32.mxu0 %v169
    %679 = vmatmul.mubr.f32.gmra.mxu0 %v168
    %v680 = vpop.f32.mrf.mxu0
    %v681 = vadd.f32 %v451, %v680
    %v682 = vpop.f32.mrf.mxu0
    %v683 = vadd.f32 %v455, %v682
    %684 = vdwg.mxu0
    %685 = vmatprep.subr.mxu0 %v301
    %686 = vmatpush1.msra.mxu0 %v300
    %687 = vmatprep.subr.mxu0 %v293
    %688 = vmatpush1.msra.mxu0 %v292
    %689 = vmatprep.subr.mxu0 %v285
    %690 = vmatpush1.msra.mxu0 %v284
    %691 = vmatprep.subr.mxu0 %v277
    %692 = vmatpush1.msra.mxu0 %v276
    %693 = vmatprep.subr.mxu0 %v269
    %694 = vmatpush1.msra.mxu0 %v268
    %695 = vmatprep.subr.mxu0 %v261
    %696 = vmatpush1.msra.mxu0 %v260
    %697 = vmatprep.subr.mxu0 %v253
    %698 = vmatpush1.msra.mxu0 %v252
    %699 = vmatprep.subr.mxu0 %v245
    %700 = vmatpush1.msra.mxu0 %v244
    %701 = vmatprep.subr.mxu0 %v237
    %702 = vmatpush1.msra.mxu0 %v236
    %703 = vmatprep.subr.mxu0 %v229
    %704 = vmatpush1.msra.mxu0 %v228
    %705 = vmatprep.subr.mxu0 %v221
    %706 = vmatpush1.msra.mxu0 %v220
    %707 = vmatprep.subr.mxu0 %v213
    %708 = vmatpush1.msra.mxu0 %v212
    %709 = vmatprep.subr.mxu0 %v205
    %710 = vmatpush1.msra.mxu0 %v204
    %711 = vmatprep.subr.mxu0 %v197
    %712 = vmatpush1.msra.mxu0 %v196
    %713 = vmatprep.subr.mxu0 %v189
    %714 = vmatpush1.msra.mxu0 %v188
    %715 = vmatprep.subr.mxu0 %v181
    %716 = vmatpush1.msra.mxu0 %v180
    %717 = vmatprep.subr.mxu0 %v429
    %718 = vmatpush2.msra.mxu0 %v428
    %719 = vmatprep.subr.mxu0 %v421
    %720 = vmatpush2.msra.mxu0 %v420
    %721 = vmatprep.subr.mxu0 %v413
    %722 = vmatpush2.msra.mxu0 %v412
    %723 = vmatprep.subr.mxu0 %v405
    %724 = vmatpush2.msra.mxu0 %v404
    %725 = vmatprep.subr.mxu0 %v397
    %726 = vmatpush2.msra.mxu0 %v396
    %727 = vmatprep.subr.mxu0 %v389
    %728 = vmatpush2.msra.mxu0 %v388
    %729 = vmatprep.subr.mxu0 %v381
    %730 = vmatpush2.msra.mxu0 %v380
    %731 = vmatprep.subr.mxu0 %v373
    %732 = vmatpush2.msra.mxu0 %v372
    %733 = vmatprep.subr.mxu0 %v365
    %734 = vmatpush2.msra.mxu0 %v364
    %735 = vmatprep.subr.mxu0 %v357
    %736 = vmatpush2.msra.mxu0 %v356
    %737 = vmatprep.subr.mxu0 %v349
    %738 = vmatpush2.msra.mxu0 %v348
    %739 = vmatprep.subr.mxu0 %v341
    %740 = vmatpush2.msra.mxu0 %v340
    %741 = vmatprep.subr.mxu0 %v333
    %742 = vmatpush2.msra.mxu0 %v332
    %743 = vmatprep.subr.mxu0 %v325
    %744 = vmatpush2.msra.mxu0 %v324
    %745 = vmatprep.subr.mxu0 %v317
    %746 = vmatpush2.msra.mxu0 %v316
    %747 = vmatprep.subr.mxu0 %v309
    %748 = vmatpush2.msra.mxu0 %v308
    %749 = vmatprep.mubr.f32.mxu0 %v169
    %750 = vmatmul.mubr.f32.gmra.mxu0 %v168
    %v751 = vpop.f32.mrf.mxu0
    %v752 = vadd.f32 %v459, %v751
    %v753 = vpop.f32.mrf.mxu0
    %v754 = vadd.f32 %v463, %v753
    %755 = vdwg.mxu0
    %s756 = scalar_lea.vmem [#allocation5], 2048
    %v757 = vld [vmem:[%s756] sm:$0xff]
    %v758 = vld [vmem:[%s756 + $0x8] sm:$0xff]
    %v759 = vld [vmem:[%s756 + $0x10] sm:$0xff]
    %v760 = vld [vmem:[%s756 + $0x18] sm:$0xff]
    %v761 = vld [vmem:[%s756 + $0x20] sm:$0xff]
    %v762 = vld [vmem:[%s756 + $0x28] sm:$0xff]
    %v763 = vld [vmem:[%s756 + $0x30] sm:$0xff]
    %v764 = vld [vmem:[%s756 + $0x38] sm:$0xff]
    %v765 = vld [vmem:[%s756 + $0x40] sm:$0xff]
    %v766 = vld [vmem:[%s756 + $0x48] sm:$0xff]
    %v767 = vld [vmem:[%s756 + $0x50] sm:$0xff]
    %v768 = vld [vmem:[%s756 + $0x58] sm:$0xff]
    %v769 = vld [vmem:[%s756 + $0x60] sm:$0xff]
    %v770 = vld [vmem:[%s756 + $0x68] sm:$0xff]
    %v771 = vld [vmem:[%s756 + $0x70] sm:$0xff]
    %v772 = vld [vmem:[%s756 + $0x78] sm:$0xff]
    %v773 = vld [vmem:[%s756 + $0x80] sm:$0xff]
    %v774 = vld [vmem:[%s756 + $0x88] sm:$0xff]
    %v775 = vld [vmem:[%s756 + $0x90] sm:$0xff]
    %v776 = vld [vmem:[%s756 + $0x98] sm:$0xff]
    %v777 = vld [vmem:[%s756 + $0xa0] sm:$0xff]
    %v778 = vld [vmem:[%s756 + $0xa8] sm:$0xff]
    %v779 = vld [vmem:[%s756 + $0xb0] sm:$0xff]
    %v780 = vld [vmem:[%s756 + $0xb8] sm:$0xff]
    %v781 = vld [vmem:[%s756 + $0xc0] sm:$0xff]
    %v782 = vld [vmem:[%s756 + $0xc8] sm:$0xff]
    %v783 = vld [vmem:[%s756 + $0xd0] sm:$0xff]
    %v784 = vld [vmem:[%s756 + $0xd8] sm:$0xff]
    %v785 = vld [vmem:[%s756 + $0xe0] sm:$0xff]
    %v786 = vld [vmem:[%s756 + $0xe8] sm:$0xff]
    %v787 = vld [vmem:[%s756 + $0xf0] sm:$0xff]
    %v788 = vld [vmem:[%s756 + $0xf8] sm:$0xff]
    %v789 = vld [vmem:[%s756 + $0x100] sm:$0xff]
    %v790 = vld [vmem:[%s756 + $0x108] sm:$0xff]
    %v791 = vld [vmem:[%s756 + $0x110] sm:$0xff]
    %v792 = vld [vmem:[%s756 + $0x118] sm:$0xff]
    %v793 = vld [vmem:[%s756 + $0x120] sm:$0xff]
    %v794 = vld [vmem:[%s756 + $0x128] sm:$0xff]
    %v795 = vld [vmem:[%s756 + $0x130] sm:$0xff]
    %v796 = vld [vmem:[%s756 + $0x138] sm:$0xff]
    %v797 = vld [vmem:[%s756 + $0x140] sm:$0xff]
    %v798 = vld [vmem:[%s756 + $0x148] sm:$0xff]
    %v799 = vld [vmem:[%s756 + $0x150] sm:$0xff]
    %v800 = vld [vmem:[%s756 + $0x158] sm:$0xff]
    %v801 = vld [vmem:[%s756 + $0x160] sm:$0xff]
    %v802 = vld [vmem:[%s756 + $0x168] sm:$0xff]
    %v803 = vld [vmem:[%s756 + $0x170] sm:$0xff]
    %v804 = vld [vmem:[%s756 + $0x178] sm:$0xff]
    %v805 = vld [vmem:[%s756 + $0x180] sm:$0xff]
    %v806 = vld [vmem:[%s756 + $0x188] sm:$0xff]
    %v807 = vld [vmem:[%s756 + $0x190] sm:$0xff]
    %v808 = vld [vmem:[%s756 + $0x198] sm:$0xff]
    %v809 = vld [vmem:[%s756 + $0x1a0] sm:$0xff]
    %v810 = vld [vmem:[%s756 + $0x1a8] sm:$0xff]
    %v811 = vld [vmem:[%s756 + $0x1b0] sm:$0xff]
    %v812 = vld [vmem:[%s756 + $0x1b8] sm:$0xff]
    %v813 = vld [vmem:[%s756 + $0x1c0] sm:$0xff]
    %v814 = vld [vmem:[%s756 + $0x1c8] sm:$0xff]
    %v815 = vld [vmem:[%s756 + $0x1d0] sm:$0xff]
    %v816 = vld [vmem:[%s756 + $0x1d8] sm:$0xff]
    %v817 = vld [vmem:[%s756 + $0x1e0] sm:$0xff]
    %v818 = vld [vmem:[%s756 + $0x1e8] sm:$0xff]
    %v819 = vld [vmem:[%s756 + $0x1f0] sm:$0xff]
    %v820 = vld [vmem:[%s756 + $0x1f8] sm:$0xff]
    %v821 = vld [vmem:[%s756 + $0x200] sm:$0xff]
    %v822 = vld [vmem:[%s756 + $0x208] sm:$0xff]
    %v823 = vld [vmem:[%s756 + $0x210] sm:$0xff]
    %v824 = vld [vmem:[%s756 + $0x218] sm:$0xff]
    %v825 = vld [vmem:[%s756 + $0x220] sm:$0xff]
    %v826 = vld [vmem:[%s756 + $0x228] sm:$0xff]
    %v827 = vld [vmem:[%s756 + $0x230] sm:$0xff]
    %v828 = vld [vmem:[%s756 + $0x238] sm:$0xff]
    %v829 = vld [vmem:[%s756 + $0x240] sm:$0xff]
    %v830 = vld [vmem:[%s756 + $0x248] sm:$0xff]
    %v831 = vld [vmem:[%s756 + $0x250] sm:$0xff]
    %v832 = vld [vmem:[%s756 + $0x258] sm:$0xff]
    %v833 = vld [vmem:[%s756 + $0x260] sm:$0xff]
    %v834 = vld [vmem:[%s756 + $0x268] sm:$0xff]
    %v835 = vld [vmem:[%s756 + $0x270] sm:$0xff]
    %v836 = vld [vmem:[%s756 + $0x278] sm:$0xff]
    %v837 = vld [vmem:[%s756 + $0x280] sm:$0xff]
    %v838 = vld [vmem:[%s756 + $0x288] sm:$0xff]
    %v839 = vld [vmem:[%s756 + $0x290] sm:$0xff]
    %v840 = vld [vmem:[%s756 + $0x298] sm:$0xff]
    %v841 = vld [vmem:[%s756 + $0x2a0] sm:$0xff]
    %v842 = vld [vmem:[%s756 + $0x2a8] sm:$0xff]
    %v843 = vld [vmem:[%s756 + $0x2b0] sm:$0xff]
    %v844 = vld [vmem:[%s756 + $0x2b8] sm:$0xff]
    %v845 = vld [vmem:[%s756 + $0x2c0] sm:$0xff]
    %v846 = vld [vmem:[%s756 + $0x2c8] sm:$0xff]
    %v847 = vld [vmem:[%s756 + $0x2d0] sm:$0xff]
    %v848 = vld [vmem:[%s756 + $0x2d8] sm:$0xff]
    %v849 = vld [vmem:[%s756 + $0x2e0] sm:$0xff]
    %v850 = vld [vmem:[%s756 + $0x2e8] sm:$0xff]
    %v851 = vld [vmem:[%s756 + $0x2f0] sm:$0xff]
    %v852 = vld [vmem:[%s756 + $0x2f8] sm:$0xff]
    %v853 = vld [vmem:[%s756 + $0x300] sm:$0xff]
    %v854 = vld [vmem:[%s756 + $0x308] sm:$0xff]
    %v855 = vld [vmem:[%s756 + $0x310] sm:$0xff]
    %v856 = vld [vmem:[%s756 + $0x318] sm:$0xff]
    %v857 = vld [vmem:[%s756 + $0x320] sm:$0xff]
    %v858 = vld [vmem:[%s756 + $0x328] sm:$0xff]
    %v859 = vld [vmem:[%s756 + $0x330] sm:$0xff]
    %v860 = vld [vmem:[%s756 + $0x338] sm:$0xff]
    %v861 = vld [vmem:[%s756 + $0x340] sm:$0xff]
    %v862 = vld [vmem:[%s756 + $0x348] sm:$0xff]
    %v863 = vld [vmem:[%s756 + $0x350] sm:$0xff]
    %v864 = vld [vmem:[%s756 + $0x358] sm:$0xff]
    %v865 = vld [vmem:[%s756 + $0x360] sm:$0xff]
    %v866 = vld [vmem:[%s756 + $0x368] sm:$0xff]
    %v867 = vld [vmem:[%s756 + $0x370] sm:$0xff]
    %v868 = vld [vmem:[%s756 + $0x378] sm:$0xff]
    %v869 = vld [vmem:[%s756 + $0x380] sm:$0xff]
    %v870 = vld [vmem:[%s756 + $0x388] sm:$0xff]
    %v871 = vld [vmem:[%s756 + $0x390] sm:$0xff]
    %v872 = vld [vmem:[%s756 + $0x398] sm:$0xff]
    %v873 = vld [vmem:[%s756 + $0x3a0] sm:$0xff]
    %v874 = vld [vmem:[%s756 + $0x3a8] sm:$0xff]
    %v875 = vld [vmem:[%s756 + $0x3b0] sm:$0xff]
    %v876 = vld [vmem:[%s756 + $0x3b8] sm:$0xff]
    %v877 = vld [vmem:[%s756 + $0x3c0] sm:$0xff]
    %v878 = vld [vmem:[%s756 + $0x3c8] sm:$0xff]
    %v879 = vld [vmem:[%s756 + $0x3d0] sm:$0xff]
    %v880 = vld [vmem:[%s756 + $0x3d8] sm:$0xff]
    %v881 = vld [vmem:[%s756 + $0x3e0] sm:$0xff]
    %v882 = vld [vmem:[%s756 + $0x3e8] sm:$0xff]
    %v883 = vld [vmem:[%s756 + $0x3f0] sm:$0xff]
    %v884 = vld [vmem:[%s756 + $0x3f8] sm:$0xff]
    %v885 = vld [vmem:[%s756 + $0x400] sm:$0xff]
    %v886 = vld [vmem:[%s756 + $0x408] sm:$0xff]
    %v887 = vld [vmem:[%s756 + $0x410] sm:$0xff]
    %v888 = vld [vmem:[%s756 + $0x418] sm:$0xff]
    %v889 = vld [vmem:[%s756 + $0x420] sm:$0xff]
    %v890 = vld [vmem:[%s756 + $0x428] sm:$0xff]
    %v891 = vld [vmem:[%s756 + $0x430] sm:$0xff]
    %v892 = vld [vmem:[%s756 + $0x438] sm:$0xff]
    %v893 = vld [vmem:[%s756 + $0x440] sm:$0xff]
    %v894 = vld [vmem:[%s756 + $0x448] sm:$0xff]
    %v895 = vld [vmem:[%s756 + $0x450] sm:$0xff]
    %v896 = vld [vmem:[%s756 + $0x458] sm:$0xff]
    %v897 = vld [vmem:[%s756 + $0x460] sm:$0xff]
    %v898 = vld [vmem:[%s756 + $0x468] sm:$0xff]
    %v899 = vld [vmem:[%s756 + $0x470] sm:$0xff]
    %v900 = vld [vmem:[%s756 + $0x478] sm:$0xff]
    %v901 = vld [vmem:[%s756 + $0x480] sm:$0xff]
    %v902 = vld [vmem:[%s756 + $0x488] sm:$0xff]
    %v903 = vld [vmem:[%s756 + $0x490] sm:$0xff]
    %v904 = vld [vmem:[%s756 + $0x498] sm:$0xff]
    %v905 = vld [vmem:[%s756 + $0x4a0] sm:$0xff]
    %v906 = vld [vmem:[%s756 + $0x4a8] sm:$0xff]
    %v907 = vld [vmem:[%s756 + $0x4b0] sm:$0xff]
    %v908 = vld [vmem:[%s756 + $0x4b8] sm:$0xff]
    %v909 = vld [vmem:[%s756 + $0x4c0] sm:$0xff]
    %v910 = vld [vmem:[%s756 + $0x4c8] sm:$0xff]
    %v911 = vld [vmem:[%s756 + $0x4d0] sm:$0xff]
    %v912 = vld [vmem:[%s756 + $0x4d8] sm:$0xff]
    %v913 = vld [vmem:[%s756 + $0x4e0] sm:$0xff]
    %v914 = vld [vmem:[%s756 + $0x4e8] sm:$0xff]
    %v915 = vld [vmem:[%s756 + $0x4f0] sm:$0xff]
    %v916 = vld [vmem:[%s756 + $0x4f8] sm:$0xff]
    %v917 = vld [vmem:[%s756 + $0x500] sm:$0xff]
    %v918 = vld [vmem:[%s756 + $0x508] sm:$0xff]
    %v919 = vld [vmem:[%s756 + $0x510] sm:$0xff]
    %v920 = vld [vmem:[%s756 + $0x518] sm:$0xff]
    %v921 = vld [vmem:[%s756 + $0x520] sm:$0xff]
    %v922 = vld [vmem:[%s756 + $0x528] sm:$0xff]
    %v923 = vld [vmem:[%s756 + $0x530] sm:$0xff]
    %v924 = vld [vmem:[%s756 + $0x538] sm:$0xff]
    %v925 = vld [vmem:[%s756 + $0x540] sm:$0xff]
    %v926 = vld [vmem:[%s756 + $0x548] sm:$0xff]
    %v927 = vld [vmem:[%s756 + $0x550] sm:$0xff]
    %v928 = vld [vmem:[%s756 + $0x558] sm:$0xff]
    %v929 = vld [vmem:[%s756 + $0x560] sm:$0xff]
    %v930 = vld [vmem:[%s756 + $0x568] sm:$0xff]
    %v931 = vld [vmem:[%s756 + $0x570] sm:$0xff]
    %v932 = vld [vmem:[%s756 + $0x578] sm:$0xff]
    %v933 = vld [vmem:[%s756 + $0x580] sm:$0xff]
    %v934 = vld [vmem:[%s756 + $0x588] sm:$0xff]
    %v935 = vld [vmem:[%s756 + $0x590] sm:$0xff]
    %v936 = vld [vmem:[%s756 + $0x598] sm:$0xff]
    %v937 = vld [vmem:[%s756 + $0x5a0] sm:$0xff]
    %v938 = vld [vmem:[%s756 + $0x5a8] sm:$0xff]
    %v939 = vld [vmem:[%s756 + $0x5b0] sm:$0xff]
    %v940 = vld [vmem:[%s756 + $0x5b8] sm:$0xff]
    %v941 = vld [vmem:[%s756 + $0x5c0] sm:$0xff]
    %v942 = vld [vmem:[%s756 + $0x5c8] sm:$0xff]
    %v943 = vld [vmem:[%s756 + $0x5d0] sm:$0xff]
    %v944 = vld [vmem:[%s756 + $0x5d8] sm:$0xff]
    %v945 = vld [vmem:[%s756 + $0x5e0] sm:$0xff]
    %v946 = vld [vmem:[%s756 + $0x5e8] sm:$0xff]
    %v947 = vld [vmem:[%s756 + $0x5f0] sm:$0xff]
    %v948 = vld [vmem:[%s756 + $0x5f8] sm:$0xff]
    %v949 = vld [vmem:[%s756 + $0x600] sm:$0xff]
    %v950 = vld [vmem:[%s756 + $0x608] sm:$0xff]
    %v951 = vld [vmem:[%s756 + $0x610] sm:$0xff]
    %v952 = vld [vmem:[%s756 + $0x618] sm:$0xff]
    %v953 = vld [vmem:[%s756 + $0x620] sm:$0xff]
    %v954 = vld [vmem:[%s756 + $0x628] sm:$0xff]
    %v955 = vld [vmem:[%s756 + $0x630] sm:$0xff]
    %v956 = vld [vmem:[%s756 + $0x638] sm:$0xff]
    %v957 = vld [vmem:[%s756 + $0x640] sm:$0xff]
    %v958 = vld [vmem:[%s756 + $0x648] sm:$0xff]
    %v959 = vld [vmem:[%s756 + $0x650] sm:$0xff]
    %v960 = vld [vmem:[%s756 + $0x658] sm:$0xff]
    %v961 = vld [vmem:[%s756 + $0x660] sm:$0xff]
    %v962 = vld [vmem:[%s756 + $0x668] sm:$0xff]
    %v963 = vld [vmem:[%s756 + $0x670] sm:$0xff]
    %v964 = vld [vmem:[%s756 + $0x678] sm:$0xff]
    %v965 = vld [vmem:[%s756 + $0x680] sm:$0xff]
    %v966 = vld [vmem:[%s756 + $0x688] sm:$0xff]
    %v967 = vld [vmem:[%s756 + $0x690] sm:$0xff]
    %v968 = vld [vmem:[%s756 + $0x698] sm:$0xff]
    %v969 = vld [vmem:[%s756 + $0x6a0] sm:$0xff]
    %v970 = vld [vmem:[%s756 + $0x6a8] sm:$0xff]
    %v971 = vld [vmem:[%s756 + $0x6b0] sm:$0xff]
    %v972 = vld [vmem:[%s756 + $0x6b8] sm:$0xff]
    %v973 = vld [vmem:[%s756 + $0x6c0] sm:$0xff]
    %v974 = vld [vmem:[%s756 + $0x6c8] sm:$0xff]
    %v975 = vld [vmem:[%s756 + $0x6d0] sm:$0xff]
    %v976 = vld [vmem:[%s756 + $0x6d8] sm:$0xff]
    %v977 = vld [vmem:[%s756 + $0x6e0] sm:$0xff]
    %v978 = vld [vmem:[%s756 + $0x6e8] sm:$0xff]
    %v979 = vld [vmem:[%s756 + $0x6f0] sm:$0xff]
    %v980 = vld [vmem:[%s756 + $0x6f8] sm:$0xff]
    %v981 = vld [vmem:[%s756 + $0x700] sm:$0xff]
    %v982 = vld [vmem:[%s756 + $0x708] sm:$0xff]
    %v983 = vld [vmem:[%s756 + $0x710] sm:$0xff]
    %v984 = vld [vmem:[%s756 + $0x718] sm:$0xff]
    %v985 = vld [vmem:[%s756 + $0x720] sm:$0xff]
    %v986 = vld [vmem:[%s756 + $0x728] sm:$0xff]
    %v987 = vld [vmem:[%s756 + $0x730] sm:$0xff]
    %v988 = vld [vmem:[%s756 + $0x738] sm:$0xff]
    %v989 = vld [vmem:[%s756 + $0x740] sm:$0xff]
    %v990 = vld [vmem:[%s756 + $0x748] sm:$0xff]
    %v991 = vld [vmem:[%s756 + $0x750] sm:$0xff]
    %v992 = vld [vmem:[%s756 + $0x758] sm:$0xff]
    %v993 = vld [vmem:[%s756 + $0x760] sm:$0xff]
    %v994 = vld [vmem:[%s756 + $0x768] sm:$0xff]
    %v995 = vld [vmem:[%s756 + $0x770] sm:$0xff]
    %v996 = vld [vmem:[%s756 + $0x778] sm:$0xff]
    %v997 = vld [vmem:[%s756 + $0x780] sm:$0xff]
    %v998 = vld [vmem:[%s756 + $0x788] sm:$0xff]
    %v999 = vld [vmem:[%s756 + $0x790] sm:$0xff]
    %v1000 = vld [vmem:[%s756 + $0x798] sm:$0xff]
    %v1001 = vld [vmem:[%s756 + $0x7a0] sm:$0xff]
    %v1002 = vld [vmem:[%s756 + $0x7a8] sm:$0xff]
    %v1003 = vld [vmem:[%s756 + $0x7b0] sm:$0xff]
    %v1004 = vld [vmem:[%s756 + $0x7b8] sm:$0xff]
    %v1005 = vld [vmem:[%s756 + $0x7c0] sm:$0xff]
    %v1006 = vld [vmem:[%s756 + $0x7c8] sm:$0xff]
    %v1007 = vld [vmem:[%s756 + $0x7d0] sm:$0xff]
    %v1008 = vld [vmem:[%s756 + $0x7d8] sm:$0xff]
    %v1009 = vld [vmem:[%s756 + $0x7e0] sm:$0xff]
    %v1010 = vld [vmem:[%s756 + $0x7e8] sm:$0xff]
    %v1011 = vld [vmem:[%s756 + $0x7f0] sm:$0xff]
    %v1012 = vld [vmem:[%s756 + $0x7f8] sm:$0xff]
    %s1013 = scalar_lea.vmem [#allocation7], 8
    %v1014 = vld [vmem:[%s1013] sm:$0xff]
    %v1016 = vlaneseq
    %v1017 = vshrl.u32 %v1016, 7
    %v1018 = vsub.s32 0, %v1017
    %v1019 = vrot.slane %v1014, %v1018
    %v1020 = vlaneseq
    %v1021 = vshrl.u32 %v1020, 7
    %v1022 = vsub.s32 1, %v1021
    %v1023 = vrot.slane %v1014, %v1022
    %v1024 = vlaneseq
    %v1025 = vshrl.u32 %v1024, 7
    %v1026 = vsub.s32 2, %v1025
    %v1027 = vrot.slane %v1014, %v1026
    %v1028 = vlaneseq
    %v1029 = vshrl.u32 %v1028, 7
    %v1030 = vsub.s32 3, %v1029
    %v1031 = vrot.slane %v1014, %v1030
    %v1032 = vlaneseq
    %v1033 = vshrl.u32 %v1032, 7
    %v1034 = vsub.s32 4, %v1033
    %v1035 = vrot.slane %v1014, %v1034
    %v1036 = vlaneseq
    %v1037 = vshrl.u32 %v1036, 7
    %v1038 = vsub.s32 5, %v1037
    %v1039 = vrot.slane %v1014, %v1038
    %v1040 = vlaneseq
    %v1041 = vshrl.u32 %v1040, 7
    %v1042 = vsub.s32 6, %v1041
    %v1043 = vrot.slane %v1014, %v1042
    %v1044 = vlaneseq
    %v1045 = vshrl.u32 %v1044, 7
    %v1046 = vsub.s32 7, %v1045
    %v1047 = vrot.slane %v1014, %v1046
    %1056 = vmatprep.subr.mxu0 %v878
    %1057 = vmatpush1.msra.mxu0 %v877
    %1058 = vmatprep.subr.mxu0 %v870
    %1059 = vmatpush1.msra.mxu0 %v869
    %1060 = vmatprep.subr.mxu0 %v862
    %1061 = vmatpush1.msra.mxu0 %v861
    %1062 = vmatprep.subr.mxu0 %v854
    %1063 = vmatpush1.msra.mxu0 %v853
    %1064 = vmatprep.subr.mxu0 %v846
    %1065 = vmatpush1.msra.mxu0 %v845
    %1066 = vmatprep.subr.mxu0 %v838
    %1067 = vmatpush1.msra.mxu0 %v837
    %1068 = vmatprep.subr.mxu0 %v830
    %1069 = vmatpush1.msra.mxu0 %v829
    %1070 = vmatprep.subr.mxu0 %v822
    %1071 = vmatpush1.msra.mxu0 %v821
    %1072 = vmatprep.subr.mxu0 %v814
    %1073 = vmatpush1.msra.mxu0 %v813
    %1074 = vmatprep.subr.mxu0 %v806
    %1075 = vmatpush1.msra.mxu0 %v805
    %1076 = vmatprep.subr.mxu0 %v798
    %1077 = vmatpush1.msra.mxu0 %v797
    %1078 = vmatprep.subr.mxu0 %v790
    %1079 = vmatpush1.msra.mxu0 %v789
    %1080 = vmatprep.subr.mxu0 %v782
    %1081 = vmatpush1.msra.mxu0 %v781
    %1082 = vmatprep.subr.mxu0 %v774
    %1083 = vmatpush1.msra.mxu0 %v773
    %1084 = vmatprep.subr.mxu0 %v766
    %1085 = vmatpush1.msra.mxu0 %v765
    %1086 = vmatprep.subr.mxu0 %v758
    %1087 = vmatpush1.msra.mxu0 %v757
    %1088 = vmatprep.subr.mxu0 %v1006
    %1089 = vmatpush2.msra.mxu0 %v1005
    %1090 = vmatprep.subr.mxu0 %v998
    %1091 = vmatpush2.msra.mxu0 %v997
    %1092 = vmatprep.subr.mxu0 %v990
    %1093 = vmatpush2.msra.mxu0 %v989
    %1094 = vmatprep.subr.mxu0 %v982
    %1095 = vmatpush2.msra.mxu0 %v981
    %1096 = vmatprep.subr.mxu0 %v974
    %1097 = vmatpush2.msra.mxu0 %v973
    %1098 = vmatprep.subr.mxu0 %v966
    %1099 = vmatpush2.msra.mxu0 %v965
    %1100 = vmatprep.subr.mxu0 %v958
    %1101 = vmatpush2.msra.mxu0 %v957
    %1102 = vmatprep.subr.mxu0 %v950
    %1103 = vmatpush2.msra.mxu0 %v949
    %1104 = vmatprep.subr.mxu0 %v942
    %1105 = vmatpush2.msra.mxu0 %v941
    %1106 = vmatprep.subr.mxu0 %v934
    %1107 = vmatpush2.msra.mxu0 %v933
    %1108 = vmatprep.subr.mxu0 %v926
    %1109 = vmatpush2.msra.mxu0 %v925
    %1110 = vmatprep.subr.mxu0 %v918
    %1111 = vmatpush2.msra.mxu0 %v917
    %1112 = vmatprep.subr.mxu0 %v910
    %1113 = vmatpush2.msra.mxu0 %v909
    %1114 = vmatprep.subr.mxu0 %v902
    %1115 = vmatpush2.msra.mxu0 %v901
    %1116 = vmatprep.subr.mxu0 %v894
    %1117 = vmatpush2.msra.mxu0 %v893
    %1118 = vmatprep.subr.mxu0 %v886
    %1119 = vmatpush2.msra.mxu0 %v885
    %1120 = vmatprep.mubr.f32.mxu0 %v171
    %1121 = vmatmul.mubr.f32.gmra.mxu0 %v170
    %v1122 = vpop.f32.mrf.mxu0
    %v1123 = vadd.f32 %v1019, %v1122
    %v1124 = vpop.f32.mrf.mxu0
    %v1125 = vadd.f32 %v1023, %v1124
    %1126 = vdwg.mxu0
    %1127 = vmatprep.subr.mxu0 %v880
    %1128 = vmatpush1.msra.mxu0 %v879
    %1129 = vmatprep.subr.mxu0 %v872
    %1130 = vmatpush1.msra.mxu0 %v871
    %1131 = vmatprep.subr.mxu0 %v864
    %1132 = vmatpush1.msra.mxu0 %v863
    %1133 = vmatprep.subr.mxu0 %v856
    %1134 = vmatpush1.msra.mxu0 %v855
    %1135 = vmatprep.subr.mxu0 %v848
    %1136 = vmatpush1.msra.mxu0 %v847
    %1137 = vmatprep.subr.mxu0 %v840
    %1138 = vmatpush1.msra.mxu0 %v839
    %1139 = vmatprep.subr.mxu0 %v832
    %1140 = vmatpush1.msra.mxu0 %v831
    %1141 = vmatprep.subr.mxu0 %v824
    %1142 = vmatpush1.msra.mxu0 %v823
    %1143 = vmatprep.subr.mxu0 %v816
    %1144 = vmatpush1.msra.mxu0 %v815
    %1145 = vmatprep.subr.mxu0 %v808
    %1146 = vmatpush1.msra.mxu0 %v807
    %1147 = vmatprep.subr.mxu0 %v800
    %1148 = vmatpush1.msra.mxu0 %v799
    %1149 = vmatprep.subr.mxu0 %v792
    %1150 = vmatpush1.msra.mxu0 %v791
    %1151 = vmatprep.subr.mxu0 %v784
    %1152 = vmatpush1.msra.mxu0 %v783
    %1153 = vmatprep.subr.mxu0 %v776
    %1154 = vmatpush1.msra.mxu0 %v775
    %1155 = vmatprep.subr.mxu0 %v768
    %1156 = vmatpush1.msra.mxu0 %v767
    %1157 = vmatprep.subr.mxu0 %v760
    %1158 = vmatpush1.msra.mxu0 %v759
    %1159 = vmatprep.subr.mxu0 %v1008
    %1160 = vmatpush2.msra.mxu0 %v1007
    %1161 = vmatprep.subr.mxu0 %v1000
    %1162 = vmatpush2.msra.mxu0 %v999
    %1163 = vmatprep.subr.mxu0 %v992
    %1164 = vmatpush2.msra.mxu0 %v991
    %1165 = vmatprep.subr.mxu0 %v984
    %1166 = vmatpush2.msra.mxu0 %v983
    %1167 = vmatprep.subr.mxu0 %v976
    %1168 = vmatpush2.msra.mxu0 %v975
    %1169 = vmatprep.subr.mxu0 %v968
    %1170 = vmatpush2.msra.mxu0 %v967
    %1171 = vmatprep.subr.mxu0 %v960
    %1172 = vmatpush2.msra.mxu0 %v959
    %1173 = vmatprep.subr.mxu0 %v952
    %1174 = vmatpush2.msra.mxu0 %v951
    %1175 = vmatprep.subr.mxu0 %v944
    %1176 = vmatpush2.msra.mxu0 %v943
    %1177 = vmatprep.subr.mxu0 %v936
    %1178 = vmatpush2.msra.mxu0 %v935
    %1179 = vmatprep.subr.mxu0 %v928
    %1180 = vmatpush2.msra.mxu0 %v927
    %1181 = vmatprep.subr.mxu0 %v920
    %1182 = vmatpush2.msra.mxu0 %v919
    %1183 = vmatprep.subr.mxu0 %v912
    %1184 = vmatpush2.msra.mxu0 %v911
    %1185 = vmatprep.subr.mxu0 %v904
    %1186 = vmatpush2.msra.mxu0 %v903
    %1187 = vmatprep.subr.mxu0 %v896
    %1188 = vmatpush2.msra.mxu0 %v895
    %1189 = vmatprep.subr.mxu0 %v888
    %1190 = vmatpush2.msra.mxu0 %v887
    %1191 = vmatprep.mubr.f32.mxu0 %v171
    %1192 = vmatmul.mubr.f32.gmra.mxu0 %v170
    %v1193 = vpop.f32.mrf.mxu0
    %v1194 = vadd.f32 %v1027, %v1193
    %v1195 = vpop.f32.mrf.mxu0
    %v1196 = vadd.f32 %v1031, %v1195
    %1197 = vdwg.mxu0
    %1198 = vmatprep.subr.mxu0 %v882
    %1199 = vmatpush1.msra.mxu0 %v881
    %1200 = vmatprep.subr.mxu0 %v874
    %1201 = vmatpush1.msra.mxu0 %v873
    %1202 = vmatprep.subr.mxu0 %v866
    %1203 = vmatpush1.msra.mxu0 %v865
    %1204 = vmatprep.subr.mxu0 %v858
    %1205 = vmatpush1.msra.mxu0 %v857
    %1206 = vmatprep.subr.mxu0 %v850
    %1207 = vmatpush1.msra.mxu0 %v849
    %1208 = vmatprep.subr.mxu0 %v842
    %1209 = vmatpush1.msra.mxu0 %v841
    %1210 = vmatprep.subr.mxu0 %v834
    %1211 = vmatpush1.msra.mxu0 %v833
    %1212 = vmatprep.subr.mxu0 %v826
    %1213 = vmatpush1.msra.mxu0 %v825
    %1214 = vmatprep.subr.mxu0 %v818
    %1215 = vmatpush1.msra.mxu0 %v817
    %1216 = vmatprep.subr.mxu0 %v810
    %1217 = vmatpush1.msra.mxu0 %v809
    %1218 = vmatprep.subr.mxu0 %v802
    %1219 = vmatpush1.msra.mxu0 %v801
    %1220 = vmatprep.subr.mxu0 %v794
    %1221 = vmatpush1.msra.mxu0 %v793
    %1222 = vmatprep.subr.mxu0 %v786
    %1223 = vmatpush1.msra.mxu0 %v785
    %1224 = vmatprep.subr.mxu0 %v778
    %1225 = vmatpush1.msra.mxu0 %v777
    %1226 = vmatprep.subr.mxu0 %v770
    %1227 = vmatpush1.msra.mxu0 %v769
    %1228 = vmatprep.subr.mxu0 %v762
    %1229 = vmatpush1.msra.mxu0 %v761
    %1230 = vmatprep.subr.mxu0 %v1010
    %1231 = vmatpush2.msra.mxu0 %v1009
    %1232 = vmatprep.subr.mxu0 %v1002
    %1233 = vmatpush2.msra.mxu0 %v1001
    %1234 = vmatprep.subr.mxu0 %v994
    %1235 = vmatpush2.msra.mxu0 %v993
    %1236 = vmatprep.subr.mxu0 %v986
    %1237 = vmatpush2.msra.mxu0 %v985
    %1238 = vmatprep.subr.mxu0 %v978
    %1239 = vmatpush2.msra.mxu0 %v977
    %1240 = vmatprep.subr.mxu0 %v970
    %1241 = vmatpush2.msra.mxu0 %v969
    %1242 = vmatprep.subr.mxu0 %v962
    %1243 = vmatpush2.msra.mxu0 %v961
    %1244 = vmatprep.subr.mxu0 %v954
    %1245 = vmatpush2.msra.mxu0 %v953
    %1246 = vmatprep.subr.mxu0 %v946
    %1247 = vmatpush2.msra.mxu0 %v945
    %1248 = vmatprep.subr.mxu0 %v938
    %1249 = vmatpush2.msra.mxu0 %v937
    %1250 = vmatprep.subr.mxu0 %v930
    %1251 = vmatpush2.msra.mxu0 %v929
    %1252 = vmatprep.subr.mxu0 %v922
    %1253 = vmatpush2.msra.mxu0 %v921
    %1254 = vmatprep.subr.mxu0 %v914
    %1255 = vmatpush2.msra.mxu0 %v913
    %1256 = vmatprep.subr.mxu0 %v906
    %1257 = vmatpush2.msra.mxu0 %v905
    %1258 = vmatprep.subr.mxu0 %v898
    %1259 = vmatpush2.msra.mxu0 %v897
    %1260 = vmatprep.subr.mxu0 %v890
    %1261 = vmatpush2.msra.mxu0 %v889
    %1262 = vmatprep.mubr.f32.mxu0 %v171
    %1263 = vmatmul.mubr.f32.gmra.mxu0 %v170
    %v1264 = vpop.f32.mrf.mxu0
    %v1265 = vadd.f32 %v1035, %v1264
    %v1266 = vpop.f32.mrf.mxu0
    %v1267 = vadd.f32 %v1039, %v1266
    %1268 = vdwg.mxu0
    %1269 = vmatprep.subr.mxu0 %v884
    %1270 = vmatpush1.msra.mxu0 %v883
    %1271 = vmatprep.subr.mxu0 %v876
    %1272 = vmatpush1.msra.mxu0 %v875
    %1273 = vmatprep.subr.mxu0 %v868
    %1274 = vmatpush1.msra.mxu0 %v867
    %1275 = vmatprep.subr.mxu0 %v860
    %1276 = vmatpush1.msra.mxu0 %v859
    %1277 = vmatprep.subr.mxu0 %v852
    %1278 = vmatpush1.msra.mxu0 %v851
    %1279 = vmatprep.subr.mxu0 %v844
    %1280 = vmatpush1.msra.mxu0 %v843
    %1281 = vmatprep.subr.mxu0 %v836
    %1282 = vmatpush1.msra.mxu0 %v835
    %1283 = vmatprep.subr.mxu0 %v828
    %1284 = vmatpush1.msra.mxu0 %v827
    %1285 = vmatprep.subr.mxu0 %v820
    %1286 = vmatpush1.msra.mxu0 %v819
    %1287 = vmatprep.subr.mxu0 %v812
    %1288 = vmatpush1.msra.mxu0 %v811
    %1289 = vmatprep.subr.mxu0 %v804
    %1290 = vmatpush1.msra.mxu0 %v803
    %1291 = vmatprep.subr.mxu0 %v796
    %1292 = vmatpush1.msra.mxu0 %v795
    %1293 = vmatprep.subr.mxu0 %v788
    %1294 = vmatpush1.msra.mxu0 %v787
    %1295 = vmatprep.subr.mxu0 %v780
    %1296 = vmatpush1.msra.mxu0 %v779
    %1297 = vmatprep.subr.mxu0 %v772
    %1298 = vmatpush1.msra.mxu0 %v771
    %1299 = vmatprep.subr.mxu0 %v764
    %1300 = vmatpush1.msra.mxu0 %v763
    %1301 = vmatprep.subr.mxu0 %v1012
    %1302 = vmatpush2.msra.mxu0 %v1011
    %1303 = vmatprep.subr.mxu0 %v1004
    %1304 = vmatpush2.msra.mxu0 %v1003
    %1305 = vmatprep.subr.mxu0 %v996
    %1306 = vmatpush2.msra.mxu0 %v995
    %1307 = vmatprep.subr.mxu0 %v988
    %1308 = vmatpush2.msra.mxu0 %v987
    %1309 = vmatprep.subr.mxu0 %v980
    %1310 = vmatpush2.msra.mxu0 %v979
    %1311 = vmatprep.subr.mxu0 %v972
    %1312 = vmatpush2.msra.mxu0 %v971
    %1313 = vmatprep.subr.mxu0 %v964
    %1314 = vmatpush2.msra.mxu0 %v963
    %1315 = vmatprep.subr.mxu0 %v956
    %1316 = vmatpush2.msra.mxu0 %v955
    %1317 = vmatprep.subr.mxu0 %v948
    %1318 = vmatpush2.msra.mxu0 %v947
    %1319 = vmatprep.subr.mxu0 %v940
    %1320 = vmatpush2.msra.mxu0 %v939
    %1321 = vmatprep.subr.mxu0 %v932
    %1322 = vmatpush2.msra.mxu0 %v931
    %1323 = vmatprep.subr.mxu0 %v924
    %1324 = vmatpush2.msra.mxu0 %v923
    %1325 = vmatprep.subr.mxu0 %v916
    %1326 = vmatpush2.msra.mxu0 %v915
    %1327 = vmatprep.subr.mxu0 %v908
    %1328 = vmatpush2.msra.mxu0 %v907
    %1329 = vmatprep.subr.mxu0 %v900
    %1330 = vmatpush2.msra.mxu0 %v899
    %1331 = vmatprep.subr.mxu0 %v892
    %1332 = vmatpush2.msra.mxu0 %v891
    %1333 = vmatprep.mubr.f32.mxu0 %v171
    %1334 = vmatmul.mubr.f32.gmra.mxu0 %v170
    %v1335 = vpop.f32.mrf.mxu0
    %v1336 = vadd.f32 %v1043, %v1335
    %v1337 = vpop.f32.mrf.mxu0
    %v1338 = vadd.f32 %v1047, %v1337
    %1339 = vdwg.mxu0
    %s1340 = scalar_lea.vmem [#allocation5], 4096
    %v1341 = vld [vmem:[%s1340] sm:$0xff]
    %v1342 = vld [vmem:[%s1340 + $0x8] sm:$0xff]
    %v1343 = vld [vmem:[%s1340 + $0x10] sm:$0xff]
    %v1344 = vld [vmem:[%s1340 + $0x18] sm:$0xff]
    %v1345 = vld [vmem:[%s1340 + $0x20] sm:$0xff]
    %v1346 = vld [vmem:[%s1340 + $0x28] sm:$0xff]
    %v1347 = vld [vmem:[%s1340 + $0x30] sm:$0xff]
    %v1348 = vld [vmem:[%s1340 + $0x38] sm:$0xff]
    %v1349 = vld [vmem:[%s1340 + $0x40] sm:$0xff]
    %v1350 = vld [vmem:[%s1340 + $0x48] sm:$0xff]
    %v1351 = vld [vmem:[%s1340 + $0x50] sm:$0xff]
    %v1352 = vld [vmem:[%s1340 + $0x58] sm:$0xff]
    %v1353 = vld [vmem:[%s1340 + $0x60] sm:$0xff]
    %v1354 = vld [vmem:[%s1340 + $0x68] sm:$0xff]
    %v1355 = vld [vmem:[%s1340 + $0x70] sm:$0xff]
    %v1356 = vld [vmem:[%s1340 + $0x78] sm:$0xff]
    %v1357 = vld [vmem:[%s1340 + $0x80] sm:$0xff]
    %v1358 = vld [vmem:[%s1340 + $0x88] sm:$0xff]
    %v1359 = vld [vmem:[%s1340 + $0x90] sm:$0xff]
    %v1360 = vld [vmem:[%s1340 + $0x98] sm:$0xff]
    %v1361 = vld [vmem:[%s1340 + $0xa0] sm:$0xff]
    %v1362 = vld [vmem:[%s1340 + $0xa8] sm:$0xff]
    %v1363 = vld [vmem:[%s1340 + $0xb0] sm:$0xff]
    %v1364 = vld [vmem:[%s1340 + $0xb8] sm:$0xff]
    %v1365 = vld [vmem:[%s1340 + $0xc0] sm:$0xff]
    %v1366 = vld [vmem:[%s1340 + $0xc8] sm:$0xff]
    %v1367 = vld [vmem:[%s1340 + $0xd0] sm:$0xff]
    %v1368 = vld [vmem:[%s1340 + $0xd8] sm:$0xff]
    %v1369 = vld [vmem:[%s1340 + $0xe0] sm:$0xff]
    %v1370 = vld [vmem:[%s1340 + $0xe8] sm:$0xff]
    %v1371 = vld [vmem:[%s1340 + $0xf0] sm:$0xff]
    %v1372 = vld [vmem:[%s1340 + $0xf8] sm:$0xff]
    %v1373 = vld [vmem:[%s1340 + $0x100] sm:$0xff]
    %v1374 = vld [vmem:[%s1340 + $0x108] sm:$0xff]
    %v1375 = vld [vmem:[%s1340 + $0x110] sm:$0xff]
    %v1376 = vld [vmem:[%s1340 + $0x118] sm:$0xff]
    %v1377 = vld [vmem:[%s1340 + $0x120] sm:$0xff]
    %v1378 = vld [vmem:[%s1340 + $0x128] sm:$0xff]
    %v1379 = vld [vmem:[%s1340 + $0x130] sm:$0xff]
    %v1380 = vld [vmem:[%s1340 + $0x138] sm:$0xff]
    %v1381 = vld [vmem:[%s1340 + $0x140] sm:$0xff]
    %v1382 = vld [vmem:[%s1340 + $0x148] sm:$0xff]
    %v1383 = vld [vmem:[%s1340 + $0x150] sm:$0xff]
    %v1384 = vld [vmem:[%s1340 + $0x158] sm:$0xff]
    %v1385 = vld [vmem:[%s1340 + $0x160] sm:$0xff]
    %v1386 = vld [vmem:[%s1340 + $0x168] sm:$0xff]
    %v1387 = vld [vmem:[%s1340 + $0x170] sm:$0xff]
    %v1388 = vld [vmem:[%s1340 + $0x178] sm:$0xff]
    %v1389 = vld [vmem:[%s1340 + $0x180] sm:$0xff]
    %v1390 = vld [vmem:[%s1340 + $0x188] sm:$0xff]
    %v1391 = vld [vmem:[%s1340 + $0x190] sm:$0xff]
    %v1392 = vld [vmem:[%s1340 + $0x198] sm:$0xff]
    %v1393 = vld [vmem:[%s1340 + $0x1a0] sm:$0xff]
    %v1394 = vld [vmem:[%s1340 + $0x1a8] sm:$0xff]
    %v1395 = vld [vmem:[%s1340 + $0x1b0] sm:$0xff]
    %v1396 = vld [vmem:[%s1340 + $0x1b8] sm:$0xff]
    %v1397 = vld [vmem:[%s1340 + $0x1c0] sm:$0xff]
    %v1398 = vld [vmem:[%s1340 + $0x1c8] sm:$0xff]
    %v1399 = vld [vmem:[%s1340 + $0x1d0] sm:$0xff]
    %v1400 = vld [vmem:[%s1340 + $0x1d8] sm:$0xff]
    %v1401 = vld [vmem:[%s1340 + $0x1e0] sm:$0xff]
    %v1402 = vld [vmem:[%s1340 + $0x1e8] sm:$0xff]
    %v1403 = vld [vmem:[%s1340 + $0x1f0] sm:$0xff]
    %v1404 = vld [vmem:[%s1340 + $0x1f8] sm:$0xff]
    %v1405 = vld [vmem:[%s1340 + $0x200] sm:$0xff]
    %v1406 = vld [vmem:[%s1340 + $0x208] sm:$0xff]
    %v1407 = vld [vmem:[%s1340 + $0x210] sm:$0xff]
    %v1408 = vld [vmem:[%s1340 + $0x218] sm:$0xff]
    %v1409 = vld [vmem:[%s1340 + $0x220] sm:$0xff]
    %v1410 = vld [vmem:[%s1340 + $0x228] sm:$0xff]
    %v1411 = vld [vmem:[%s1340 + $0x230] sm:$0xff]
    %v1412 = vld [vmem:[%s1340 + $0x238] sm:$0xff]
    %v1413 = vld [vmem:[%s1340 + $0x240] sm:$0xff]
    %v1414 = vld [vmem:[%s1340 + $0x248] sm:$0xff]
    %v1415 = vld [vmem:[%s1340 + $0x250] sm:$0xff]
    %v1416 = vld [vmem:[%s1340 + $0x258] sm:$0xff]
    %v1417 = vld [vmem:[%s1340 + $0x260] sm:$0xff]
    %v1418 = vld [vmem:[%s1340 + $0x268] sm:$0xff]
    %v1419 = vld [vmem:[%s1340 + $0x270] sm:$0xff]
    %v1420 = vld [vmem:[%s1340 + $0x278] sm:$0xff]
    %v1421 = vld [vmem:[%s1340 + $0x280] sm:$0xff]
    %v1422 = vld [vmem:[%s1340 + $0x288] sm:$0xff]
    %v1423 = vld [vmem:[%s1340 + $0x290] sm:$0xff]
    %v1424 = vld [vmem:[%s1340 + $0x298] sm:$0xff]
    %v1425 = vld [vmem:[%s1340 + $0x2a0] sm:$0xff]
    %v1426 = vld [vmem:[%s1340 + $0x2a8] sm:$0xff]
    %v1427 = vld [vmem:[%s1340 + $0x2b0] sm:$0xff]
    %v1428 = vld [vmem:[%s1340 + $0x2b8] sm:$0xff]
    %v1429 = vld [vmem:[%s1340 + $0x2c0] sm:$0xff]
    %v1430 = vld [vmem:[%s1340 + $0x2c8] sm:$0xff]
    %v1431 = vld [vmem:[%s1340 + $0x2d0] sm:$0xff]
    %v1432 = vld [vmem:[%s1340 + $0x2d8] sm:$0xff]
    %v1433 = vld [vmem:[%s1340 + $0x2e0] sm:$0xff]
    %v1434 = vld [vmem:[%s1340 + $0x2e8] sm:$0xff]
    %v1435 = vld [vmem:[%s1340 + $0x2f0] sm:$0xff]
    %v1436 = vld [vmem:[%s1340 + $0x2f8] sm:$0xff]
    %v1437 = vld [vmem:[%s1340 + $0x300] sm:$0xff]
    %v1438 = vld [vmem:[%s1340 + $0x308] sm:$0xff]
    %v1439 = vld [vmem:[%s1340 + $0x310] sm:$0xff]
    %v1440 = vld [vmem:[%s1340 + $0x318] sm:$0xff]
    %v1441 = vld [vmem:[%s1340 + $0x320] sm:$0xff]
    %v1442 = vld [vmem:[%s1340 + $0x328] sm:$0xff]
    %v1443 = vld [vmem:[%s1340 + $0x330] sm:$0xff]
    %v1444 = vld [vmem:[%s1340 + $0x338] sm:$0xff]
    %v1445 = vld [vmem:[%s1340 + $0x340] sm:$0xff]
    %v1446 = vld [vmem:[%s1340 + $0x348] sm:$0xff]
    %v1447 = vld [vmem:[%s1340 + $0x350] sm:$0xff]
    %v1448 = vld [vmem:[%s1340 + $0x358] sm:$0xff]
    %v1449 = vld [vmem:[%s1340 + $0x360] sm:$0xff]
    %v1450 = vld [vmem:[%s1340 + $0x368] sm:$0xff]
    %v1451 = vld [vmem:[%s1340 + $0x370] sm:$0xff]
    %v1452 = vld [vmem:[%s1340 + $0x378] sm:$0xff]
    %v1453 = vld [vmem:[%s1340 + $0x380] sm:$0xff]
    %v1454 = vld [vmem:[%s1340 + $0x388] sm:$0xff]
    %v1455 = vld [vmem:[%s1340 + $0x390] sm:$0xff]
    %v1456 = vld [vmem:[%s1340 + $0x398] sm:$0xff]
    %v1457 = vld [vmem:[%s1340 + $0x3a0] sm:$0xff]
    %v1458 = vld [vmem:[%s1340 + $0x3a8] sm:$0xff]
    %v1459 = vld [vmem:[%s1340 + $0x3b0] sm:$0xff]
    %v1460 = vld [vmem:[%s1340 + $0x3b8] sm:$0xff]
    %v1461 = vld [vmem:[%s1340 + $0x3c0] sm:$0xff]
    %v1462 = vld [vmem:[%s1340 + $0x3c8] sm:$0xff]
    %v1463 = vld [vmem:[%s1340 + $0x3d0] sm:$0xff]
    %v1464 = vld [vmem:[%s1340 + $0x3d8] sm:$0xff]
    %v1465 = vld [vmem:[%s1340 + $0x3e0] sm:$0xff]
    %v1466 = vld [vmem:[%s1340 + $0x3e8] sm:$0xff]
    %v1467 = vld [vmem:[%s1340 + $0x3f0] sm:$0xff]
    %v1468 = vld [vmem:[%s1340 + $0x3f8] sm:$0xff]
    %v1469 = vld [vmem:[%s1340 + $0x400] sm:$0xff]
    %v1470 = vld [vmem:[%s1340 + $0x408] sm:$0xff]
    %v1471 = vld [vmem:[%s1340 + $0x410] sm:$0xff]
    %v1472 = vld [vmem:[%s1340 + $0x418] sm:$0xff]
    %v1473 = vld [vmem:[%s1340 + $0x420] sm:$0xff]
    %v1474 = vld [vmem:[%s1340 + $0x428] sm:$0xff]
    %v1475 = vld [vmem:[%s1340 + $0x430] sm:$0xff]
    %v1476 = vld [vmem:[%s1340 + $0x438] sm:$0xff]
    %v1477 = vld [vmem:[%s1340 + $0x440] sm:$0xff]
    %v1478 = vld [vmem:[%s1340 + $0x448] sm:$0xff]
    %v1479 = vld [vmem:[%s1340 + $0x450] sm:$0xff]
    %v1480 = vld [vmem:[%s1340 + $0x458] sm:$0xff]
    %v1481 = vld [vmem:[%s1340 + $0x460] sm:$0xff]
    %v1482 = vld [vmem:[%s1340 + $0x468] sm:$0xff]
    %v1483 = vld [vmem:[%s1340 + $0x470] sm:$0xff]
    %v1484 = vld [vmem:[%s1340 + $0x478] sm:$0xff]
    %v1485 = vld [vmem:[%s1340 + $0x480] sm:$0xff]
    %v1486 = vld [vmem:[%s1340 + $0x488] sm:$0xff]
    %v1487 = vld [vmem:[%s1340 + $0x490] sm:$0xff]
    %v1488 = vld [vmem:[%s1340 + $0x498] sm:$0xff]
    %v1489 = vld [vmem:[%s1340 + $0x4a0] sm:$0xff]
    %v1490 = vld [vmem:[%s1340 + $0x4a8] sm:$0xff]
    %v1491 = vld [vmem:[%s1340 + $0x4b0] sm:$0xff]
    %v1492 = vld [vmem:[%s1340 + $0x4b8] sm:$0xff]
    %v1493 = vld [vmem:[%s1340 + $0x4c0] sm:$0xff]
    %v1494 = vld [vmem:[%s1340 + $0x4c8] sm:$0xff]
    %v1495 = vld [vmem:[%s1340 + $0x4d0] sm:$0xff]
    %v1496 = vld [vmem:[%s1340 + $0x4d8] sm:$0xff]
    %v1497 = vld [vmem:[%s1340 + $0x4e0] sm:$0xff]
    %v1498 = vld [vmem:[%s1340 + $0x4e8] sm:$0xff]
    %v1499 = vld [vmem:[%s1340 + $0x4f0] sm:$0xff]
    %v1500 = vld [vmem:[%s1340 + $0x4f8] sm:$0xff]
    %v1501 = vld [vmem:[%s1340 + $0x500] sm:$0xff]
    %v1502 = vld [vmem:[%s1340 + $0x508] sm:$0xff]
    %v1503 = vld [vmem:[%s1340 + $0x510] sm:$0xff]
    %v1504 = vld [vmem:[%s1340 + $0x518] sm:$0xff]
    %v1505 = vld [vmem:[%s1340 + $0x520] sm:$0xff]
    %v1506 = vld [vmem:[%s1340 + $0x528] sm:$0xff]
    %v1507 = vld [vmem:[%s1340 + $0x530] sm:$0xff]
    %v1508 = vld [vmem:[%s1340 + $0x538] sm:$0xff]
    %v1509 = vld [vmem:[%s1340 + $0x540] sm:$0xff]
    %v1510 = vld [vmem:[%s1340 + $0x548] sm:$0xff]
    %v1511 = vld [vmem:[%s1340 + $0x550] sm:$0xff]
    %v1512 = vld [vmem:[%s1340 + $0x558] sm:$0xff]
    %v1513 = vld [vmem:[%s1340 + $0x560] sm:$0xff]
    %v1514 = vld [vmem:[%s1340 + $0x568] sm:$0xff]
    %v1515 = vld [vmem:[%s1340 + $0x570] sm:$0xff]
    %v1516 = vld [vmem:[%s1340 + $0x578] sm:$0xff]
    %v1517 = vld [vmem:[%s1340 + $0x580] sm:$0xff]
    %v1518 = vld [vmem:[%s1340 + $0x588] sm:$0xff]
    %v1519 = vld [vmem:[%s1340 + $0x590] sm:$0xff]
    %v1520 = vld [vmem:[%s1340 + $0x598] sm:$0xff]
    %v1521 = vld [vmem:[%s1340 + $0x5a0] sm:$0xff]
    %v1522 = vld [vmem:[%s1340 + $0x5a8] sm:$0xff]
    %v1523 = vld [vmem:[%s1340 + $0x5b0] sm:$0xff]
    %v1524 = vld [vmem:[%s1340 + $0x5b8] sm:$0xff]
    %v1525 = vld [vmem:[%s1340 + $0x5c0] sm:$0xff]
    %v1526 = vld [vmem:[%s1340 + $0x5c8] sm:$0xff]
    %v1527 = vld [vmem:[%s1340 + $0x5d0] sm:$0xff]
    %v1528 = vld [vmem:[%s1340 + $0x5d8] sm:$0xff]
    %v1529 = vld [vmem:[%s1340 + $0x5e0] sm:$0xff]
    %v1530 = vld [vmem:[%s1340 + $0x5e8] sm:$0xff]
    %v1531 = vld [vmem:[%s1340 + $0x5f0] sm:$0xff]
    %v1532 = vld [vmem:[%s1340 + $0x5f8] sm:$0xff]
    %v1533 = vld [vmem:[%s1340 + $0x600] sm:$0xff]
    %v1534 = vld [vmem:[%s1340 + $0x608] sm:$0xff]
    %v1535 = vld [vmem:[%s1340 + $0x610] sm:$0xff]
    %v1536 = vld [vmem:[%s1340 + $0x618] sm:$0xff]
    %v1537 = vld [vmem:[%s1340 + $0x620] sm:$0xff]
    %v1538 = vld [vmem:[%s1340 + $0x628] sm:$0xff]
    %v1539 = vld [vmem:[%s1340 + $0x630] sm:$0xff]
    %v1540 = vld [vmem:[%s1340 + $0x638] sm:$0xff]
    %v1541 = vld [vmem:[%s1340 + $0x640] sm:$0xff]
    %v1542 = vld [vmem:[%s1340 + $0x648] sm:$0xff]
    %v1543 = vld [vmem:[%s1340 + $0x650] sm:$0xff]
    %v1544 = vld [vmem:[%s1340 + $0x658] sm:$0xff]
    %v1545 = vld [vmem:[%s1340 + $0x660] sm:$0xff]
    %v1546 = vld [vmem:[%s1340 + $0x668] sm:$0xff]
    %v1547 = vld [vmem:[%s1340 + $0x670] sm:$0xff]
    %v1548 = vld [vmem:[%s1340 + $0x678] sm:$0xff]
    %v1549 = vld [vmem:[%s1340 + $0x680] sm:$0xff]
    %v1550 = vld [vmem:[%s1340 + $0x688] sm:$0xff]
    %v1551 = vld [vmem:[%s1340 + $0x690] sm:$0xff]
    %v1552 = vld [vmem:[%s1340 + $0x698] sm:$0xff]
    %v1553 = vld [vmem:[%s1340 + $0x6a0] sm:$0xff]
    %v1554 = vld [vmem:[%s1340 + $0x6a8] sm:$0xff]
    %v1555 = vld [vmem:[%s1340 + $0x6b0] sm:$0xff]
    %v1556 = vld [vmem:[%s1340 + $0x6b8] sm:$0xff]
    %v1557 = vld [vmem:[%s1340 + $0x6c0] sm:$0xff]
    %v1558 = vld [vmem:[%s1340 + $0x6c8] sm:$0xff]
    %v1559 = vld [vmem:[%s1340 + $0x6d0] sm:$0xff]
    %v1560 = vld [vmem:[%s1340 + $0x6d8] sm:$0xff]
    %v1561 = vld [vmem:[%s1340 + $0x6e0] sm:$0xff]
    %v1562 = vld [vmem:[%s1340 + $0x6e8] sm:$0xff]
    %v1563 = vld [vmem:[%s1340 + $0x6f0] sm:$0xff]
    %v1564 = vld [vmem:[%s1340 + $0x6f8] sm:$0xff]
    %v1565 = vld [vmem:[%s1340 + $0x700] sm:$0xff]
    %v1566 = vld [vmem:[%s1340 + $0x708] sm:$0xff]
    %v1567 = vld [vmem:[%s1340 + $0x710] sm:$0xff]
    %v1568 = vld [vmem:[%s1340 + $0x718] sm:$0xff]
    %v1569 = vld [vmem:[%s1340 + $0x720] sm:$0xff]
    %v1570 = vld [vmem:[%s1340 + $0x728] sm:$0xff]
    %v1571 = vld [vmem:[%s1340 + $0x730] sm:$0xff]
    %v1572 = vld [vmem:[%s1340 + $0x738] sm:$0xff]
    %v1573 = vld [vmem:[%s1340 + $0x740] sm:$0xff]
    %v1574 = vld [vmem:[%s1340 + $0x748] sm:$0xff]
    %v1575 = vld [vmem:[%s1340 + $0x750] sm:$0xff]
    %v1576 = vld [vmem:[%s1340 + $0x758] sm:$0xff]
    %v1577 = vld [vmem:[%s1340 + $0x760] sm:$0xff]
    %v1578 = vld [vmem:[%s1340 + $0x768] sm:$0xff]
    %v1579 = vld [vmem:[%s1340 + $0x770] sm:$0xff]
    %v1580 = vld [vmem:[%s1340 + $0x778] sm:$0xff]
    %v1581 = vld [vmem:[%s1340 + $0x780] sm:$0xff]
    %v1582 = vld [vmem:[%s1340 + $0x788] sm:$0xff]
    %v1583 = vld [vmem:[%s1340 + $0x790] sm:$0xff]
    %v1584 = vld [vmem:[%s1340 + $0x798] sm:$0xff]
    %v1585 = vld [vmem:[%s1340 + $0x7a0] sm:$0xff]
    %v1586 = vld [vmem:[%s1340 + $0x7a8] sm:$0xff]
    %v1587 = vld [vmem:[%s1340 + $0x7b0] sm:$0xff]
    %v1588 = vld [vmem:[%s1340 + $0x7b8] sm:$0xff]
    %v1589 = vld [vmem:[%s1340 + $0x7c0] sm:$0xff]
    %v1590 = vld [vmem:[%s1340 + $0x7c8] sm:$0xff]
    %v1591 = vld [vmem:[%s1340 + $0x7d0] sm:$0xff]
    %v1592 = vld [vmem:[%s1340 + $0x7d8] sm:$0xff]
    %v1593 = vld [vmem:[%s1340 + $0x7e0] sm:$0xff]
    %v1594 = vld [vmem:[%s1340 + $0x7e8] sm:$0xff]
    %v1595 = vld [vmem:[%s1340 + $0x7f0] sm:$0xff]
    %v1596 = vld [vmem:[%s1340 + $0x7f8] sm:$0xff]
    %s1597 = scalar_lea.vmem [#allocation7], 16
    %v1598 = vld [vmem:[%s1597] sm:$0xff]
    %v1600 = vlaneseq
    %v1601 = vshrl.u32 %v1600, 7
    %v1602 = vsub.s32 0, %v1601
    %v1603 = vrot.slane %v1598, %v1602
    %v1604 = vlaneseq
    %v1605 = vshrl.u32 %v1604, 7
    %v1606 = vsub.s32 1, %v1605
    %v1607 = vrot.slane %v1598, %v1606
    %v1608 = vlaneseq
    %v1609 = vshrl.u32 %v1608, 7
    %v1610 = vsub.s32 2, %v1609
    %v1611 = vrot.slane %v1598, %v1610
    %v1612 = vlaneseq
    %v1613 = vshrl.u32 %v1612, 7
    %v1614 = vsub.s32 3, %v1613
    %v1615 = vrot.slane %v1598, %v1614
    %v1616 = vlaneseq
    %v1617 = vshrl.u32 %v1616, 7
    %v1618 = vsub.s32 4, %v1617
    %v1619 = vrot.slane %v1598, %v1618
    %v1620 = vlaneseq
    %v1621 = vshrl.u32 %v1620, 7
    %v1622 = vsub.s32 5, %v1621
    %v1623 = vrot.slane %v1598, %v1622
    %v1624 = vlaneseq
    %v1625 = vshrl.u32 %v1624, 7
    %v1626 = vsub.s32 6, %v1625
    %v1627 = vrot.slane %v1598, %v1626
    %v1628 = vlaneseq
    %v1629 = vshrl.u32 %v1628, 7
    %v1630 = vsub.s32 7, %v1629
    %v1631 = vrot.slane %v1598, %v1630
    %1640 = vmatprep.subr.mxu0 %v1462
    %1641 = vmatpush1.msra.mxu0 %v1461
    %1642 = vmatprep.subr.mxu0 %v1454
    %1643 = vmatpush1.msra.mxu0 %v1453
    %1644 = vmatprep.subr.mxu0 %v1446
    %1645 = vmatpush1.msra.mxu0 %v1445
    %1646 = vmatprep.subr.mxu0 %v1438
    %1647 = vmatpush1.msra.mxu0 %v1437
    %1648 = vmatprep.subr.mxu0 %v1430
    %1649 = vmatpush1.msra.mxu0 %v1429
    %1650 = vmatprep.subr.mxu0 %v1422
    %1651 = vmatpush1.msra.mxu0 %v1421
    %1652 = vmatprep.subr.mxu0 %v1414
    %1653 = vmatpush1.msra.mxu0 %v1413
    %1654 = vmatprep.subr.mxu0 %v1406
    %1655 = vmatpush1.msra.mxu0 %v1405
    %1656 = vmatprep.subr.mxu0 %v1398
    %1657 = vmatpush1.msra.mxu0 %v1397
    %1658 = vmatprep.subr.mxu0 %v1390
    %1659 = vmatpush1.msra.mxu0 %v1389
    %1660 = vmatprep.subr.mxu0 %v1382
    %1661 = vmatpush1.msra.mxu0 %v1381
    %1662 = vmatprep.subr.mxu0 %v1374
    %1663 = vmatpush1.msra.mxu0 %v1373
    %1664 = vmatprep.subr.mxu0 %v1366
    %1665 = vmatpush1.msra.mxu0 %v1365
    %1666 = vmatprep.subr.mxu0 %v1358
    %1667 = vmatpush1.msra.mxu0 %v1357
    %1668 = vmatprep.subr.mxu0 %v1350
    %1669 = vmatpush1.msra.mxu0 %v1349
    %1670 = vmatprep.subr.mxu0 %v1342
    %1671 = vmatpush1.msra.mxu0 %v1341
    %1672 = vmatprep.subr.mxu0 %v1590
    %1673 = vmatpush2.msra.mxu0 %v1589
    %1674 = vmatprep.subr.mxu0 %v1582
    %1675 = vmatpush2.msra.mxu0 %v1581
    %1676 = vmatprep.subr.mxu0 %v1574
    %1677 = vmatpush2.msra.mxu0 %v1573
    %1678 = vmatprep.subr.mxu0 %v1566
    %1679 = vmatpush2.msra.mxu0 %v1565
    %1680 = vmatprep.subr.mxu0 %v1558
    %1681 = vmatpush2.msra.mxu0 %v1557
    %1682 = vmatprep.subr.mxu0 %v1550
    %1683 = vmatpush2.msra.mxu0 %v1549
    %1684 = vmatprep.subr.mxu0 %v1542
    %1685 = vmatpush2.msra.mxu0 %v1541
    %1686 = vmatprep.subr.mxu0 %v1534
    %1687 = vmatpush2.msra.mxu0 %v1533
    %1688 = vmatprep.subr.mxu0 %v1526
    %1689 = vmatpush2.msra.mxu0 %v1525
    %1690 = vmatprep.subr.mxu0 %v1518
    %1691 = vmatpush2.msra.mxu0 %v1517
    %1692 = vmatprep.subr.mxu0 %v1510
    %1693 = vmatpush2.msra.mxu0 %v1509
    %1694 = vmatprep.subr.mxu0 %v1502
    %1695 = vmatpush2.msra.mxu0 %v1501
    %1696 = vmatprep.subr.mxu0 %v1494
    %1697 = vmatpush2.msra.mxu0 %v1493
    %1698 = vmatprep.subr.mxu0 %v1486
    %1699 = vmatpush2.msra.mxu0 %v1485
    %1700 = vmatprep.subr.mxu0 %v1478
    %1701 = vmatpush2.msra.mxu0 %v1477
    %1702 = vmatprep.subr.mxu0 %v1470
    %1703 = vmatpush2.msra.mxu0 %v1469
    %1704 = vmatprep.mubr.f32.mxu0 %v173
    %1705 = vmatmul.mubr.f32.gmra.mxu0 %v172
    %v1706 = vpop.f32.mrf.mxu0
    %v1707 = vadd.f32 %v1603, %v1706
    %v1708 = vpop.f32.mrf.mxu0
    %v1709 = vadd.f32 %v1607, %v1708
    %1710 = vdwg.mxu0
    %1711 = vmatprep.subr.mxu0 %v1464
    %1712 = vmatpush1.msra.mxu0 %v1463
    %1713 = vmatprep.subr.mxu0 %v1456
    %1714 = vmatpush1.msra.mxu0 %v1455
    %1715 = vmatprep.subr.mxu0 %v1448
    %1716 = vmatpush1.msra.mxu0 %v1447
    %1717 = vmatprep.subr.mxu0 %v1440
    %1718 = vmatpush1.msra.mxu0 %v1439
    %1719 = vmatprep.subr.mxu0 %v1432
    %1720 = vmatpush1.msra.mxu0 %v1431
    %1721 = vmatprep.subr.mxu0 %v1424
    %1722 = vmatpush1.msra.mxu0 %v1423
    %1723 = vmatprep.subr.mxu0 %v1416
    %1724 = vmatpush1.msra.mxu0 %v1415
    %1725 = vmatprep.subr.mxu0 %v1408
    %1726 = vmatpush1.msra.mxu0 %v1407
    %1727 = vmatprep.subr.mxu0 %v1400
    %1728 = vmatpush1.msra.mxu0 %v1399
    %1729 = vmatprep.subr.mxu0 %v1392
    %1730 = vmatpush1.msra.mxu0 %v1391
    %1731 = vmatprep.subr.mxu0 %v1384
    %1732 = vmatpush1.msra.mxu0 %v1383
    %1733 = vmatprep.subr.mxu0 %v1376
    %1734 = vmatpush1.msra.mxu0 %v1375
    %1735 = vmatprep.subr.mxu0 %v1368
    %1736 = vmatpush1.msra.mxu0 %v1367
    %1737 = vmatprep.subr.mxu0 %v1360
    %1738 = vmatpush1.msra.mxu0 %v1359
    %1739 = vmatprep.subr.mxu0 %v1352
    %1740 = vmatpush1.msra.mxu0 %v1351
    %1741 = vmatprep.subr.mxu0 %v1344
    %1742 = vmatpush1.msra.mxu0 %v1343
    %1743 = vmatprep.subr.mxu0 %v1592
    %1744 = vmatpush2.msra.mxu0 %v1591
    %1745 = vmatprep.subr.mxu0 %v1584
    %1746 = vmatpush2.msra.mxu0 %v1583
    %1747 = vmatprep.subr.mxu0 %v1576
    %1748 = vmatpush2.msra.mxu0 %v1575
    %1749 = vmatprep.subr.mxu0 %v1568
    %1750 = vmatpush2.msra.mxu0 %v1567
    %1751 = vmatprep.subr.mxu0 %v1560
    %1752 = vmatpush2.msra.mxu0 %v1559
    %1753 = vmatprep.subr.mxu0 %v1552
    %1754 = vmatpush2.msra.mxu0 %v1551
    %1755 = vmatprep.subr.mxu0 %v1544
    %1756 = vmatpush2.msra.mxu0 %v1543
    %1757 = vmatprep.subr.mxu0 %v1536
    %1758 = vmatpush2.msra.mxu0 %v1535
    %1759 = vmatprep.subr.mxu0 %v1528
    %1760 = vmatpush2.msra.mxu0 %v1527
    %1761 = vmatprep.subr.mxu0 %v1520
    %1762 = vmatpush2.msra.mxu0 %v1519
    %1763 = vmatprep.subr.mxu0 %v1512
    %1764 = vmatpush2.msra.mxu0 %v1511
    %1765 = vmatprep.subr.mxu0 %v1504
    %1766 = vmatpush2.msra.mxu0 %v1503
    %1767 = vmatprep.subr.mxu0 %v1496
    %1768 = vmatpush2.msra.mxu0 %v1495
    %1769 = vmatprep.subr.mxu0 %v1488
    %1770 = vmatpush2.msra.mxu0 %v1487
    %1771 = vmatprep.subr.mxu0 %v1480
    %1772 = vmatpush2.msra.mxu0 %v1479
    %1773 = vmatprep.subr.mxu0 %v1472
    %1774 = vmatpush2.msra.mxu0 %v1471
    %1775 = vmatprep.mubr.f32.mxu0 %v173
    %1776 = vmatmul.mubr.f32.gmra.mxu0 %v172
    %v1777 = vpop.f32.mrf.mxu0
    %v1778 = vadd.f32 %v1611, %v1777
    %v1779 = vpop.f32.mrf.mxu0
    %v1780 = vadd.f32 %v1615, %v1779
    %1781 = vdwg.mxu0
    %1782 = vmatprep.subr.mxu0 %v1466
    %1783 = vmatpush1.msra.mxu0 %v1465
    %1784 = vmatprep.subr.mxu0 %v1458
    %1785 = vmatpush1.msra.mxu0 %v1457
    %1786 = vmatprep.subr.mxu0 %v1450
    %1787 = vmatpush1.msra.mxu0 %v1449
    %1788 = vmatprep.subr.mxu0 %v1442
    %1789 = vmatpush1.msra.mxu0 %v1441
    %1790 = vmatprep.subr.mxu0 %v1434
    %1791 = vmatpush1.msra.mxu0 %v1433
    %1792 = vmatprep.subr.mxu0 %v1426
    %1793 = vmatpush1.msra.mxu0 %v1425
    %1794 = vmatprep.subr.mxu0 %v1418
    %1795 = vmatpush1.msra.mxu0 %v1417
    %1796 = vmatprep.subr.mxu0 %v1410
    %1797 = vmatpush1.msra.mxu0 %v1409
    %1798 = vmatprep.subr.mxu0 %v1402
    %1799 = vmatpush1.msra.mxu0 %v1401
    %1800 = vmatprep.subr.mxu0 %v1394
    %1801 = vmatpush1.msra.mxu0 %v1393
    %1802 = vmatprep.subr.mxu0 %v1386
    %1803 = vmatpush1.msra.mxu0 %v1385
    %1804 = vmatprep.subr.mxu0 %v1378
    %1805 = vmatpush1.msra.mxu0 %v1377
    %1806 = vmatprep.subr.mxu0 %v1370
    %1807 = vmatpush1.msra.mxu0 %v1369
    %1808 = vmatprep.subr.mxu0 %v1362
    %1809 = vmatpush1.msra.mxu0 %v1361
    %1810 = vmatprep.subr.mxu0 %v1354
    %1811 = vmatpush1.msra.mxu0 %v1353
    %1812 = vmatprep.subr.mxu0 %v1346
    %1813 = vmatpush1.msra.mxu0 %v1345
    %1814 = vmatprep.subr.mxu0 %v1594
    %1815 = vmatpush2.msra.mxu0 %v1593
    %1816 = vmatprep.subr.mxu0 %v1586
    %1817 = vmatpush2.msra.mxu0 %v1585
    %1818 = vmatprep.subr.mxu0 %v1578
    %1819 = vmatpush2.msra.mxu0 %v1577
    %1820 = vmatprep.subr.mxu0 %v1570
    %1821 = vmatpush2.msra.mxu0 %v1569
    %1822 = vmatprep.subr.mxu0 %v1562
    %1823 = vmatpush2.msra.mxu0 %v1561
    %1824 = vmatprep.subr.mxu0 %v1554
    %1825 = vmatpush2.msra.mxu0 %v1553
    %1826 = vmatprep.subr.mxu0 %v1546
    %1827 = vmatpush2.msra.mxu0 %v1545
    %1828 = vmatprep.subr.mxu0 %v1538
    %1829 = vmatpush2.msra.mxu0 %v1537
    %1830 = vmatprep.subr.mxu0 %v1530
    %1831 = vmatpush2.msra.mxu0 %v1529
    %1832 = vmatprep.subr.mxu0 %v1522
    %1833 = vmatpush2.msra.mxu0 %v1521
    %1834 = vmatprep.subr.mxu0 %v1514
    %1835 = vmatpush2.msra.mxu0 %v1513
    %1836 = vmatprep.subr.mxu0 %v1506
    %1837 = vmatpush2.msra.mxu0 %v1505
    %1838 = vmatprep.subr.mxu0 %v1498
    %1839 = vmatpush2.msra.mxu0 %v1497
    %1840 = vmatprep.subr.mxu0 %v1490
    %1841 = vmatpush2.msra.mxu0 %v1489
    %1842 = vmatprep.subr.mxu0 %v1482
    %1843 = vmatpush2.msra.mxu0 %v1481
    %1844 = vmatprep.subr.mxu0 %v1474
    %1845 = vmatpush2.msra.mxu0 %v1473
    %1846 = vmatprep.mubr.f32.mxu0 %v173
    %1847 = vmatmul.mubr.f32.gmra.mxu0 %v172
    %v1848 = vpop.f32.mrf.mxu0
    %v1849 = vadd.f32 %v1619, %v1848
    %v1850 = vpop.f32.mrf.mxu0
    %v1851 = vadd.f32 %v1623, %v1850
    %1852 = vdwg.mxu0
    %1853 = vmatprep.subr.mxu0 %v1468
    %1854 = vmatpush1.msra.mxu0 %v1467
    %1855 = vmatprep.subr.mxu0 %v1460
    %1856 = vmatpush1.msra.mxu0 %v1459
    %1857 = vmatprep.subr.mxu0 %v1452
    %1858 = vmatpush1.msra.mxu0 %v1451
    %1859 = vmatprep.subr.mxu0 %v1444
    %1860 = vmatpush1.msra.mxu0 %v1443
    %1861 = vmatprep.subr.mxu0 %v1436
    %1862 = vmatpush1.msra.mxu0 %v1435
    %1863 = vmatprep.subr.mxu0 %v1428
    %1864 = vmatpush1.msra.mxu0 %v1427
    %1865 = vmatprep.subr.mxu0 %v1420
    %1866 = vmatpush1.msra.mxu0 %v1419
    %1867 = vmatprep.subr.mxu0 %v1412
    %1868 = vmatpush1.msra.mxu0 %v1411
    %1869 = vmatprep.subr.mxu0 %v1404
    %1870 = vmatpush1.msra.mxu0 %v1403
    %1871 = vmatprep.subr.mxu0 %v1396
    %1872 = vmatpush1.msra.mxu0 %v1395
    %1873 = vmatprep.subr.mxu0 %v1388
    %1874 = vmatpush1.msra.mxu0 %v1387
    %1875 = vmatprep.subr.mxu0 %v1380
    %1876 = vmatpush1.msra.mxu0 %v1379
    %1877 = vmatprep.subr.mxu0 %v1372
    %1878 = vmatpush1.msra.mxu0 %v1371
    %1879 = vmatprep.subr.mxu0 %v1364
    %1880 = vmatpush1.msra.mxu0 %v1363
    %1881 = vmatprep.subr.mxu0 %v1356
    %1882 = vmatpush1.msra.mxu0 %v1355
    %1883 = vmatprep.subr.mxu0 %v1348
    %1884 = vmatpush1.msra.mxu0 %v1347
    %1885 = vmatprep.subr.mxu0 %v1596
    %1886 = vmatpush2.msra.mxu0 %v1595
    %1887 = vmatprep.subr.mxu0 %v1588
    %1888 = vmatpush2.msra.mxu0 %v1587
    %1889 = vmatprep.subr.mxu0 %v1580
    %1890 = vmatpush2.msra.mxu0 %v1579
    %1891 = vmatprep.subr.mxu0 %v1572
    %1892 = vmatpush2.msra.mxu0 %v1571
    %1893 = vmatprep.subr.mxu0 %v1564
    %1894 = vmatpush2.msra.mxu0 %v1563
    %1895 = vmatprep.subr.mxu0 %v1556
    %1896 = vmatpush2.msra.mxu0 %v1555
    %1897 = vmatprep.subr.mxu0 %v1548
    %1898 = vmatpush2.msra.mxu0 %v1547
    %1899 = vmatprep.subr.mxu0 %v1540
    %1900 = vmatpush2.msra.mxu0 %v1539
    %1901 = vmatprep.subr.mxu0 %v1532
    %1902 = vmatpush2.msra.mxu0 %v1531
    %1903 = vmatprep.subr.mxu0 %v1524
    %1904 = vmatpush2.msra.mxu0 %v1523
    %1905 = vmatprep.subr.mxu0 %v1516
    %1906 = vmatpush2.msra.mxu0 %v1515
    %1907 = vmatprep.subr.mxu0 %v1508
    %1908 = vmatpush2.msra.mxu0 %v1507
    %1909 = vmatprep.subr.mxu0 %v1500
    %1910 = vmatpush2.msra.mxu0 %v1499
    %1911 = vmatprep.subr.mxu0 %v1492
    %1912 = vmatpush2.msra.mxu0 %v1491
    %1913 = vmatprep.subr.mxu0 %v1484
    %1914 = vmatpush2.msra.mxu0 %v1483
    %1915 = vmatprep.subr.mxu0 %v1476
    %1916 = vmatpush2.msra.mxu0 %v1475
    %1917 = vmatprep.mubr.f32.mxu0 %v173
    %1918 = vmatmul.mubr.f32.gmra.mxu0 %v172
    %v1919 = vpop.f32.mrf.mxu0
    %v1920 = vadd.f32 %v1627, %v1919
    %v1921 = vpop.f32.mrf.mxu0
    %v1922 = vadd.f32 %v1631, %v1921
    %1923 = vdwg.mxu0
    %v1924 = vmul.f32 %v539, %v1123
    %v1925 = vmul.f32 %v541, %v1125
    %v1926 = vmul.f32 %v610, %v1194
    %v1927 = vmul.f32 %v612, %v1196
    %v1928 = vmul.f32 %v681, %v1265
    %v1929 = vmul.f32 %v683, %v1267
    %v1930 = vmul.f32 %v752, %v1336
    %v1931 = vmul.f32 %v754, %v1338
    %v1932 = vld [vmem:[#allocation8] sm:$0xff]
    %v1933 = vld [vmem:[#allocation8 + $0x8] sm:$0xff]
    %v1934 = vld [vmem:[#allocation8 + $0x10] sm:$0xff]
    %v1935 = vld [vmem:[#allocation8 + $0x18] sm:$0xff]
    %v1936 = vld [vmem:[#allocation8 + $0x20] sm:$0xff]
    %v1937 = vld [vmem:[#allocation8 + $0x28] sm:$0xff]
    %v1938 = vld [vmem:[#allocation8 + $0x30] sm:$0xff]
    %v1939 = vld [vmem:[#allocation8 + $0x38] sm:$0xff]
    %v1940 = vld [vmem:[#allocation8 + $0x40] sm:$0xff]
    %v1941 = vld [vmem:[#allocation8 + $0x48] sm:$0xff]
    %v1942 = vld [vmem:[#allocation8 + $0x50] sm:$0xff]
    %v1943 = vld [vmem:[#allocation8 + $0x58] sm:$0xff]
    %v1944 = vld [vmem:[#allocation8 + $0x60] sm:$0xff]
    %v1945 = vld [vmem:[#allocation8 + $0x68] sm:$0xff]
    %v1946 = vld [vmem:[#allocation8 + $0x70] sm:$0xff]
    %v1947 = vld [vmem:[#allocation8 + $0x78] sm:$0xff]
    %v1948 = vld [vmem:[#allocation8 + $0x80] sm:$0xff]
    %v1949 = vld [vmem:[#allocation8 + $0x88] sm:$0xff]
    %v1950 = vld [vmem:[#allocation8 + $0x90] sm:$0xff]
    %v1951 = vld [vmem:[#allocation8 + $0x98] sm:$0xff]
    %v1952 = vld [vmem:[#allocation8 + $0xa0] sm:$0xff]
    %v1953 = vld [vmem:[#allocation8 + $0xa8] sm:$0xff]
    %v1954 = vld [vmem:[#allocation8 + $0xb0] sm:$0xff]
    %v1955 = vld [vmem:[#allocation8 + $0xb8] sm:$0xff]
    %v1956 = vld [vmem:[#allocation8 + $0xc0] sm:$0xff]
    %v1957 = vld [vmem:[#allocation8 + $0xc8] sm:$0xff]
    %v1958 = vld [vmem:[#allocation8 + $0xd0] sm:$0xff]
    %v1959 = vld [vmem:[#allocation8 + $0xd8] sm:$0xff]
    %v1960 = vld [vmem:[#allocation8 + $0xe0] sm:$0xff]
    %v1961 = vld [vmem:[#allocation8 + $0xe8] sm:$0xff]
    %v1962 = vld [vmem:[#allocation8 + $0xf0] sm:$0xff]
    %v1963 = vld [vmem:[#allocation8 + $0xf8] sm:$0xff]
    %v1964 = vld [vmem:[#allocation8 + $0x100] sm:$0xff]
    %v1965 = vld [vmem:[#allocation8 + $0x108] sm:$0xff]
    %v1966 = vld [vmem:[#allocation8 + $0x110] sm:$0xff]
    %v1967 = vld [vmem:[#allocation8 + $0x118] sm:$0xff]
    %v1968 = vld [vmem:[#allocation8 + $0x120] sm:$0xff]
    %v1969 = vld [vmem:[#allocation8 + $0x128] sm:$0xff]
    %v1970 = vld [vmem:[#allocation8 + $0x130] sm:$0xff]
    %v1971 = vld [vmem:[#allocation8 + $0x138] sm:$0xff]
    %v1972 = vld [vmem:[#allocation8 + $0x140] sm:$0xff]
    %v1973 = vld [vmem:[#allocation8 + $0x148] sm:$0xff]
    %v1974 = vld [vmem:[#allocation8 + $0x150] sm:$0xff]
    %v1975 = vld [vmem:[#allocation8 + $0x158] sm:$0xff]
    %v1976 = vld [vmem:[#allocation8 + $0x160] sm:$0xff]
    %v1977 = vld [vmem:[#allocation8 + $0x168] sm:$0xff]
    %v1978 = vld [vmem:[#allocation8 + $0x170] sm:$0xff]
    %v1979 = vld [vmem:[#allocation8 + $0x178] sm:$0xff]
    %v1980 = vld [vmem:[#allocation8 + $0x180] sm:$0xff]
    %v1981 = vld [vmem:[#allocation8 + $0x188] sm:$0xff]
    %v1982 = vld [vmem:[#allocation8 + $0x190] sm:$0xff]
    %v1983 = vld [vmem:[#allocation8 + $0x198] sm:$0xff]
    %v1984 = vld [vmem:[#allocation8 + $0x1a0] sm:$0xff]
    %v1985 = vld [vmem:[#allocation8 + $0x1a8] sm:$0xff]
    %v1986 = vld [vmem:[#allocation8 + $0x1b0] sm:$0xff]
    %v1987 = vld [vmem:[#allocation8 + $0x1b8] sm:$0xff]
    %v1988 = vld [vmem:[#allocation8 + $0x1c0] sm:$0xff]
    %v1989 = vld [vmem:[#allocation8 + $0x1c8] sm:$0xff]
    %v1990 = vld [vmem:[#allocation8 + $0x1d0] sm:$0xff]
    %v1991 = vld [vmem:[#allocation8 + $0x1d8] sm:$0xff]
    %v1992 = vld [vmem:[#allocation8 + $0x1e0] sm:$0xff]
    %v1993 = vld [vmem:[#allocation8 + $0x1e8] sm:$0xff]
    %v1994 = vld [vmem:[#allocation8 + $0x1f0] sm:$0xff]
    %v1995 = vld [vmem:[#allocation8 + $0x1f8] sm:$0xff]
    %v1996 = vld [vmem:[#allocation8 + $0x200] sm:$0xff]
    %v1997 = vld [vmem:[#allocation8 + $0x208] sm:$0xff]
    %v1998 = vld [vmem:[#allocation8 + $0x210] sm:$0xff]
    %v1999 = vld [vmem:[#allocation8 + $0x218] sm:$0xff]
    %v2000 = vld [vmem:[#allocation8 + $0x220] sm:$0xff]
    %v2001 = vld [vmem:[#allocation8 + $0x228] sm:$0xff]
    %v2002 = vld [vmem:[#allocation8 + $0x230] sm:$0xff]
    %v2003 = vld [vmem:[#allocation8 + $0x238] sm:$0xff]
    %v2004 = vld [vmem:[#allocation8 + $0x240] sm:$0xff]
    %v2005 = vld [vmem:[#allocation8 + $0x248] sm:$0xff]
    %v2006 = vld [vmem:[#allocation8 + $0x250] sm:$0xff]
    %v2007 = vld [vmem:[#allocation8 + $0x258] sm:$0xff]
    %v2008 = vld [vmem:[#allocation8 + $0x260] sm:$0xff]
    %v2009 = vld [vmem:[#allocation8 + $0x268] sm:$0xff]
    %v2010 = vld [vmem:[#allocation8 + $0x270] sm:$0xff]
    %v2011 = vld [vmem:[#allocation8 + $0x278] sm:$0xff]
    %v2012 = vld [vmem:[#allocation8 + $0x280] sm:$0xff]
    %v2013 = vld [vmem:[#allocation8 + $0x288] sm:$0xff]
    %v2014 = vld [vmem:[#allocation8 + $0x290] sm:$0xff]
    %v2015 = vld [vmem:[#allocation8 + $0x298] sm:$0xff]
    %v2016 = vld [vmem:[#allocation8 + $0x2a0] sm:$0xff]
    %v2017 = vld [vmem:[#allocation8 + $0x2a8] sm:$0xff]
    %v2018 = vld [vmem:[#allocation8 + $0x2b0] sm:$0xff]
    %v2019 = vld [vmem:[#allocation8 + $0x2b8] sm:$0xff]
    %v2020 = vld [vmem:[#allocation8 + $0x2c0] sm:$0xff]
    %v2021 = vld [vmem:[#allocation8 + $0x2c8] sm:$0xff]
    %v2022 = vld [vmem:[#allocation8 + $0x2d0] sm:$0xff]
    %v2023 = vld [vmem:[#allocation8 + $0x2d8] sm:$0xff]
    %v2024 = vld [vmem:[#allocation8 + $0x2e0] sm:$0xff]
    %v2025 = vld [vmem:[#allocation8 + $0x2e8] sm:$0xff]
    %v2026 = vld [vmem:[#allocation8 + $0x2f0] sm:$0xff]
    %v2027 = vld [vmem:[#allocation8 + $0x2f8] sm:$0xff]
    %v2028 = vld [vmem:[#allocation8 + $0x300] sm:$0xff]
    %v2029 = vld [vmem:[#allocation8 + $0x308] sm:$0xff]
    %v2030 = vld [vmem:[#allocation8 + $0x310] sm:$0xff]
    %v2031 = vld [vmem:[#allocation8 + $0x318] sm:$0xff]
    %v2032 = vld [vmem:[#allocation8 + $0x320] sm:$0xff]
    %v2033 = vld [vmem:[#allocation8 + $0x328] sm:$0xff]
    %v2034 = vld [vmem:[#allocation8 + $0x330] sm:$0xff]
    %v2035 = vld [vmem:[#allocation8 + $0x338] sm:$0xff]
    %v2036 = vld [vmem:[#allocation8 + $0x340] sm:$0xff]
    %v2037 = vld [vmem:[#allocation8 + $0x348] sm:$0xff]
    %v2038 = vld [vmem:[#allocation8 + $0x350] sm:$0xff]
    %v2039 = vld [vmem:[#allocation8 + $0x358] sm:$0xff]
    %v2040 = vld [vmem:[#allocation8 + $0x360] sm:$0xff]
    %v2041 = vld [vmem:[#allocation8 + $0x368] sm:$0xff]
    %v2042 = vld [vmem:[#allocation8 + $0x370] sm:$0xff]
    %v2043 = vld [vmem:[#allocation8 + $0x378] sm:$0xff]
    %v2044 = vld [vmem:[#allocation8 + $0x380] sm:$0xff]
    %v2045 = vld [vmem:[#allocation8 + $0x388] sm:$0xff]
    %v2046 = vld [vmem:[#allocation8 + $0x390] sm:$0xff]
    %v2047 = vld [vmem:[#allocation8 + $0x398] sm:$0xff]
    %v2048 = vld [vmem:[#allocation8 + $0x3a0] sm:$0xff]
    %v2049 = vld [vmem:[#allocation8 + $0x3a8] sm:$0xff]
    %v2050 = vld [vmem:[#allocation8 + $0x3b0] sm:$0xff]
    %v2051 = vld [vmem:[#allocation8 + $0x3b8] sm:$0xff]
    %v2052 = vld [vmem:[#allocation8 + $0x3c0] sm:$0xff]
    %v2053 = vld [vmem:[#allocation8 + $0x3c8] sm:$0xff]
    %v2054 = vld [vmem:[#allocation8 + $0x3d0] sm:$0xff]
    %v2055 = vld [vmem:[#allocation8 + $0x3d8] sm:$0xff]
    %v2056 = vld [vmem:[#allocation8 + $0x3e0] sm:$0xff]
    %v2057 = vld [vmem:[#allocation8 + $0x3e8] sm:$0xff]
    %v2058 = vld [vmem:[#allocation8 + $0x3f0] sm:$0xff]
    %v2059 = vld [vmem:[#allocation8 + $0x3f8] sm:$0xff]
    %2060 = vmatprep.subr.mxu0 0.0
    %2061 = vmatpush1.msra.mxu0 %v1947
    %2062 = vmatprep.subr.mxu0 0.0
    %2063 = vmatpush1.msra.mxu0 %v1946
    %2064 = vmatprep.subr.mxu0 0.0
    %2065 = vmatpush1.msra.mxu0 %v1945
    %2066 = vmatprep.subr.mxu0 0.0
    %2067 = vmatpush1.msra.mxu0 %v1944
    %2068 = vmatprep.subr.mxu0 0.0
    %2069 = vmatpush1.msra.mxu0 %v1943
    %2070 = vmatprep.subr.mxu0 0.0
    %2071 = vmatpush1.msra.mxu0 %v1942
    %2072 = vmatprep.subr.mxu0 0.0
    %2073 = vmatpush1.msra.mxu0 %v1941
    %2074 = vmatprep.subr.mxu0 0.0
    %2075 = vmatpush1.msra.mxu0 %v1940
    %2076 = vmatprep.subr.mxu0 0.0
    %2077 = vmatpush1.msra.mxu0 %v1939
    %2078 = vmatprep.subr.mxu0 0.0
    %2079 = vmatpush1.msra.mxu0 %v1938
    %2080 = vmatprep.subr.mxu0 0.0
    %2081 = vmatpush1.msra.mxu0 %v1937
    %2082 = vmatprep.subr.mxu0 0.0
    %2083 = vmatpush1.msra.mxu0 %v1936
    %2084 = vmatprep.subr.mxu0 0.0
    %2085 = vmatpush1.msra.mxu0 %v1935
    %2086 = vmatprep.subr.mxu0 0.0
    %2087 = vmatpush1.msra.mxu0 %v1934
    %2088 = vmatprep.subr.mxu0 0.0
    %2089 = vmatpush1.msra.mxu0 %v1933
    %2090 = vmatprep.subr.mxu0 0.0
    %2091 = vmatpush1.msra.mxu0 %v1932
    %2092 = vmatprep.subr.mxu0 0.0
    %2093 = vmatpush2.msra.mxu0 %v1963
    %2094 = vmatprep.subr.mxu0 0.0
    %2095 = vmatpush2.msra.mxu0 %v1962
    %2096 = vmatprep.subr.mxu0 0.0
    %2097 = vmatpush2.msra.mxu0 %v1961
    %2098 = vmatprep.subr.mxu0 0.0
    %2099 = vmatpush2.msra.mxu0 %v1960
    %2100 = vmatprep.subr.mxu0 0.0
    %2101 = vmatpush2.msra.mxu0 %v1959
    %2102 = vmatprep.subr.mxu0 0.0
    %2103 = vmatpush2.msra.mxu0 %v1958
    %2104 = vmatprep.subr.mxu0 0.0
    %2105 = vmatpush2.msra.mxu0 %v1957
    %2106 = vmatprep.subr.mxu0 0.0
    %2107 = vmatpush2.msra.mxu0 %v1956
    %2108 = vmatprep.subr.mxu0 0.0
    %2109 = vmatpush2.msra.mxu0 %v1955
    %2110 = vmatprep.subr.mxu0 0.0
    %2111 = vmatpush2.msra.mxu0 %v1954
    %2112 = vmatprep.subr.mxu0 0.0
    %2113 = vmatpush2.msra.mxu0 %v1953
    %2114 = vmatprep.subr.mxu0 0.0
    %2115 = vmatpush2.msra.mxu0 %v1952
    %2116 = vmatprep.subr.mxu0 0.0
    %2117 = vmatpush2.msra.mxu0 %v1951
    %2118 = vmatprep.subr.mxu0 0.0
    %2119 = vmatpush2.msra.mxu0 %v1950
    %2120 = vmatprep.subr.mxu0 0.0
    %2121 = vmatpush2.msra.mxu0 %v1949
    %2122 = vmatprep.subr.mxu0 0.0
    %2123 = vmatpush2.msra.mxu0 %v1948
    %2124 = vmatprep.mubr.f32.mxu0 %v1925
    %2125 = vmatmul.mubr.f32.gmra.mxu0 %v1924
    %v2126 = vpop.f32.mrf.mxu0
    %v2127 = vadd.f32 0.0, %v2126
    %v2128 = vpop.f32.mrf.mxu0
    %2129 = vdwg.mxu0
    %2130 = vmatprep.subr.mxu0 0.0
    %2131 = vmatpush1.msra.mxu0 %v1979
    %2132 = vmatprep.subr.mxu0 0.0
    %2133 = vmatpush1.msra.mxu0 %v1978
    %2134 = vmatprep.subr.mxu0 0.0
    %2135 = vmatpush1.msra.mxu0 %v1977
    %2136 = vmatprep.subr.mxu0 0.0
    %2137 = vmatpush1.msra.mxu0 %v1976
    %2138 = vmatprep.subr.mxu0 0.0
    %2139 = vmatpush1.msra.mxu0 %v1975
    %2140 = vmatprep.subr.mxu0 0.0
    %2141 = vmatpush1.msra.mxu0 %v1974
    %2142 = vmatprep.subr.mxu0 0.0
    %2143 = vmatpush1.msra.mxu0 %v1973
    %2144 = vmatprep.subr.mxu0 0.0
    %2145 = vmatpush1.msra.mxu0 %v1972
    %2146 = vmatprep.subr.mxu0 0.0
    %2147 = vmatpush1.msra.mxu0 %v1971
    %2148 = vmatprep.subr.mxu0 0.0
    %2149 = vmatpush1.msra.mxu0 %v1970
    %2150 = vmatprep.subr.mxu0 0.0
    %2151 = vmatpush1.msra.mxu0 %v1969
    %2152 = vmatprep.subr.mxu0 0.0
    %2153 = vmatpush1.msra.mxu0 %v1968
    %2154 = vmatprep.subr.mxu0 0.0
    %2155 = vmatpush1.msra.mxu0 %v1967
    %2156 = vmatprep.subr.mxu0 0.0
    %2157 = vmatpush1.msra.mxu0 %v1966
    %2158 = vmatprep.subr.mxu0 0.0
    %2159 = vmatpush1.msra.mxu0 %v1965
    %2160 = vmatprep.subr.mxu0 0.0
    %2161 = vmatpush1.msra.mxu0 %v1964
    %2162 = vmatprep.subr.mxu0 0.0
    %2163 = vmatpush2.msra.mxu0 %v1995
    %2164 = vmatprep.subr.mxu0 0.0
    %2165 = vmatpush2.msra.mxu0 %v1994
    %2166 = vmatprep.subr.mxu0 0.0
    %2167 = vmatpush2.msra.mxu0 %v1993
    %2168 = vmatprep.subr.mxu0 0.0
    %2169 = vmatpush2.msra.mxu0 %v1992
    %2170 = vmatprep.subr.mxu0 0.0
    %2171 = vmatpush2.msra.mxu0 %v1991
    %2172 = vmatprep.subr.mxu0 0.0
    %2173 = vmatpush2.msra.mxu0 %v1990
    %2174 = vmatprep.subr.mxu0 0.0
    %2175 = vmatpush2.msra.mxu0 %v1989
    %2176 = vmatprep.subr.mxu0 0.0
    %2177 = vmatpush2.msra.mxu0 %v1988
    %2178 = vmatprep.subr.mxu0 0.0
    %2179 = vmatpush2.msra.mxu0 %v1987
    %2180 = vmatprep.subr.mxu0 0.0
    %2181 = vmatpush2.msra.mxu0 %v1986
    %2182 = vmatprep.subr.mxu0 0.0
    %2183 = vmatpush2.msra.mxu0 %v1985
    %2184 = vmatprep.subr.mxu0 0.0
    %2185 = vmatpush2.msra.mxu0 %v1984
    %2186 = vmatprep.subr.mxu0 0.0
    %2187 = vmatpush2.msra.mxu0 %v1983
    %2188 = vmatprep.subr.mxu0 0.0
    %2189 = vmatpush2.msra.mxu0 %v1982
    %2190 = vmatprep.subr.mxu0 0.0
    %2191 = vmatpush2.msra.mxu0 %v1981
    %2192 = vmatprep.subr.mxu0 0.0
    %2193 = vmatpush2.msra.mxu0 %v1980
    %2194 = vmatprep.mubr.f32.mxu0 %v1927
    %2195 = vmatmul.mubr.f32.gmra.mxu0 %v1926
    %v2196 = vpop.f32.mrf.mxu0
    %v2197 = vadd.f32 %v2127, %v2196
    %v2198 = vpop.f32.mrf.mxu0
    %2199 = vdwg.mxu0
    %2200 = vmatprep.subr.mxu0 0.0
    %2201 = vmatpush1.msra.mxu0 %v2011
    %2202 = vmatprep.subr.mxu0 0.0
    %2203 = vmatpush1.msra.mxu0 %v2010
    %2204 = vmatprep.subr.mxu0 0.0
    %2205 = vmatpush1.msra.mxu0 %v2009
    %2206 = vmatprep.subr.mxu0 0.0
    %2207 = vmatpush1.msra.mxu0 %v2008
    %2208 = vmatprep.subr.mxu0 0.0
    %2209 = vmatpush1.msra.mxu0 %v2007
    %2210 = vmatprep.subr.mxu0 0.0
    %2211 = vmatpush1.msra.mxu0 %v2006
    %2212 = vmatprep.subr.mxu0 0.0
    %2213 = vmatpush1.msra.mxu0 %v2005
    %2214 = vmatprep.subr.mxu0 0.0
    %2215 = vmatpush1.msra.mxu0 %v2004
    %2216 = vmatprep.subr.mxu0 0.0
    %2217 = vmatpush1.msra.mxu0 %v2003
    %2218 = vmatprep.subr.mxu0 0.0
    %2219 = vmatpush1.msra.mxu0 %v2002
    %2220 = vmatprep.subr.mxu0 0.0
    %2221 = vmatpush1.msra.mxu0 %v2001
    %2222 = vmatprep.subr.mxu0 0.0
    %2223 = vmatpush1.msra.mxu0 %v2000
    %2224 = vmatprep.subr.mxu0 0.0
    %2225 = vmatpush1.msra.mxu0 %v1999
    %2226 = vmatprep.subr.mxu0 0.0
    %2227 = vmatpush1.msra.mxu0 %v1998
    %2228 = vmatprep.subr.mxu0 0.0
    %2229 = vmatpush1.msra.mxu0 %v1997
    %2230 = vmatprep.subr.mxu0 0.0
    %2231 = vmatpush1.msra.mxu0 %v1996
    %2232 = vmatprep.subr.mxu0 0.0
    %2233 = vmatpush2.msra.mxu0 %v2027
    %2234 = vmatprep.subr.mxu0 0.0
    %2235 = vmatpush2.msra.mxu0 %v2026
    %2236 = vmatprep.subr.mxu0 0.0
    %2237 = vmatpush2.msra.mxu0 %v2025
    %2238 = vmatprep.subr.mxu0 0.0
    %2239 = vmatpush2.msra.mxu0 %v2024
    %2240 = vmatprep.subr.mxu0 0.0
    %2241 = vmatpush2.msra.mxu0 %v2023
    %2242 = vmatprep.subr.mxu0 0.0
    %2243 = vmatpush2.msra.mxu0 %v2022
    %2244 = vmatprep.subr.mxu0 0.0
    %2245 = vmatpush2.msra.mxu0 %v2021
    %2246 = vmatprep.subr.mxu0 0.0
    %2247 = vmatpush2.msra.mxu0 %v2020
    %2248 = vmatprep.subr.mxu0 0.0
    %2249 = vmatpush2.msra.mxu0 %v2019
    %2250 = vmatprep.subr.mxu0 0.0
    %2251 = vmatpush2.msra.mxu0 %v2018
    %2252 = vmatprep.subr.mxu0 0.0
    %2253 = vmatpush2.msra.mxu0 %v2017
    %2254 = vmatprep.subr.mxu0 0.0
    %2255 = vmatpush2.msra.mxu0 %v2016
    %2256 = vmatprep.subr.mxu0 0.0
    %2257 = vmatpush2.msra.mxu0 %v2015
    %2258 = vmatprep.subr.mxu0 0.0
    %2259 = vmatpush2.msra.mxu0 %v2014
    %2260 = vmatprep.subr.mxu0 0.0
    %2261 = vmatpush2.msra.mxu0 %v2013
    %2262 = vmatprep.subr.mxu0 0.0
    %2263 = vmatpush2.msra.mxu0 %v2012
    %2264 = vmatprep.mubr.f32.mxu0 %v1929
    %2265 = vmatmul.mubr.f32.gmra.mxu0 %v1928
    %v2266 = vpop.f32.mrf.mxu0
    %v2267 = vadd.f32 %v2197, %v2266
    %v2268 = vpop.f32.mrf.mxu0
    %2269 = vdwg.mxu0
    %2270 = vmatprep.subr.mxu0 0.0
    %2271 = vmatpush1.msra.mxu0 %v2043
    %2272 = vmatprep.subr.mxu0 0.0
    %2273 = vmatpush1.msra.mxu0 %v2042
    %2274 = vmatprep.subr.mxu0 0.0
    %2275 = vmatpush1.msra.mxu0 %v2041
    %2276 = vmatprep.subr.mxu0 0.0
    %2277 = vmatpush1.msra.mxu0 %v2040
    %2278 = vmatprep.subr.mxu0 0.0
    %2279 = vmatpush1.msra.mxu0 %v2039
    %2280 = vmatprep.subr.mxu0 0.0
    %2281 = vmatpush1.msra.mxu0 %v2038
    %2282 = vmatprep.subr.mxu0 0.0
    %2283 = vmatpush1.msra.mxu0 %v2037
    %2284 = vmatprep.subr.mxu0 0.0
    %2285 = vmatpush1.msra.mxu0 %v2036
    %2286 = vmatprep.subr.mxu0 0.0
    %2287 = vmatpush1.msra.mxu0 %v2035
    %2288 = vmatprep.subr.mxu0 0.0
    %2289 = vmatpush1.msra.mxu0 %v2034
    %2290 = vmatprep.subr.mxu0 0.0
    %2291 = vmatpush1.msra.mxu0 %v2033
    %2292 = vmatprep.subr.mxu0 0.0
    %2293 = vmatpush1.msra.mxu0 %v2032
    %2294 = vmatprep.subr.mxu0 0.0
    %2295 = vmatpush1.msra.mxu0 %v2031
    %2296 = vmatprep.subr.mxu0 0.0
    %2297 = vmatpush1.msra.mxu0 %v2030
    %2298 = vmatprep.subr.mxu0 0.0
    %2299 = vmatpush1.msra.mxu0 %v2029
    %2300 = vmatprep.subr.mxu0 0.0
    %2301 = vmatpush1.msra.mxu0 %v2028
    %2302 = vmatprep.subr.mxu0 0.0
    %2303 = vmatpush2.msra.mxu0 %v2059
    %2304 = vmatprep.subr.mxu0 0.0
    %2305 = vmatpush2.msra.mxu0 %v2058
    %2306 = vmatprep.subr.mxu0 0.0
    %2307 = vmatpush2.msra.mxu0 %v2057
    %2308 = vmatprep.subr.mxu0 0.0
    %2309 = vmatpush2.msra.mxu0 %v2056
    %2310 = vmatprep.subr.mxu0 0.0
    %2311 = vmatpush2.msra.mxu0 %v2055
    %2312 = vmatprep.subr.mxu0 0.0
    %2313 = vmatpush2.msra.mxu0 %v2054
    %2314 = vmatprep.subr.mxu0 0.0
    %2315 = vmatpush2.msra.mxu0 %v2053
    %2316 = vmatprep.subr.mxu0 0.0
    %2317 = vmatpush2.msra.mxu0 %v2052
    %2318 = vmatprep.subr.mxu0 0.0
    %2319 = vmatpush2.msra.mxu0 %v2051
    %2320 = vmatprep.subr.mxu0 0.0
    %2321 = vmatpush2.msra.mxu0 %v2050
    %2322 = vmatprep.subr.mxu0 0.0
    %2323 = vmatpush2.msra.mxu0 %v2049
    %2324 = vmatprep.subr.mxu0 0.0
    %2325 = vmatpush2.msra.mxu0 %v2048
    %2326 = vmatprep.subr.mxu0 0.0
    %2327 = vmatpush2.msra.mxu0 %v2047
    %2328 = vmatprep.subr.mxu0 0.0
    %2329 = vmatpush2.msra.mxu0 %v2046
    %2330 = vmatprep.subr.mxu0 0.0
    %2331 = vmatpush2.msra.mxu0 %v2045
    %2332 = vmatprep.subr.mxu0 0.0
    %2333 = vmatpush2.msra.mxu0 %v2044
    %2334 = vmatprep.mubr.f32.mxu0 %v1931
    %2335 = vmatmul.mubr.f32.gmra.mxu0 %v1930
    %v2336 = vpop.f32.mrf.mxu0
    %v2337 = vadd.f32 %v2267, %v2336
    %v2338 = vpop.f32.mrf.mxu0
    %2339 = vdwg.mxu0
    %2340 = vmax.xlane.f32.xlu0 %v2337
    %v2341 = vpop.xlane.xlu0 %2340
    %v2342 = vsub.f32 %v2337, %v2341
    %v2343 = vmul.f32 %v2342, 1.442695
    %v2344 = vpow.pop %v2343
    %v2345 = vld [vmem:[#allocation10] sm:$0xff]
    %v2346 = vld [vmem:[#allocation10 + $0x8] sm:$0xff]
    %v2347 = vld [vmem:[#allocation10 + $0x10] sm:$0xff]
    %v2348 = vld [vmem:[#allocation10 + $0x18] sm:$0xff]
    %v2349 = vld [vmem:[#allocation10 + $0x20] sm:$0xff]
    %v2350 = vld [vmem:[#allocation10 + $0x28] sm:$0xff]
    %v2351 = vld [vmem:[#allocation10 + $0x30] sm:$0xff]
    %v2352 = vld [vmem:[#allocation10 + $0x38] sm:$0xff]
    %v2353 = vld [vmem:[#allocation10 + $0x40] sm:$0xff]
    %v2354 = vld [vmem:[#allocation10 + $0x48] sm:$0xff]
    %v2355 = vld [vmem:[#allocation10 + $0x50] sm:$0xff]
    %v2356 = vld [vmem:[#allocation10 + $0x58] sm:$0xff]
    %v2357 = vld [vmem:[#allocation10 + $0x60] sm:$0xff]
    %v2358 = vld [vmem:[#allocation10 + $0x68] sm:$0xff]
    %v2359 = vld [vmem:[#allocation10 + $0x70] sm:$0xff]
    %v2360 = vld [vmem:[#allocation10 + $0x78] sm:$0xff]
    %2361 = vmatprep.subr.mxu0 0.0
    %2362 = vmatpush1.msra.mxu0 %v2360
    %2363 = vmatprep.subr.mxu0 0.0
    %2364 = vmatpush1.msra.mxu0 %v2359
    %2365 = vmatprep.subr.mxu0 0.0
    %2366 = vmatpush1.msra.mxu0 %v2358
    %2367 = vmatprep.subr.mxu0 0.0
    %2368 = vmatpush1.msra.mxu0 %v2357
    %2369 = vmatprep.subr.mxu0 0.0
    %2370 = vmatpush1.msra.mxu0 %v2356
    %2371 = vmatprep.subr.mxu0 0.0
    %2372 = vmatpush1.msra.mxu0 %v2355
    %2373 = vmatprep.subr.mxu0 0.0
    %2374 = vmatpush1.msra.mxu0 %v2354
    %2375 = vmatprep.subr.mxu0 0.0
    %2376 = vmatpush1.msra.mxu0 %v2353
    %2377 = vmatprep.subr.mxu0 0.0
    %2378 = vmatpush1.msra.mxu0 %v2352
    %2379 = vmatprep.subr.mxu0 0.0
    %2380 = vmatpush1.msra.mxu0 %v2351
    %2381 = vmatprep.subr.mxu0 0.0
    %2382 = vmatpush1.msra.mxu0 %v2350
    %2383 = vmatprep.subr.mxu0 0.0
    %2384 = vmatpush1.msra.mxu0 %v2349
    %2385 = vmatprep.subr.mxu0 0.0
    %2386 = vmatpush1.msra.mxu0 %v2348
    %2387 = vmatprep.subr.mxu0 0.0
    %2388 = vmatpush1.msra.mxu0 %v2347
    %2389 = vmatprep.subr.mxu0 0.0
    %2390 = vmatpush1.msra.mxu0 %v2346
    %2391 = vmatprep.subr.mxu0 0.0
    %2392 = vmatpush1.msra.mxu0 %v2345
    %2393 = vmatprep.subr.mxu0 0.0
    %2394 = vmatpush2.msra.mxu0 0.0
    %2395 = vmatprep.subr.mxu0 0.0
    %2396 = vmatpush2.msra.mxu0 0.0
    %2397 = vmatprep.subr.mxu0 0.0
    %2398 = vmatpush2.msra.mxu0 0.0
    %2399 = vmatprep.subr.mxu0 0.0
    %2400 = vmatpush2.msra.mxu0 0.0
    %2401 = vmatprep.subr.mxu0 0.0
    %2402 = vmatpush2.msra.mxu0 0.0
    %2403 = vmatprep.subr.mxu0 0.0
    %2404 = vmatpush2.msra.mxu0 0.0
    %2405 = vmatprep.subr.mxu0 0.0
    %2406 = vmatpush2.msra.mxu0 0.0
    %2407 = vmatprep.subr.mxu0 0.0
    %2408 = vmatpush2.msra.mxu0 0.0
    %2409 = vmatprep.subr.mxu0 0.0
    %2410 = vmatpush2.msra.mxu0 0.0
    %2411 = vmatprep.subr.mxu0 0.0
    %2412 = vmatpush2.msra.mxu0 0.0
    %2413 = vmatprep.subr.mxu0 0.0
    %2414 = vmatpush2.msra.mxu0 0.0
    %2415 = vmatprep.subr.mxu0 0.0
    %2416 = vmatpush2.msra.mxu0 0.0
    %2417 = vmatprep.subr.mxu0 0.0
    %2418 = vmatpush2.msra.mxu0 0.0
    %2419 = vmatprep.subr.mxu0 0.0
    %2420 = vmatpush2.msra.mxu0 0.0
    %2421 = vmatprep.subr.mxu0 0.0
    %2422 = vmatpush2.msra.mxu0 0.0
    %2423 = vmatprep.subr.mxu0 0.0
    %2424 = vmatpush2.msra.mxu0 0.0
    %2425 = vmatprep.mubr.f32.mxu0 0.0
    %2426 = vmatmul.mubr.f32.gmra.mxu0 %v2344
    %v2427 = vpop.f32.mrf.mxu0
    %v2428 = vadd.f32 0.0, %v2427
    %v2429 = vpop.f32.mrf.mxu0
    %2430 = vdwg.mxu0
    %v2431 = vrcp.pop %v2428
    %v2432 = vmul.f32 %v2428, %v2431
    %v2433 = vsub.f32 2.0, %v2432
    %v2434 = vmul.f32 %v2431, %v2433
    %v2435 = vmul.f32 %v2344, %v2434
    %v2436 = vld [vmem:[#allocation11] sm:$0xff]
    %v2437 = vld [vmem:[#allocation11 + $0x8] sm:$0xff]
    %v2438 = vld [vmem:[#allocation11 + $0x10] sm:$0xff]
    %v2439 = vld [vmem:[#allocation11 + $0x18] sm:$0xff]
    %v2440 = vld [vmem:[#allocation11 + $0x20] sm:$0xff]
    %v2441 = vld [vmem:[#allocation11 + $0x28] sm:$0xff]
    %v2442 = vld [vmem:[#allocation11 + $0x30] sm:$0xff]
    %v2443 = vld [vmem:[#allocation11 + $0x38] sm:$0xff]
    %v2444 = vld [vmem:[#allocation11 + $0x40] sm:$0xff]
    %v2445 = vld [vmem:[#allocation11 + $0x48] sm:$0xff]
    %v2446 = vld [vmem:[#allocation11 + $0x50] sm:$0xff]
    %v2447 = vld [vmem:[#allocation11 + $0x58] sm:$0xff]
    %v2448 = vld [vmem:[#allocation11 + $0x60] sm:$0xff]
    %v2449 = vld [vmem:[#allocation11 + $0x68] sm:$0xff]
    %v2450 = vld [vmem:[#allocation11 + $0x70] sm:$0xff]
    %v2451 = vld [vmem:[#allocation11 + $0x78] sm:$0xff]
    %v2452 = vld [vmem:[#allocation11 + $0x80] sm:$0xff]
    %v2453 = vld [vmem:[#allocation11 + $0x88] sm:$0xff]
    %v2454 = vld [vmem:[#allocation11 + $0x90] sm:$0xff]
    %v2455 = vld [vmem:[#allocation11 + $0x98] sm:$0xff]
    %v2456 = vld [vmem:[#allocation11 + $0xa0] sm:$0xff]
    %v2457 = vld [vmem:[#allocation11 + $0xa8] sm:$0xff]
    %v2458 = vld [vmem:[#allocation11 + $0xb0] sm:$0xff]
    %v2459 = vld [vmem:[#allocation11 + $0xb8] sm:$0xff]
    %v2460 = vld [vmem:[#allocation11 + $0xc0] sm:$0xff]
    %v2461 = vld [vmem:[#allocation11 + $0xc8] sm:$0xff]
    %v2462 = vld [vmem:[#allocation11 + $0xd0] sm:$0xff]
    %v2463 = vld [vmem:[#allocation11 + $0xd8] sm:$0xff]
    %v2464 = vld [vmem:[#allocation11 + $0xe0] sm:$0xff]
    %v2465 = vld [vmem:[#allocation11 + $0xe8] sm:$0xff]
    %v2466 = vld [vmem:[#allocation11 + $0xf0] sm:$0xff]
    %v2467 = vld [vmem:[#allocation11 + $0xf8] sm:$0xff]
    %v2468 = vld [vmem:[#allocation11 + $0x100] sm:$0xff]
    %v2469 = vld [vmem:[#allocation11 + $0x108] sm:$0xff]
    %v2470 = vld [vmem:[#allocation11 + $0x110] sm:$0xff]
    %v2471 = vld [vmem:[#allocation11 + $0x118] sm:$0xff]
    %v2472 = vld [vmem:[#allocation11 + $0x120] sm:$0xff]
    %v2473 = vld [vmem:[#allocation11 + $0x128] sm:$0xff]
    %v2474 = vld [vmem:[#allocation11 + $0x130] sm:$0xff]
    %v2475 = vld [vmem:[#allocation11 + $0x138] sm:$0xff]
    %v2476 = vld [vmem:[#allocation11 + $0x140] sm:$0xff]
    %v2477 = vld [vmem:[#allocation11 + $0x148] sm:$0xff]
    %v2478 = vld [vmem:[#allocation11 + $0x150] sm:$0xff]
    %v2479 = vld [vmem:[#allocation11 + $0x158] sm:$0xff]
    %v2480 = vld [vmem:[#allocation11 + $0x160] sm:$0xff]
    %v2481 = vld [vmem:[#allocation11 + $0x168] sm:$0xff]
    %v2482 = vld [vmem:[#allocation11 + $0x170] sm:$0xff]
    %v2483 = vld [vmem:[#allocation11 + $0x178] sm:$0xff]
    %v2484 = vld [vmem:[#allocation11 + $0x180] sm:$0xff]
    %v2485 = vld [vmem:[#allocation11 + $0x188] sm:$0xff]
    %v2486 = vld [vmem:[#allocation11 + $0x190] sm:$0xff]
    %v2487 = vld [vmem:[#allocation11 + $0x198] sm:$0xff]
    %v2488 = vld [vmem:[#allocation11 + $0x1a0] sm:$0xff]
    %v2489 = vld [vmem:[#allocation11 + $0x1a8] sm:$0xff]
    %v2490 = vld [vmem:[#allocation11 + $0x1b0] sm:$0xff]
    %v2491 = vld [vmem:[#allocation11 + $0x1b8] sm:$0xff]
    %v2492 = vld [vmem:[#allocation11 + $0x1c0] sm:$0xff]
    %v2493 = vld [vmem:[#allocation11 + $0x1c8] sm:$0xff]
    %v2494 = vld [vmem:[#allocation11 + $0x1d0] sm:$0xff]
    %v2495 = vld [vmem:[#allocation11 + $0x1d8] sm:$0xff]
    %v2496 = vld [vmem:[#allocation11 + $0x1e0] sm:$0xff]
    %v2497 = vld [vmem:[#allocation11 + $0x1e8] sm:$0xff]
    %v2498 = vld [vmem:[#allocation11 + $0x1f0] sm:$0xff]
    %v2499 = vld [vmem:[#allocation11 + $0x1f8] sm:$0xff]
    %v2500 = vld [vmem:[#allocation11 + $0x200] sm:$0xff]
    %v2501 = vld [vmem:[#allocation11 + $0x208] sm:$0xff]
    %v2502 = vld [vmem:[#allocation11 + $0x210] sm:$0xff]
    %v2503 = vld [vmem:[#allocation11 + $0x218] sm:$0xff]
    %v2504 = vld [vmem:[#allocation11 + $0x220] sm:$0xff]
    %v2505 = vld [vmem:[#allocation11 + $0x228] sm:$0xff]
    %v2506 = vld [vmem:[#allocation11 + $0x230] sm:$0xff]
    %v2507 = vld [vmem:[#allocation11 + $0x238] sm:$0xff]
    %v2508 = vld [vmem:[#allocation11 + $0x240] sm:$0xff]
    %v2509 = vld [vmem:[#allocation11 + $0x248] sm:$0xff]
    %v2510 = vld [vmem:[#allocation11 + $0x250] sm:$0xff]
    %v2511 = vld [vmem:[#allocation11 + $0x258] sm:$0xff]
    %v2512 = vld [vmem:[#allocation11 + $0x260] sm:$0xff]
    %v2513 = vld [vmem:[#allocation11 + $0x268] sm:$0xff]
    %v2514 = vld [vmem:[#allocation11 + $0x270] sm:$0xff]
    %v2515 = vld [vmem:[#allocation11 + $0x278] sm:$0xff]
    %v2516 = vld [vmem:[#allocation11 + $0x280] sm:$0xff]
    %v2517 = vld [vmem:[#allocation11 + $0x288] sm:$0xff]
    %v2518 = vld [vmem:[#allocation11 + $0x290] sm:$0xff]
    %v2519 = vld [vmem:[#allocation11 + $0x298] sm:$0xff]
    %v2520 = vld [vmem:[#allocation11 + $0x2a0] sm:$0xff]
    %v2521 = vld [vmem:[#allocation11 + $0x2a8] sm:$0xff]
    %v2522 = vld [vmem:[#allocation11 + $0x2b0] sm:$0xff]
    %v2523 = vld [vmem:[#allocation11 + $0x2b8] sm:$0xff]
    %v2524 = vld [vmem:[#allocation11 + $0x2c0] sm:$0xff]
    %v2525 = vld [vmem:[#allocation11 + $0x2c8] sm:$0xff]
    %v2526 = vld [vmem:[#allocation11 + $0x2d0] sm:$0xff]
    %v2527 = vld [vmem:[#allocation11 + $0x2d8] sm:$0xff]
    %v2528 = vld [vmem:[#allocation11 + $0x2e0] sm:$0xff]
    %v2529 = vld [vmem:[#allocation11 + $0x2e8] sm:$0xff]
    %v2530 = vld [vmem:[#allocation11 + $0x2f0] sm:$0xff]
    %v2531 = vld [vmem:[#allocation11 + $0x2f8] sm:$0xff]
    %v2532 = vld [vmem:[#allocation11 + $0x300] sm:$0xff]
    %v2533 = vld [vmem:[#allocation11 + $0x308] sm:$0xff]
    %v2534 = vld [vmem:[#allocation11 + $0x310] sm:$0xff]
    %v2535 = vld [vmem:[#allocation11 + $0x318] sm:$0xff]
    %v2536 = vld [vmem:[#allocation11 + $0x320] sm:$0xff]
    %v2537 = vld [vmem:[#allocation11 + $0x328] sm:$0xff]
    %v2538 = vld [vmem:[#allocation11 + $0x330] sm:$0xff]
    %v2539 = vld [vmem:[#allocation11 + $0x338] sm:$0xff]
    %v2540 = vld [vmem:[#allocation11 + $0x340] sm:$0xff]
    %v2541 = vld [vmem:[#allocation11 + $0x348] sm:$0xff]
    %v2542 = vld [vmem:[#allocation11 + $0x350] sm:$0xff]
    %v2543 = vld [vmem:[#allocation11 + $0x358] sm:$0xff]
    %v2544 = vld [vmem:[#allocation11 + $0x360] sm:$0xff]
    %v2545 = vld [vmem:[#allocation11 + $0x368] sm:$0xff]
    %v2546 = vld [vmem:[#allocation11 + $0x370] sm:$0xff]
    %v2547 = vld [vmem:[#allocation11 + $0x378] sm:$0xff]
    %v2548 = vld [vmem:[#allocation11 + $0x380] sm:$0xff]
    %v2549 = vld [vmem:[#allocation11 + $0x388] sm:$0xff]
    %v2550 = vld [vmem:[#allocation11 + $0x390] sm:$0xff]
    %v2551 = vld [vmem:[#allocation11 + $0x398] sm:$0xff]
    %v2552 = vld [vmem:[#allocation11 + $0x3a0] sm:$0xff]
    %v2553 = vld [vmem:[#allocation11 + $0x3a8] sm:$0xff]
    %v2554 = vld [vmem:[#allocation11 + $0x3b0] sm:$0xff]
    %v2555 = vld [vmem:[#allocation11 + $0x3b8] sm:$0xff]
    %v2556 = vld [vmem:[#allocation11 + $0x3c0] sm:$0xff]
    %v2557 = vld [vmem:[#allocation11 + $0x3c8] sm:$0xff]
    %v2558 = vld [vmem:[#allocation11 + $0x3d0] sm:$0xff]
    %v2559 = vld [vmem:[#allocation11 + $0x3d8] sm:$0xff]
    %v2560 = vld [vmem:[#allocation11 + $0x3e0] sm:$0xff]
    %v2561 = vld [vmem:[#allocation11 + $0x3e8] sm:$0xff]
    %v2562 = vld [vmem:[#allocation11 + $0x3f0] sm:$0xff]
    %v2563 = vld [vmem:[#allocation11 + $0x3f8] sm:$0xff]
    %2564 = vmatprep.subr.mxu0 %v2557
    %2565 = vmatpush1.msra.mxu0 %v2556
    %2566 = vmatprep.subr.mxu0 %v2549
    %2567 = vmatpush1.msra.mxu0 %v2548
    %2568 = vmatprep.subr.mxu0 %v2541
    %2569 = vmatpush1.msra.mxu0 %v2540
    %2570 = vmatprep.subr.mxu0 %v2533
    %2571 = vmatpush1.msra.mxu0 %v2532
    %2572 = vmatprep.subr.mxu0 %v2525
    %2573 = vmatpush1.msra.mxu0 %v2524
    %2574 = vmatprep.subr.mxu0 %v2517
    %2575 = vmatpush1.msra.mxu0 %v2516
    %2576 = vmatprep.subr.mxu0 %v2509
    %2577 = vmatpush1.msra.mxu0 %v2508
    %2578 = vmatprep.subr.mxu0 %v2501
    %2579 = vmatpush1.msra.mxu0 %v2500
    %2580 = vmatprep.subr.mxu0 %v2493
    %2581 = vmatpush1.msra.mxu0 %v2492
    %2582 = vmatprep.subr.mxu0 %v2485
    %2583 = vmatpush1.msra.mxu0 %v2484
    %2584 = vmatprep.subr.mxu0 %v2477
    %2585 = vmatpush1.msra.mxu0 %v2476
    %2586 = vmatprep.subr.mxu0 %v2469
    %2587 = vmatpush1.msra.mxu0 %v2468
    %2588 = vmatprep.subr.mxu0 %v2461
    %2589 = vmatpush1.msra.mxu0 %v2460
    %2590 = vmatprep.subr.mxu0 %v2453
    %2591 = vmatpush1.msra.mxu0 %v2452
    %2592 = vmatprep.subr.mxu0 %v2445
    %2593 = vmatpush1.msra.mxu0 %v2444
    %2594 = vmatprep.subr.mxu0 %v2437
    %2595 = vmatpush1.msra.mxu0 %v2436
    %2596 = vmatprep.subr.mxu0 0.0
    %2597 = vmatpush2.msra.mxu0 0.0
    %2598 = vmatprep.subr.mxu0 0.0
    %2599 = vmatpush2.msra.mxu0 0.0
    %2600 = vmatprep.subr.mxu0 0.0
    %2601 = vmatpush2.msra.mxu0 0.0
    %2602 = vmatprep.subr.mxu0 0.0
    %2603 = vmatpush2.msra.mxu0 0.0
    %2604 = vmatprep.subr.mxu0 0.0
    %2605 = vmatpush2.msra.mxu0 0.0
    %2606 = vmatprep.subr.mxu0 0.0
    %2607 = vmatpush2.msra.mxu0 0.0
    %2608 = vmatprep.subr.mxu0 0.0
    %2609 = vmatpush2.msra.mxu0 0.0
    %2610 = vmatprep.subr.mxu0 0.0
    %2611 = vmatpush2.msra.mxu0 0.0
    %2612 = vmatprep.subr.mxu0 0.0
    %2613 = vmatpush2.msra.mxu0 0.0
    %2614 = vmatprep.subr.mxu0 0.0
    %2615 = vmatpush2.msra.mxu0 0.0
    %2616 = vmatprep.subr.mxu0 0.0
    %2617 = vmatpush2.msra.mxu0 0.0
    %2618 = vmatprep.subr.mxu0 0.0
    %2619 = vmatpush2.msra.mxu0 0.0
    %2620 = vmatprep.subr.mxu0 0.0
    %2621 = vmatpush2.msra.mxu0 0.0
    %2622 = vmatprep.subr.mxu0 0.0
    %2623 = vmatpush2.msra.mxu0 0.0
    %2624 = vmatprep.subr.mxu0 0.0
    %2625 = vmatpush2.msra.mxu0 0.0
    %2626 = vmatprep.subr.mxu0 0.0
    %2627 = vmatpush2.msra.mxu0 0.0
    %2628 = vmatprep.mubr.f32.mxu0 0.0
    %2629 = vmatmul.mubr.f32.gmra.mxu0 %v2435
    %v2630 = vpop.f32.mrf.mxu0
    %v2631 = vadd.f32 0.0, %v2630
    %v2632 = vpop.f32.mrf.mxu0
    %v2633 = vadd.f32 0.0, %v2632
    %2634 = vdwg.mxu0
    %2635 = vmatprep.subr.mxu0 %v2559
    %2636 = vmatpush1.msra.mxu0 %v2558
    %2637 = vmatprep.subr.mxu0 %v2551
    %2638 = vmatpush1.msra.mxu0 %v2550
    %2639 = vmatprep.subr.mxu0 %v2543
    %2640 = vmatpush1.msra.mxu0 %v2542
    %2641 = vmatprep.subr.mxu0 %v2535
    %2642 = vmatpush1.msra.mxu0 %v2534
    %2643 = vmatprep.subr.mxu0 %v2527
    %2644 = vmatpush1.msra.mxu0 %v2526
    %2645 = vmatprep.subr.mxu0 %v2519
    %2646 = vmatpush1.msra.mxu0 %v2518
    %2647 = vmatprep.subr.mxu0 %v2511
    %2648 = vmatpush1.msra.mxu0 %v2510
    %2649 = vmatprep.subr.mxu0 %v2503
    %2650 = vmatpush1.msra.mxu0 %v2502
    %2651 = vmatprep.subr.mxu0 %v2495
    %2652 = vmatpush1.msra.mxu0 %v2494
    %2653 = vmatprep.subr.mxu0 %v2487
    %2654 = vmatpush1.msra.mxu0 %v2486
    %2655 = vmatprep.subr.mxu0 %v2479
    %2656 = vmatpush1.msra.mxu0 %v2478
    %2657 = vmatprep.subr.mxu0 %v2471
    %2658 = vmatpush1.msra.mxu0 %v2470
    %2659 = vmatprep.subr.mxu0 %v2463
    %2660 = vmatpush1.msra.mxu0 %v2462
    %2661 = vmatprep.subr.mxu0 %v2455
    %2662 = vmatpush1.msra.mxu0 %v2454
    %2663 = vmatprep.subr.mxu0 %v2447
    %2664 = vmatpush1.msra.mxu0 %v2446
    %2665 = vmatprep.subr.mxu0 %v2439
    %2666 = vmatpush1.msra.mxu0 %v2438
    %2667 = vmatprep.subr.mxu0 0.0
    %2668 = vmatpush2.msra.mxu0 0.0
    %2669 = vmatprep.subr.mxu0 0.0
    %2670 = vmatpush2.msra.mxu0 0.0
    %2671 = vmatprep.subr.mxu0 0.0
    %2672 = vmatpush2.msra.mxu0 0.0
    %2673 = vmatprep.subr.mxu0 0.0
    %2674 = vmatpush2.msra.mxu0 0.0
    %2675 = vmatprep.subr.mxu0 0.0
    %2676 = vmatpush2.msra.mxu0 0.0
    %2677 = vmatprep.subr.mxu0 0.0
    %2678 = vmatpush2.msra.mxu0 0.0
    %2679 = vmatprep.subr.mxu0 0.0
    %2680 = vmatpush2.msra.mxu0 0.0
    %2681 = vmatprep.subr.mxu0 0.0
    %2682 = vmatpush2.msra.mxu0 0.0
    %2683 = vmatprep.subr.mxu0 0.0
    %2684 = vmatpush2.msra.mxu0 0.0
    %2685 = vmatprep.subr.mxu0 0.0
    %2686 = vmatpush2.msra.mxu0 0.0
    %2687 = vmatprep.subr.mxu0 0.0
    %2688 = vmatpush2.msra.mxu0 0.0
    %2689 = vmatprep.subr.mxu0 0.0
    %2690 = vmatpush2.msra.mxu0 0.0
    %2691 = vmatprep.subr.mxu0 0.0
    %2692 = vmatpush2.msra.mxu0 0.0
    %2693 = vmatprep.subr.mxu0 0.0
    %2694 = vmatpush2.msra.mxu0 0.0
    %2695 = vmatprep.subr.mxu0 0.0
    %2696 = vmatpush2.msra.mxu0 0.0
    %2697 = vmatprep.subr.mxu0 0.0
    %2698 = vmatpush2.msra.mxu0 0.0
    %2699 = vmatprep.mubr.f32.mxu0 0.0
    %2700 = vmatmul.mubr.f32.gmra.mxu0 %v2435
    %v2701 = vpop.f32.mrf.mxu0
    %v2702 = vadd.f32 0.0, %v2701
    %v2703 = vpop.f32.mrf.mxu0
    %v2704 = vadd.f32 0.0, %v2703
    %2705 = vdwg.mxu0
    %2706 = vmatprep.subr.mxu0 %v2561
    %2707 = vmatpush1.msra.mxu0 %v2560
    %2708 = vmatprep.subr.mxu0 %v2553
    %2709 = vmatpush1.msra.mxu0 %v2552
    %2710 = vmatprep.subr.mxu0 %v2545
    %2711 = vmatpush1.msra.mxu0 %v2544
    %2712 = vmatprep.subr.mxu0 %v2537
    %2713 = vmatpush1.msra.mxu0 %v2536
    %2714 = vmatprep.subr.mxu0 %v2529
    %2715 = vmatpush1.msra.mxu0 %v2528
    %2716 = vmatprep.subr.mxu0 %v2521
    %2717 = vmatpush1.msra.mxu0 %v2520
    %2718 = vmatprep.subr.mxu0 %v2513
    %2719 = vmatpush1.msra.mxu0 %v2512
    %2720 = vmatprep.subr.mxu0 %v2505
    %2721 = vmatpush1.msra.mxu0 %v2504
    %2722 = vmatprep.subr.mxu0 %v2497
    %2723 = vmatpush1.msra.mxu0 %v2496
    %2724 = vmatprep.subr.mxu0 %v2489
    %2725 = vmatpush1.msra.mxu0 %v2488
    %2726 = vmatprep.subr.mxu0 %v2481
    %2727 = vmatpush1.msra.mxu0 %v2480
    %2728 = vmatprep.subr.mxu0 %v2473
    %2729 = vmatpush1.msra.mxu0 %v2472
    %2730 = vmatprep.subr.mxu0 %v2465
    %2731 = vmatpush1.msra.mxu0 %v2464
    %2732 = vmatprep.subr.mxu0 %v2457
    %2733 = vmatpush1.msra.mxu0 %v2456
    %2734 = vmatprep.subr.mxu0 %v2449
    %2735 = vmatpush1.msra.mxu0 %v2448
    %2736 = vmatprep.subr.mxu0 %v2441
    %2737 = vmatpush1.msra.mxu0 %v2440
    %2738 = vmatprep.subr.mxu0 0.0
    %2739 = vmatpush2.msra.mxu0 0.0
    %2740 = vmatprep.subr.mxu0 0.0
    %2741 = vmatpush2.msra.mxu0 0.0
    %2742 = vmatprep.subr.mxu0 0.0
    %2743 = vmatpush2.msra.mxu0 0.0
    %2744 = vmatprep.subr.mxu0 0.0
    %2745 = vmatpush2.msra.mxu0 0.0
    %2746 = vmatprep.subr.mxu0 0.0
    %2747 = vmatpush2.msra.mxu0 0.0
    %2748 = vmatprep.subr.mxu0 0.0
    %2749 = vmatpush2.msra.mxu0 0.0
    %2750 = vmatprep.subr.mxu0 0.0
    %2751 = vmatpush2.msra.mxu0 0.0
    %2752 = vmatprep.subr.mxu0 0.0
    %2753 = vmatpush2.msra.mxu0 0.0
    %2754 = vmatprep.subr.mxu0 0.0
    %2755 = vmatpush2.msra.mxu0 0.0
    %2756 = vmatprep.subr.mxu0 0.0
    %2757 = vmatpush2.msra.mxu0 0.0
    %2758 = vmatprep.subr.mxu0 0.0
    %2759 = vmatpush2.msra.mxu0 0.0
    %2760 = vmatprep.subr.mxu0 0.0
    %2761 = vmatpush2.msra.mxu0 0.0
    %2762 = vmatprep.subr.mxu0 0.0
    %2763 = vmatpush2.msra.mxu0 0.0
    %2764 = vmatprep.subr.mxu0 0.0
    %2765 = vmatpush2.msra.mxu0 0.0
    %2766 = vmatprep.subr.mxu0 0.0
    %2767 = vmatpush2.msra.mxu0 0.0
    %2768 = vmatprep.subr.mxu0 0.0
    %2769 = vmatpush2.msra.mxu0 0.0
    %2770 = vmatprep.mubr.f32.mxu0 0.0
    %2771 = vmatmul.mubr.f32.gmra.mxu0 %v2435
    %v2772 = vpop.f32.mrf.mxu0
    %v2773 = vadd.f32 0.0, %v2772
    %v2774 = vpop.f32.mrf.mxu0
    %v2775 = vadd.f32 0.0, %v2774
    %2776 = vdwg.mxu0
    %2777 = vmatprep.subr.mxu0 %v2563
    %2778 = vmatpush1.msra.mxu0 %v2562
    %2779 = vmatprep.subr.mxu0 %v2555
    %2780 = vmatpush1.msra.mxu0 %v2554
    %2781 = vmatprep.subr.mxu0 %v2547
    %2782 = vmatpush1.msra.mxu0 %v2546
    %2783 = vmatprep.subr.mxu0 %v2539
    %2784 = vmatpush1.msra.mxu0 %v2538
    %2785 = vmatprep.subr.mxu0 %v2531
    %2786 = vmatpush1.msra.mxu0 %v2530
    %2787 = vmatprep.subr.mxu0 %v2523
    %2788 = vmatpush1.msra.mxu0 %v2522
    %2789 = vmatprep.subr.mxu0 %v2515
    %2790 = vmatpush1.msra.mxu0 %v2514
    %2791 = vmatprep.subr.mxu0 %v2507
    %2792 = vmatpush1.msra.mxu0 %v2506
    %2793 = vmatprep.subr.mxu0 %v2499
    %2794 = vmatpush1.msra.mxu0 %v2498
    %2795 = vmatprep.subr.mxu0 %v2491
    %2796 = vmatpush1.msra.mxu0 %v2490
    %2797 = vmatprep.subr.mxu0 %v2483
    %2798 = vmatpush1.msra.mxu0 %v2482
    %2799 = vmatprep.subr.mxu0 %v2475
    %2800 = vmatpush1.msra.mxu0 %v2474
    %2801 = vmatprep.subr.mxu0 %v2467
    %2802 = vmatpush1.msra.mxu0 %v2466
    %2803 = vmatprep.subr.mxu0 %v2459
    %2804 = vmatpush1.msra.mxu0 %v2458
    %2805 = vmatprep.subr.mxu0 %v2451
    %2806 = vmatpush1.msra.mxu0 %v2450
    %2807 = vmatprep.subr.mxu0 %v2443
    %2808 = vmatpush1.msra.mxu0 %v2442
    %2809 = vmatprep.subr.mxu0 0.0
    %2810 = vmatpush2.msra.mxu0 0.0
    %2811 = vmatprep.subr.mxu0 0.0
    %2812 = vmatpush2.msra.mxu0 0.0
    %2813 = vmatprep.subr.mxu0 0.0
    %2814 = vmatpush2.msra.mxu0 0.0
    %2815 = vmatprep.subr.mxu0 0.0
    %2816 = vmatpush2.msra.mxu0 0.0
    %2817 = vmatprep.subr.mxu0 0.0
    %2818 = vmatpush2.msra.mxu0 0.0
    %2819 = vmatprep.subr.mxu0 0.0
    %2820 = vmatpush2.msra.mxu0 0.0
    %2821 = vmatprep.subr.mxu0 0.0
    %2822 = vmatpush2.msra.mxu0 0.0
    %2823 = vmatprep.subr.mxu0 0.0
    %2824 = vmatpush2.msra.mxu0 0.0
    %2825 = vmatprep.subr.mxu0 0.0
    %2826 = vmatpush2.msra.mxu0 0.0
    %2827 = vmatprep.subr.mxu0 0.0
    %2828 = vmatpush2.msra.mxu0 0.0
    %2829 = vmatprep.subr.mxu0 0.0
    %2830 = vmatpush2.msra.mxu0 0.0
    %2831 = vmatprep.subr.mxu0 0.0
    %2832 = vmatpush2.msra.mxu0 0.0
    %2833 = vmatprep.subr.mxu0 0.0
    %2834 = vmatpush2.msra.mxu0 0.0
    %2835 = vmatprep.subr.mxu0 0.0
    %2836 = vmatpush2.msra.mxu0 0.0
    %2837 = vmatprep.subr.mxu0 0.0
    %2838 = vmatpush2.msra.mxu0 0.0
    %2839 = vmatprep.subr.mxu0 0.0
    %2840 = vmatpush2.msra.mxu0 0.0
    %2841 = vmatprep.mubr.f32.mxu0 0.0
    %2842 = vmatmul.mubr.f32.gmra.mxu0 %v2435
    %v2843 = vpop.f32.mrf.mxu0
    %v2844 = vadd.f32 0.0, %v2843
    %v2845 = vpop.f32.mrf.mxu0
    %v2846 = vadd.f32 0.0, %v2845
    %2847 = vdwg.mxu0
    %v2848 = vmul.f32 %v2631, %v1707
    %v2849 = vmul.f32 %v2633, %v1709
    %v2850 = vmul.f32 %v2702, %v1778
    %v2851 = vmul.f32 %v2704, %v1780
    %v2852 = vmul.f32 %v2773, %v1849
    %v2853 = vmul.f32 %v2775, %v1851
    %v2854 = vmul.f32 %v2844, %v1920
    %v2855 = vmul.f32 %v2846, %v1922
    %v2856 = vld [vmem:[#allocation13] sm:$0xff]
    %v2857 = vld [vmem:[#allocation13 + $0x8] sm:$0xff]
    %v2858 = vld [vmem:[#allocation13 + $0x10] sm:$0xff]
    %v2859 = vld [vmem:[#allocation13 + $0x18] sm:$0xff]
    %v2860 = vld [vmem:[#allocation13 + $0x20] sm:$0xff]
    %v2861 = vld [vmem:[#allocation13 + $0x28] sm:$0xff]
    %v2862 = vld [vmem:[#allocation13 + $0x30] sm:$0xff]
    %v2863 = vld [vmem:[#allocation13 + $0x38] sm:$0xff]
    %v2864 = vld [vmem:[#allocation13 + $0x40] sm:$0xff]
    %v2865 = vld [vmem:[#allocation13 + $0x48] sm:$0xff]
    %v2866 = vld [vmem:[#allocation13 + $0x50] sm:$0xff]
    %v2867 = vld [vmem:[#allocation13 + $0x58] sm:$0xff]
    %v2868 = vld [vmem:[#allocation13 + $0x60] sm:$0xff]
    %v2869 = vld [vmem:[#allocation13 + $0x68] sm:$0xff]
    %v2870 = vld [vmem:[#allocation13 + $0x70] sm:$0xff]
    %v2871 = vld [vmem:[#allocation13 + $0x78] sm:$0xff]
    %v2872 = vld [vmem:[#allocation13 + $0x80] sm:$0xff]
    %v2873 = vld [vmem:[#allocation13 + $0x88] sm:$0xff]
    %v2874 = vld [vmem:[#allocation13 + $0x90] sm:$0xff]
    %v2875 = vld [vmem:[#allocation13 + $0x98] sm:$0xff]
    %v2876 = vld [vmem:[#allocation13 + $0xa0] sm:$0xff]
    %v2877 = vld [vmem:[#allocation13 + $0xa8] sm:$0xff]
    %v2878 = vld [vmem:[#allocation13 + $0xb0] sm:$0xff]
    %v2879 = vld [vmem:[#allocation13 + $0xb8] sm:$0xff]
    %v2880 = vld [vmem:[#allocation13 + $0xc0] sm:$0xff]
    %v2881 = vld [vmem:[#allocation13 + $0xc8] sm:$0xff]
    %v2882 = vld [vmem:[#allocation13 + $0xd0] sm:$0xff]
    %v2883 = vld [vmem:[#allocation13 + $0xd8] sm:$0xff]
    %v2884 = vld [vmem:[#allocation13 + $0xe0] sm:$0xff]
    %v2885 = vld [vmem:[#allocation13 + $0xe8] sm:$0xff]
    %v2886 = vld [vmem:[#allocation13 + $0xf0] sm:$0xff]
    %v2887 = vld [vmem:[#allocation13 + $0xf8] sm:$0xff]
    %v2888 = vld [vmem:[#allocation13 + $0x100] sm:$0xff]
    %v2889 = vld [vmem:[#allocation13 + $0x108] sm:$0xff]
    %v2890 = vld [vmem:[#allocation13 + $0x110] sm:$0xff]
    %v2891 = vld [vmem:[#allocation13 + $0x118] sm:$0xff]
    %v2892 = vld [vmem:[#allocation13 + $0x120] sm:$0xff]
    %v2893 = vld [vmem:[#allocation13 + $0x128] sm:$0xff]
    %v2894 = vld [vmem:[#allocation13 + $0x130] sm:$0xff]
    %v2895 = vld [vmem:[#allocation13 + $0x138] sm:$0xff]
    %v2896 = vld [vmem:[#allocation13 + $0x140] sm:$0xff]
    %v2897 = vld [vmem:[#allocation13 + $0x148] sm:$0xff]
    %v2898 = vld [vmem:[#allocation13 + $0x150] sm:$0xff]
    %v2899 = vld [vmem:[#allocation13 + $0x158] sm:$0xff]
    %v2900 = vld [vmem:[#allocation13 + $0x160] sm:$0xff]
    %v2901 = vld [vmem:[#allocation13 + $0x168] sm:$0xff]
    %v2902 = vld [vmem:[#allocation13 + $0x170] sm:$0xff]
    %v2903 = vld [vmem:[#allocation13 + $0x178] sm:$0xff]
    %v2904 = vld [vmem:[#allocation13 + $0x180] sm:$0xff]
    %v2905 = vld [vmem:[#allocation13 + $0x188] sm:$0xff]
    %v2906 = vld [vmem:[#allocation13 + $0x190] sm:$0xff]
    %v2907 = vld [vmem:[#allocation13 + $0x198] sm:$0xff]
    %v2908 = vld [vmem:[#allocation13 + $0x1a0] sm:$0xff]
    %v2909 = vld [vmem:[#allocation13 + $0x1a8] sm:$0xff]
    %v2910 = vld [vmem:[#allocation13 + $0x1b0] sm:$0xff]
    %v2911 = vld [vmem:[#allocation13 + $0x1b8] sm:$0xff]
    %v2912 = vld [vmem:[#allocation13 + $0x1c0] sm:$0xff]
    %v2913 = vld [vmem:[#allocation13 + $0x1c8] sm:$0xff]
    %v2914 = vld [vmem:[#allocation13 + $0x1d0] sm:$0xff]
    %v2915 = vld [vmem:[#allocation13 + $0x1d8] sm:$0xff]
    %v2916 = vld [vmem:[#allocation13 + $0x1e0] sm:$0xff]
    %v2917 = vld [vmem:[#allocation13 + $0x1e8] sm:$0xff]
    %v2918 = vld [vmem:[#allocation13 + $0x1f0] sm:$0xff]
    %v2919 = vld [vmem:[#allocation13 + $0x1f8] sm:$0xff]
    %v2920 = vld [vmem:[#allocation13 + $0x200] sm:$0xff]
    %v2921 = vld [vmem:[#allocation13 + $0x208] sm:$0xff]
    %v2922 = vld [vmem:[#allocation13 + $0x210] sm:$0xff]
    %v2923 = vld [vmem:[#allocation13 + $0x218] sm:$0xff]
    %v2924 = vld [vmem:[#allocation13 + $0x220] sm:$0xff]
    %v2925 = vld [vmem:[#allocation13 + $0x228] sm:$0xff]
    %v2926 = vld [vmem:[#allocation13 + $0x230] sm:$0xff]
    %v2927 = vld [vmem:[#allocation13 + $0x238] sm:$0xff]
    %v2928 = vld [vmem:[#allocation13 + $0x240] sm:$0xff]
    %v2929 = vld [vmem:[#allocation13 + $0x248] sm:$0xff]
    %v2930 = vld [vmem:[#allocation13 + $0x250] sm:$0xff]
    %v2931 = vld [vmem:[#allocation13 + $0x258] sm:$0xff]
    %v2932 = vld [vmem:[#allocation13 + $0x260] sm:$0xff]
    %v2933 = vld [vmem:[#allocation13 + $0x268] sm:$0xff]
    %v2934 = vld [vmem:[#allocation13 + $0x270] sm:$0xff]
    %v2935 = vld [vmem:[#allocation13 + $0x278] sm:$0xff]
    %v2936 = vld [vmem:[#allocation13 + $0x280] sm:$0xff]
    %v2937 = vld [vmem:[#allocation13 + $0x288] sm:$0xff]
    %v2938 = vld [vmem:[#allocation13 + $0x290] sm:$0xff]
    %v2939 = vld [vmem:[#allocation13 + $0x298] sm:$0xff]
    %v2940 = vld [vmem:[#allocation13 + $0x2a0] sm:$0xff]
    %v2941 = vld [vmem:[#allocation13 + $0x2a8] sm:$0xff]
    %v2942 = vld [vmem:[#allocation13 + $0x2b0] sm:$0xff]
    %v2943 = vld [vmem:[#allocation13 + $0x2b8] sm:$0xff]
    %v2944 = vld [vmem:[#allocation13 + $0x2c0] sm:$0xff]
    %v2945 = vld [vmem:[#allocation13 + $0x2c8] sm:$0xff]
    %v2946 = vld [vmem:[#allocation13 + $0x2d0] sm:$0xff]
    %v2947 = vld [vmem:[#allocation13 + $0x2d8] sm:$0xff]
    %v2948 = vld [vmem:[#allocation13 + $0x2e0] sm:$0xff]
    %v2949 = vld [vmem:[#allocation13 + $0x2e8] sm:$0xff]
    %v2950 = vld [vmem:[#allocation13 + $0x2f0] sm:$0xff]
    %v2951 = vld [vmem:[#allocation13 + $0x2f8] sm:$0xff]
    %v2952 = vld [vmem:[#allocation13 + $0x300] sm:$0xff]
    %v2953 = vld [vmem:[#allocation13 + $0x308] sm:$0xff]
    %v2954 = vld [vmem:[#allocation13 + $0x310] sm:$0xff]
    %v2955 = vld [vmem:[#allocation13 + $0x318] sm:$0xff]
    %v2956 = vld [vmem:[#allocation13 + $0x320] sm:$0xff]
    %v2957 = vld [vmem:[#allocation13 + $0x328] sm:$0xff]
    %v2958 = vld [vmem:[#allocation13 + $0x330] sm:$0xff]
    %v2959 = vld [vmem:[#allocation13 + $0x338] sm:$0xff]
    %v2960 = vld [vmem:[#allocation13 + $0x340] sm:$0xff]
    %v2961 = vld [vmem:[#allocation13 + $0x348] sm:$0xff]
    %v2962 = vld [vmem:[#allocation13 + $0x350] sm:$0xff]
    %v2963 = vld [vmem:[#allocation13 + $0x358] sm:$0xff]
    %v2964 = vld [vmem:[#allocation13 + $0x360] sm:$0xff]
    %v2965 = vld [vmem:[#allocation13 + $0x368] sm:$0xff]
    %v2966 = vld [vmem:[#allocation13 + $0x370] sm:$0xff]
    %v2967 = vld [vmem:[#allocation13 + $0x378] sm:$0xff]
    %v2968 = vld [vmem:[#allocation13 + $0x380] sm:$0xff]
    %v2969 = vld [vmem:[#allocation13 + $0x388] sm:$0xff]
    %v2970 = vld [vmem:[#allocation13 + $0x390] sm:$0xff]
    %v2971 = vld [vmem:[#allocation13 + $0x398] sm:$0xff]
    %v2972 = vld [vmem:[#allocation13 + $0x3a0] sm:$0xff]
    %v2973 = vld [vmem:[#allocation13 + $0x3a8] sm:$0xff]
    %v2974 = vld [vmem:[#allocation13 + $0x3b0] sm:$0xff]
    %v2975 = vld [vmem:[#allocation13 + $0x3b8] sm:$0xff]
    %v2976 = vld [vmem:[#allocation13 + $0x3c0] sm:$0xff]
    %v2977 = vld [vmem:[#allocation13 + $0x3c8] sm:$0xff]
    %v2978 = vld [vmem:[#allocation13 + $0x3d0] sm:$0xff]
    %v2979 = vld [vmem:[#allocation13 + $0x3d8] sm:$0xff]
    %v2980 = vld [vmem:[#allocation13 + $0x3e0] sm:$0xff]
    %v2981 = vld [vmem:[#allocation13 + $0x3e8] sm:$0xff]
    %v2982 = vld [vmem:[#allocation13 + $0x3f0] sm:$0xff]
    %v2983 = vld [vmem:[#allocation13 + $0x3f8] sm:$0xff]
    %v2984 = vld [vmem:[#allocation13 + $0x400] sm:$0xff]
    %v2985 = vld [vmem:[#allocation13 + $0x408] sm:$0xff]
    %v2986 = vld [vmem:[#allocation13 + $0x410] sm:$0xff]
    %v2987 = vld [vmem:[#allocation13 + $0x418] sm:$0xff]
    %v2988 = vld [vmem:[#allocation13 + $0x420] sm:$0xff]
    %v2989 = vld [vmem:[#allocation13 + $0x428] sm:$0xff]
    %v2990 = vld [vmem:[#allocation13 + $0x430] sm:$0xff]
    %v2991 = vld [vmem:[#allocation13 + $0x438] sm:$0xff]
    %v2992 = vld [vmem:[#allocation13 + $0x440] sm:$0xff]
    %v2993 = vld [vmem:[#allocation13 + $0x448] sm:$0xff]
    %v2994 = vld [vmem:[#allocation13 + $0x450] sm:$0xff]
    %v2995 = vld [vmem:[#allocation13 + $0x458] sm:$0xff]
    %v2996 = vld [vmem:[#allocation13 + $0x460] sm:$0xff]
    %v2997 = vld [vmem:[#allocation13 + $0x468] sm:$0xff]
    %v2998 = vld [vmem:[#allocation13 + $0x470] sm:$0xff]
    %v2999 = vld [vmem:[#allocation13 + $0x478] sm:$0xff]
    %v3000 = vld [vmem:[#allocation13 + $0x480] sm:$0xff]
    %v3001 = vld [vmem:[#allocation13 + $0x488] sm:$0xff]
    %v3002 = vld [vmem:[#allocation13 + $0x490] sm:$0xff]
    %v3003 = vld [vmem:[#allocation13 + $0x498] sm:$0xff]
    %v3004 = vld [vmem:[#allocation13 + $0x4a0] sm:$0xff]
    %v3005 = vld [vmem:[#allocation13 + $0x4a8] sm:$0xff]
    %v3006 = vld [vmem:[#allocation13 + $0x4b0] sm:$0xff]
    %v3007 = vld [vmem:[#allocation13 + $0x4b8] sm:$0xff]
    %v3008 = vld [vmem:[#allocation13 + $0x4c0] sm:$0xff]
    %v3009 = vld [vmem:[#allocation13 + $0x4c8] sm:$0xff]
    %v3010 = vld [vmem:[#allocation13 + $0x4d0] sm:$0xff]
    %v3011 = vld [vmem:[#allocation13 + $0x4d8] sm:$0xff]
    %v3012 = vld [vmem:[#allocation13 + $0x4e0] sm:$0xff]
    %v3013 = vld [vmem:[#allocation13 + $0x4e8] sm:$0xff]
    %v3014 = vld [vmem:[#allocation13 + $0x4f0] sm:$0xff]
    %v3015 = vld [vmem:[#allocation13 + $0x4f8] sm:$0xff]
    %v3016 = vld [vmem:[#allocation13 + $0x500] sm:$0xff]
    %v3017 = vld [vmem:[#allocation13 + $0x508] sm:$0xff]
    %v3018 = vld [vmem:[#allocation13 + $0x510] sm:$0xff]
    %v3019 = vld [vmem:[#allocation13 + $0x518] sm:$0xff]
    %v3020 = vld [vmem:[#allocation13 + $0x520] sm:$0xff]
    %v3021 = vld [vmem:[#allocation13 + $0x528] sm:$0xff]
    %v3022 = vld [vmem:[#allocation13 + $0x530] sm:$0xff]
    %v3023 = vld [vmem:[#allocation13 + $0x538] sm:$0xff]
    %v3024 = vld [vmem:[#allocation13 + $0x540] sm:$0xff]
    %v3025 = vld [vmem:[#allocation13 + $0x548] sm:$0xff]
    %v3026 = vld [vmem:[#allocation13 + $0x550] sm:$0xff]
    %v3027 = vld [vmem:[#allocation13 + $0x558] sm:$0xff]
    %v3028 = vld [vmem:[#allocation13 + $0x560] sm:$0xff]
    %v3029 = vld [vmem:[#allocation13 + $0x568] sm:$0xff]
    %v3030 = vld [vmem:[#allocation13 + $0x570] sm:$0xff]
    %v3031 = vld [vmem:[#allocation13 + $0x578] sm:$0xff]
    %v3032 = vld [vmem:[#allocation13 + $0x580] sm:$0xff]
    %v3033 = vld [vmem:[#allocation13 + $0x588] sm:$0xff]
    %v3034 = vld [vmem:[#allocation13 + $0x590] sm:$0xff]
    %v3035 = vld [vmem:[#allocation13 + $0x598] sm:$0xff]
    %v3036 = vld [vmem:[#allocation13 + $0x5a0] sm:$0xff]
    %v3037 = vld [vmem:[#allocation13 + $0x5a8] sm:$0xff]
    %v3038 = vld [vmem:[#allocation13 + $0x5b0] sm:$0xff]
    %v3039 = vld [vmem:[#allocation13 + $0x5b8] sm:$0xff]
    %v3040 = vld [vmem:[#allocation13 + $0x5c0] sm:$0xff]
    %v3041 = vld [vmem:[#allocation13 + $0x5c8] sm:$0xff]
    %v3042 = vld [vmem:[#allocation13 + $0x5d0] sm:$0xff]
    %v3043 = vld [vmem:[#allocation13 + $0x5d8] sm:$0xff]
    %v3044 = vld [vmem:[#allocation13 + $0x5e0] sm:$0xff]
    %v3045 = vld [vmem:[#allocation13 + $0x5e8] sm:$0xff]
    %v3046 = vld [vmem:[#allocation13 + $0x5f0] sm:$0xff]
    %v3047 = vld [vmem:[#allocation13 + $0x5f8] sm:$0xff]
    %v3048 = vld [vmem:[#allocation13 + $0x600] sm:$0xff]
    %v3049 = vld [vmem:[#allocation13 + $0x608] sm:$0xff]
    %v3050 = vld [vmem:[#allocation13 + $0x610] sm:$0xff]
    %v3051 = vld [vmem:[#allocation13 + $0x618] sm:$0xff]
    %v3052 = vld [vmem:[#allocation13 + $0x620] sm:$0xff]
    %v3053 = vld [vmem:[#allocation13 + $0x628] sm:$0xff]
    %v3054 = vld [vmem:[#allocation13 + $0x630] sm:$0xff]
    %v3055 = vld [vmem:[#allocation13 + $0x638] sm:$0xff]
    %v3056 = vld [vmem:[#allocation13 + $0x640] sm:$0xff]
    %v3057 = vld [vmem:[#allocation13 + $0x648] sm:$0xff]
    %v3058 = vld [vmem:[#allocation13 + $0x650] sm:$0xff]
    %v3059 = vld [vmem:[#allocation13 + $0x658] sm:$0xff]
    %v3060 = vld [vmem:[#allocation13 + $0x660] sm:$0xff]
    %v3061 = vld [vmem:[#allocation13 + $0x668] sm:$0xff]
    %v3062 = vld [vmem:[#allocation13 + $0x670] sm:$0xff]
    %v3063 = vld [vmem:[#allocation13 + $0x678] sm:$0xff]
    %v3064 = vld [vmem:[#allocation13 + $0x680] sm:$0xff]
    %v3065 = vld [vmem:[#allocation13 + $0x688] sm:$0xff]
    %v3066 = vld [vmem:[#allocation13 + $0x690] sm:$0xff]
    %v3067 = vld [vmem:[#allocation13 + $0x698] sm:$0xff]
    %v3068 = vld [vmem:[#allocation13 + $0x6a0] sm:$0xff]
    %v3069 = vld [vmem:[#allocation13 + $0x6a8] sm:$0xff]
    %v3070 = vld [vmem:[#allocation13 + $0x6b0] sm:$0xff]
    %v3071 = vld [vmem:[#allocation13 + $0x6b8] sm:$0xff]
    %v3072 = vld [vmem:[#allocation13 + $0x6c0] sm:$0xff]
    %v3073 = vld [vmem:[#allocation13 + $0x6c8] sm:$0xff]
    %v3074 = vld [vmem:[#allocation13 + $0x6d0] sm:$0xff]
    %v3075 = vld [vmem:[#allocation13 + $0x6d8] sm:$0xff]
    %v3076 = vld [vmem:[#allocation13 + $0x6e0] sm:$0xff]
    %v3077 = vld [vmem:[#allocation13 + $0x6e8] sm:$0xff]
    %v3078 = vld [vmem:[#allocation13 + $0x6f0] sm:$0xff]
    %v3079 = vld [vmem:[#allocation13 + $0x6f8] sm:$0xff]
    %v3080 = vld [vmem:[#allocation13 + $0x700] sm:$0xff]
    %v3081 = vld [vmem:[#allocation13 + $0x708] sm:$0xff]
    %v3082 = vld [vmem:[#allocation13 + $0x710] sm:$0xff]
    %v3083 = vld [vmem:[#allocation13 + $0x718] sm:$0xff]
    %v3084 = vld [vmem:[#allocation13 + $0x720] sm:$0xff]
    %v3085 = vld [vmem:[#allocation13 + $0x728] sm:$0xff]
    %v3086 = vld [vmem:[#allocation13 + $0x730] sm:$0xff]
    %v3087 = vld [vmem:[#allocation13 + $0x738] sm:$0xff]
    %v3088 = vld [vmem:[#allocation13 + $0x740] sm:$0xff]
    %v3089 = vld [vmem:[#allocation13 + $0x748] sm:$0xff]
    %v3090 = vld [vmem:[#allocation13 + $0x750] sm:$0xff]
    %v3091 = vld [vmem:[#allocation13 + $0x758] sm:$0xff]
    %v3092 = vld [vmem:[#allocation13 + $0x760] sm:$0xff]
    %v3093 = vld [vmem:[#allocation13 + $0x768] sm:$0xff]
    %v3094 = vld [vmem:[#allocation13 + $0x770] sm:$0xff]
    %v3095 = vld [vmem:[#allocation13 + $0x778] sm:$0xff]
    %v3096 = vld [vmem:[#allocation13 + $0x780] sm:$0xff]
    %v3097 = vld [vmem:[#allocation13 + $0x788] sm:$0xff]
    %v3098 = vld [vmem:[#allocation13 + $0x790] sm:$0xff]
    %v3099 = vld [vmem:[#allocation13 + $0x798] sm:$0xff]
    %v3100 = vld [vmem:[#allocation13 + $0x7a0] sm:$0xff]
    %v3101 = vld [vmem:[#allocation13 + $0x7a8] sm:$0xff]
    %v3102 = vld [vmem:[#allocation13 + $0x7b0] sm:$0xff]
    %v3103 = vld [vmem:[#allocation13 + $0x7b8] sm:$0xff]
    %v3104 = vld [vmem:[#allocation13 + $0x7c0] sm:$0xff]
    %v3105 = vld [vmem:[#allocation13 + $0x7c8] sm:$0xff]
    %v3106 = vld [vmem:[#allocation13 + $0x7d0] sm:$0xff]
    %v3107 = vld [vmem:[#allocation13 + $0x7d8] sm:$0xff]
    %v3108 = vld [vmem:[#allocation13 + $0x7e0] sm:$0xff]
    %v3109 = vld [vmem:[#allocation13 + $0x7e8] sm:$0xff]
    %v3110 = vld [vmem:[#allocation13 + $0x7f0] sm:$0xff]
    %v3111 = vld [vmem:[#allocation13 + $0x7f8] sm:$0xff]
    %3112 = vmatprep.subr.mxu0 %v2887
    %3113 = vmatpush1.msra.mxu0 %v2886
    %3114 = vmatprep.subr.mxu0 %v2885
    %3115 = vmatpush1.msra.mxu0 %v2884
    %3116 = vmatprep.subr.mxu0 %v2883
    %3117 = vmatpush1.msra.mxu0 %v2882
    %3118 = vmatprep.subr.mxu0 %v2881
    %3119 = vmatpush1.msra.mxu0 %v2880
    %3120 = vmatprep.subr.mxu0 %v2879
    %3121 = vmatpush1.msra.mxu0 %v2878
    %3122 = vmatprep.subr.mxu0 %v2877
    %3123 = vmatpush1.msra.mxu0 %v2876
    %3124 = vmatprep.subr.mxu0 %v2875
    %3125 = vmatpush1.msra.mxu0 %v2874
    %3126 = vmatprep.subr.mxu0 %v2873
    %3127 = vmatpush1.msra.mxu0 %v2872
    %3128 = vmatprep.subr.mxu0 %v2871
    %3129 = vmatpush1.msra.mxu0 %v2870
    %3130 = vmatprep.subr.mxu0 %v2869
    %3131 = vmatpush1.msra.mxu0 %v2868
    %3132 = vmatprep.subr.mxu0 %v2867
    %3133 = vmatpush1.msra.mxu0 %v2866
    %3134 = vmatprep.subr.mxu0 %v2865
    %3135 = vmatpush1.msra.mxu0 %v2864
    %3136 = vmatprep.subr.mxu0 %v2863
    %3137 = vmatpush1.msra.mxu0 %v2862
    %3138 = vmatprep.subr.mxu0 %v2861
    %3139 = vmatpush1.msra.mxu0 %v2860
    %3140 = vmatprep.subr.mxu0 %v2859
    %3141 = vmatpush1.msra.mxu0 %v2858
    %3142 = vmatprep.subr.mxu0 %v2857
    %3143 = vmatpush1.msra.mxu0 %v2856
    %3144 = vmatprep.subr.mxu0 %v2919
    %3145 = vmatpush2.msra.mxu0 %v2918
    %3146 = vmatprep.subr.mxu0 %v2917
    %3147 = vmatpush2.msra.mxu0 %v2916
    %3148 = vmatprep.subr.mxu0 %v2915
    %3149 = vmatpush2.msra.mxu0 %v2914
    %3150 = vmatprep.subr.mxu0 %v2913
    %3151 = vmatpush2.msra.mxu0 %v2912
    %3152 = vmatprep.subr.mxu0 %v2911
    %3153 = vmatpush2.msra.mxu0 %v2910
    %3154 = vmatprep.subr.mxu0 %v2909
    %3155 = vmatpush2.msra.mxu0 %v2908
    %3156 = vmatprep.subr.mxu0 %v2907
    %3157 = vmatpush2.msra.mxu0 %v2906
    %3158 = vmatprep.subr.mxu0 %v2905
    %3159 = vmatpush2.msra.mxu0 %v2904
    %3160 = vmatprep.subr.mxu0 %v2903
    %3161 = vmatpush2.msra.mxu0 %v2902
    %3162 = vmatprep.subr.mxu0 %v2901
    %3163 = vmatpush2.msra.mxu0 %v2900
    %3164 = vmatprep.subr.mxu0 %v2899
    %3165 = vmatpush2.msra.mxu0 %v2898
    %3166 = vmatprep.subr.mxu0 %v2897
    %3167 = vmatpush2.msra.mxu0 %v2896
    %3168 = vmatprep.subr.mxu0 %v2895
    %3169 = vmatpush2.msra.mxu0 %v2894
    %3170 = vmatprep.subr.mxu0 %v2893
    %3171 = vmatpush2.msra.mxu0 %v2892
    %3172 = vmatprep.subr.mxu0 %v2891
    %3173 = vmatpush2.msra.mxu0 %v2890
    %3174 = vmatprep.subr.mxu0 %v2889
    %3175 = vmatpush2.msra.mxu0 %v2888
    %3176 = vmatprep.mubr.f32.mxu0 %v2849
    %3177 = vmatmul.mubr.f32.gmra.mxu0 %v2848
    %v3178 = vpop.f32.mrf.mxu0
    %v3179 = vadd.f32 0.0, %v3178
    %v3180 = vpop.f32.mrf.mxu0
    %v3181 = vadd.f32 0.0, %v3180
    %3182 = vdwg.mxu0
    %3183 = vmatprep.subr.mxu0 %v2951
    %3184 = vmatpush1.msra.mxu0 %v2950
    %3185 = vmatprep.subr.mxu0 %v2949
    %3186 = vmatpush1.msra.mxu0 %v2948
    %3187 = vmatprep.subr.mxu0 %v2947
    %3188 = vmatpush1.msra.mxu0 %v2946
    %3189 = vmatprep.subr.mxu0 %v2945
    %3190 = vmatpush1.msra.mxu0 %v2944
    %3191 = vmatprep.subr.mxu0 %v2943
    %3192 = vmatpush1.msra.mxu0 %v2942
    %3193 = vmatprep.subr.mxu0 %v2941
    %3194 = vmatpush1.msra.mxu0 %v2940
    %3195 = vmatprep.subr.mxu0 %v2939
    %3196 = vmatpush1.msra.mxu0 %v2938
    %3197 = vmatprep.subr.mxu0 %v2937
    %3198 = vmatpush1.msra.mxu0 %v2936
    %3199 = vmatprep.subr.mxu0 %v2935
    %3200 = vmatpush1.msra.mxu0 %v2934
    %3201 = vmatprep.subr.mxu0 %v2933
    %3202 = vmatpush1.msra.mxu0 %v2932
    %3203 = vmatprep.subr.mxu0 %v2931
    %3204 = vmatpush1.msra.mxu0 %v2930
    %3205 = vmatprep.subr.mxu0 %v2929
    %3206 = vmatpush1.msra.mxu0 %v2928
    %3207 = vmatprep.subr.mxu0 %v2927
    %3208 = vmatpush1.msra.mxu0 %v2926
    %3209 = vmatprep.subr.mxu0 %v2925
    %3210 = vmatpush1.msra.mxu0 %v2924
    %3211 = vmatprep.subr.mxu0 %v2923
    %3212 = vmatpush1.msra.mxu0 %v2922
    %3213 = vmatprep.subr.mxu0 %v2921
    %3214 = vmatpush1.msra.mxu0 %v2920
    %3215 = vmatprep.subr.mxu0 %v2983
    %3216 = vmatpush2.msra.mxu0 %v2982
    %3217 = vmatprep.subr.mxu0 %v2981
    %3218 = vmatpush2.msra.mxu0 %v2980
    %3219 = vmatprep.subr.mxu0 %v2979
    %3220 = vmatpush2.msra.mxu0 %v2978
    %3221 = vmatprep.subr.mxu0 %v2977
    %3222 = vmatpush2.msra.mxu0 %v2976
    %3223 = vmatprep.subr.mxu0 %v2975
    %3224 = vmatpush2.msra.mxu0 %v2974
    %3225 = vmatprep.subr.mxu0 %v2973
    %3226 = vmatpush2.msra.mxu0 %v2972
    %3227 = vmatprep.subr.mxu0 %v2971
    %3228 = vmatpush2.msra.mxu0 %v2970
    %3229 = vmatprep.subr.mxu0 %v2969
    %3230 = vmatpush2.msra.mxu0 %v2968
    %3231 = vmatprep.subr.mxu0 %v2967
    %3232 = vmatpush2.msra.mxu0 %v2966
    %3233 = vmatprep.subr.mxu0 %v2965
    %3234 = vmatpush2.msra.mxu0 %v2964
    %3235 = vmatprep.subr.mxu0 %v2963
    %3236 = vmatpush2.msra.mxu0 %v2962
    %3237 = vmatprep.subr.mxu0 %v2961
    %3238 = vmatpush2.msra.mxu0 %v2960
    %3239 = vmatprep.subr.mxu0 %v2959
    %3240 = vmatpush2.msra.mxu0 %v2958
    %3241 = vmatprep.subr.mxu0 %v2957
    %3242 = vmatpush2.msra.mxu0 %v2956
    %3243 = vmatprep.subr.mxu0 %v2955
    %3244 = vmatpush2.msra.mxu0 %v2954
    %3245 = vmatprep.subr.mxu0 %v2953
    %3246 = vmatpush2.msra.mxu0 %v2952
    %3247 = vmatprep.mubr.f32.mxu0 %v2851
    %3248 = vmatmul.mubr.f32.gmra.mxu0 %v2850
    %v3249 = vpop.f32.mrf.mxu0
    %v3250 = vadd.f32 %v3179, %v3249
    %v3251 = vpop.f32.mrf.mxu0
    %v3252 = vadd.f32 %v3181, %v3251
    %3253 = vdwg.mxu0
    %3254 = vmatprep.subr.mxu0 %v3015
    %3255 = vmatpush1.msra.mxu0 %v3014
    %3256 = vmatprep.subr.mxu0 %v3013
    %3257 = vmatpush1.msra.mxu0 %v3012
    %3258 = vmatprep.subr.mxu0 %v3011
    %3259 = vmatpush1.msra.mxu0 %v3010
    %3260 = vmatprep.subr.mxu0 %v3009
    %3261 = vmatpush1.msra.mxu0 %v3008
    %3262 = vmatprep.subr.mxu0 %v3007
    %3263 = vmatpush1.msra.mxu0 %v3006
    %3264 = vmatprep.subr.mxu0 %v3005
    %3265 = vmatpush1.msra.mxu0 %v3004
    %3266 = vmatprep.subr.mxu0 %v3003
    %3267 = vmatpush1.msra.mxu0 %v3002
    %3268 = vmatprep.subr.mxu0 %v3001
    %3269 = vmatpush1.msra.mxu0 %v3000
    %3270 = vmatprep.subr.mxu0 %v2999
    %3271 = vmatpush1.msra.mxu0 %v2998
    %3272 = vmatprep.subr.mxu0 %v2997
    %3273 = vmatpush1.msra.mxu0 %v2996
    %3274 = vmatprep.subr.mxu0 %v2995
    %3275 = vmatpush1.msra.mxu0 %v2994
    %3276 = vmatprep.subr.mxu0 %v2993
    %3277 = vmatpush1.msra.mxu0 %v2992
    %3278 = vmatprep.subr.mxu0 %v2991
    %3279 = vmatpush1.msra.mxu0 %v2990
    %3280 = vmatprep.subr.mxu0 %v2989
    %3281 = vmatpush1.msra.mxu0 %v2988
    %3282 = vmatprep.subr.mxu0 %v2987
    %3283 = vmatpush1.msra.mxu0 %v2986
    %3284 = vmatprep.subr.mxu0 %v2985
    %3285 = vmatpush1.msra.mxu0 %v2984
    %3286 = vmatprep.subr.mxu0 %v3047
    %3287 = vmatpush2.msra.mxu0 %v3046
    %3288 = vmatprep.subr.mxu0 %v3045
    %3289 = vmatpush2.msra.mxu0 %v3044
    %3290 = vmatprep.subr.mxu0 %v3043
    %3291 = vmatpush2.msra.mxu0 %v3042
    %3292 = vmatprep.subr.mxu0 %v3041
    %3293 = vmatpush2.msra.mxu0 %v3040
    %3294 = vmatprep.subr.mxu0 %v3039
    %3295 = vmatpush2.msra.mxu0 %v3038
    %3296 = vmatprep.subr.mxu0 %v3037
    %3297 = vmatpush2.msra.mxu0 %v3036
    %3298 = vmatprep.subr.mxu0 %v3035
    %3299 = vmatpush2.msra.mxu0 %v3034
    %3300 = vmatprep.subr.mxu0 %v3033
    %3301 = vmatpush2.msra.mxu0 %v3032
    %3302 = vmatprep.subr.mxu0 %v3031
    %3303 = vmatpush2.msra.mxu0 %v3030
    %3304 = vmatprep.subr.mxu0 %v3029
    %3305 = vmatpush2.msra.mxu0 %v3028
    %3306 = vmatprep.subr.mxu0 %v3027
    %3307 = vmatpush2.msra.mxu0 %v3026
    %3308 = vmatprep.subr.mxu0 %v3025
    %3309 = vmatpush2.msra.mxu0 %v3024
    %3310 = vmatprep.subr.mxu0 %v3023
    %3311 = vmatpush2.msra.mxu0 %v3022
    %3312 = vmatprep.subr.mxu0 %v3021
    %3313 = vmatpush2.msra.mxu0 %v3020
    %3314 = vmatprep.subr.mxu0 %v3019
    %3315 = vmatpush2.msra.mxu0 %v3018
    %3316 = vmatprep.subr.mxu0 %v3017
    %3317 = vmatpush2.msra.mxu0 %v3016
    %3318 = vmatprep.mubr.f32.mxu0 %v2853
    %3319 = vmatmul.mubr.f32.gmra.mxu0 %v2852
    %v3320 = vpop.f32.mrf.mxu0
    %v3321 = vadd.f32 %v3250, %v3320
    %v3322 = vpop.f32.mrf.mxu0
    %v3323 = vadd.f32 %v3252, %v3322
    %3324 = vdwg.mxu0
    %3325 = vmatprep.subr.mxu0 %v3079
    %3326 = vmatpush1.msra.mxu0 %v3078
    %3327 = vmatprep.subr.mxu0 %v3077
    %3328 = vmatpush1.msra.mxu0 %v3076
    %3329 = vmatprep.subr.mxu0 %v3075
    %3330 = vmatpush1.msra.mxu0 %v3074
    %3331 = vmatprep.subr.mxu0 %v3073
    %3332 = vmatpush1.msra.mxu0 %v3072
    %3333 = vmatprep.subr.mxu0 %v3071
    %3334 = vmatpush1.msra.mxu0 %v3070
    %3335 = vmatprep.subr.mxu0 %v3069
    %3336 = vmatpush1.msra.mxu0 %v3068
    %3337 = vmatprep.subr.mxu0 %v3067
    %3338 = vmatpush1.msra.mxu0 %v3066
    %3339 = vmatprep.subr.mxu0 %v3065
    %3340 = vmatpush1.msra.mxu0 %v3064
    %3341 = vmatprep.subr.mxu0 %v3063
    %3342 = vmatpush1.msra.mxu0 %v3062
    %3343 = vmatprep.subr.mxu0 %v3061
    %3344 = vmatpush1.msra.mxu0 %v3060
    %3345 = vmatprep.subr.mxu0 %v3059
    %3346 = vmatpush1.msra.mxu0 %v3058
    %3347 = vmatprep.subr.mxu0 %v3057
    %3348 = vmatpush1.msra.mxu0 %v3056
    %3349 = vmatprep.subr.mxu0 %v3055
    %3350 = vmatpush1.msra.mxu0 %v3054
    %3351 = vmatprep.subr.mxu0 %v3053
    %3352 = vmatpush1.msra.mxu0 %v3052
    %3353 = vmatprep.subr.mxu0 %v3051
    %3354 = vmatpush1.msra.mxu0 %v3050
    %3355 = vmatprep.subr.mxu0 %v3049
    %3356 = vmatpush1.msra.mxu0 %v3048
    %3357 = vmatprep.subr.mxu0 %v3111
    %3358 = vmatpush2.msra.mxu0 %v3110
    %3359 = vmatprep.subr.mxu0 %v3109
    %3360 = vmatpush2.msra.mxu0 %v3108
    %3361 = vmatprep.subr.mxu0 %v3107
    %3362 = vmatpush2.msra.mxu0 %v3106
    %3363 = vmatprep.subr.mxu0 %v3105
    %3364 = vmatpush2.msra.mxu0 %v3104
    %3365 = vmatprep.subr.mxu0 %v3103
    %3366 = vmatpush2.msra.mxu0 %v3102
    %3367 = vmatprep.subr.mxu0 %v3101
    %3368 = vmatpush2.msra.mxu0 %v3100
    %3369 = vmatprep.subr.mxu0 %v3099
    %3370 = vmatpush2.msra.mxu0 %v3098
    %3371 = vmatprep.subr.mxu0 %v3097
    %3372 = vmatpush2.msra.mxu0 %v3096
    %3373 = vmatprep.subr.mxu0 %v3095
    %3374 = vmatpush2.msra.mxu0 %v3094
    %3375 = vmatprep.subr.mxu0 %v3093
    %3376 = vmatpush2.msra.mxu0 %v3092
    %3377 = vmatprep.subr.mxu0 %v3091
    %3378 = vmatpush2.msra.mxu0 %v3090
    %3379 = vmatprep.subr.mxu0 %v3089
    %3380 = vmatpush2.msra.mxu0 %v3088
    %3381 = vmatprep.subr.mxu0 %v3087
    %3382 = vmatpush2.msra.mxu0 %v3086
    %3383 = vmatprep.subr.mxu0 %v3085
    %3384 = vmatpush2.msra.mxu0 %v3084
    %3385 = vmatprep.subr.mxu0 %v3083
    %3386 = vmatpush2.msra.mxu0 %v3082
    %3387 = vmatprep.subr.mxu0 %v3081
    %3388 = vmatpush2.msra.mxu0 %v3080
    %3389 = vmatprep.mubr.f32.mxu0 %v2855
    %3390 = vmatmul.mubr.f32.gmra.mxu0 %v2854
    %v3391 = vpop.f32.mrf.mxu0
    %v3392 = vadd.f32 %v3321, %v3391
    %v3393 = vpop.f32.mrf.mxu0
    %v3394 = vadd.f32 %v3323, %v3393
    %3395 = vdwg.mxu0
    %v3396 = vld [vmem:[#allocation14] sm:$0xff]
    %v3397 = vld [vmem:[#allocation14 + $0x8] sm:$0xff]
    %v3398 = vld [vmem:[#allocation14 + $0x10] sm:$0xff]
    %v3399 = vld [vmem:[#allocation14 + $0x18] sm:$0xff]
    %v3400 = vld [vmem:[#allocation14 + $0x20] sm:$0xff]
    %v3401 = vld [vmem:[#allocation14 + $0x28] sm:$0xff]
    %v3402 = vld [vmem:[#allocation14 + $0x30] sm:$0xff]
    %v3403 = vld [vmem:[#allocation14 + $0x38] sm:$0xff]
    %v3404 = vld [vmem:[#allocation14 + $0x40] sm:$0xff]
    %v3405 = vld [vmem:[#allocation14 + $0x48] sm:$0xff]
    %v3406 = vld [vmem:[#allocation14 + $0x50] sm:$0xff]
    %v3407 = vld [vmem:[#allocation14 + $0x58] sm:$0xff]
    %v3408 = vld [vmem:[#allocation14 + $0x60] sm:$0xff]
    %v3409 = vld [vmem:[#allocation14 + $0x68] sm:$0xff]
    %v3410 = vld [vmem:[#allocation14 + $0x70] sm:$0xff]
    %v3411 = vld [vmem:[#allocation14 + $0x78] sm:$0xff]
    %v3412 = vld [vmem:[#allocation14 + $0x80] sm:$0xff]
    %v3413 = vld [vmem:[#allocation14 + $0x88] sm:$0xff]
    %v3414 = vld [vmem:[#allocation14 + $0x90] sm:$0xff]
    %v3415 = vld [vmem:[#allocation14 + $0x98] sm:$0xff]
    %v3416 = vld [vmem:[#allocation14 + $0xa0] sm:$0xff]
    %v3417 = vld [vmem:[#allocation14 + $0xa8] sm:$0xff]
    %v3418 = vld [vmem:[#allocation14 + $0xb0] sm:$0xff]
    %v3419 = vld [vmem:[#allocation14 + $0xb8] sm:$0xff]
    %v3420 = vld [vmem:[#allocation14 + $0xc0] sm:$0xff]
    %v3421 = vld [vmem:[#allocation14 + $0xc8] sm:$0xff]
    %v3422 = vld [vmem:[#allocation14 + $0xd0] sm:$0xff]
    %v3423 = vld [vmem:[#allocation14 + $0xd8] sm:$0xff]
    %v3424 = vld [vmem:[#allocation14 + $0xe0] sm:$0xff]
    %v3425 = vld [vmem:[#allocation14 + $0xe8] sm:$0xff]
    %v3426 = vld [vmem:[#allocation14 + $0xf0] sm:$0xff]
    %v3427 = vld [vmem:[#allocation14 + $0xf8] sm:$0xff]
    %v3428 = vld [vmem:[#allocation14 + $0x100] sm:$0xff]
    %v3429 = vld [vmem:[#allocation14 + $0x108] sm:$0xff]
    %v3430 = vld [vmem:[#allocation14 + $0x110] sm:$0xff]
    %v3431 = vld [vmem:[#allocation14 + $0x118] sm:$0xff]
    %v3432 = vld [vmem:[#allocation14 + $0x120] sm:$0xff]
    %v3433 = vld [vmem:[#allocation14 + $0x128] sm:$0xff]
    %v3434 = vld [vmem:[#allocation14 + $0x130] sm:$0xff]
    %v3435 = vld [vmem:[#allocation14 + $0x138] sm:$0xff]
    %v3436 = vld [vmem:[#allocation14 + $0x140] sm:$0xff]
    %v3437 = vld [vmem:[#allocation14 + $0x148] sm:$0xff]
    %v3438 = vld [vmem:[#allocation14 + $0x150] sm:$0xff]
    %v3439 = vld [vmem:[#allocation14 + $0x158] sm:$0xff]
    %v3440 = vld [vmem:[#allocation14 + $0x160] sm:$0xff]
    %v3441 = vld [vmem:[#allocation14 + $0x168] sm:$0xff]
    %v3442 = vld [vmem:[#allocation14 + $0x170] sm:$0xff]
    %v3443 = vld [vmem:[#allocation14 + $0x178] sm:$0xff]
    %v3444 = vld [vmem:[#allocation14 + $0x180] sm:$0xff]
    %v3445 = vld [vmem:[#allocation14 + $0x188] sm:$0xff]
    %v3446 = vld [vmem:[#allocation14 + $0x190] sm:$0xff]
    %v3447 = vld [vmem:[#allocation14 + $0x198] sm:$0xff]
    %v3448 = vld [vmem:[#allocation14 + $0x1a0] sm:$0xff]
    %v3449 = vld [vmem:[#allocation14 + $0x1a8] sm:$0xff]
    %v3450 = vld [vmem:[#allocation14 + $0x1b0] sm:$0xff]
    %v3451 = vld [vmem:[#allocation14 + $0x1b8] sm:$0xff]
    %v3452 = vld [vmem:[#allocation14 + $0x1c0] sm:$0xff]
    %v3453 = vld [vmem:[#allocation14 + $0x1c8] sm:$0xff]
    %v3454 = vld [vmem:[#allocation14 + $0x1d0] sm:$0xff]
    %v3455 = vld [vmem:[#allocation14 + $0x1d8] sm:$0xff]
    %v3456 = vld [vmem:[#allocation14 + $0x1e0] sm:$0xff]
    %v3457 = vld [vmem:[#allocation14 + $0x1e8] sm:$0xff]
    %v3458 = vld [vmem:[#allocation14 + $0x1f0] sm:$0xff]
    %v3459 = vld [vmem:[#allocation14 + $0x1f8] sm:$0xff]
    %3460 = vmatprep.subr.mxu0 %v3427
    %3461 = vmatpush1.msra.mxu0 %v3426
    %3462 = vmatprep.subr.mxu0 %v3425
    %3463 = vmatpush1.msra.mxu0 %v3424
    %3464 = vmatprep.subr.mxu0 %v3423
    %3465 = vmatpush1.msra.mxu0 %v3422
    %3466 = vmatprep.subr.mxu0 %v3421
    %3467 = vmatpush1.msra.mxu0 %v3420
    %3468 = vmatprep.subr.mxu0 %v3419
    %3469 = vmatpush1.msra.mxu0 %v3418
    %3470 = vmatprep.subr.mxu0 %v3417
    %3471 = vmatpush1.msra.mxu0 %v3416
    %3472 = vmatprep.subr.mxu0 %v3415
    %3473 = vmatpush1.msra.mxu0 %v3414
    %3474 = vmatprep.subr.mxu0 %v3413
    %3475 = vmatpush1.msra.mxu0 %v3412
    %3476 = vmatprep.subr.mxu0 %v3411
    %3477 = vmatpush1.msra.mxu0 %v3410
    %3478 = vmatprep.subr.mxu0 %v3409
    %3479 = vmatpush1.msra.mxu0 %v3408
    %3480 = vmatprep.subr.mxu0 %v3407
    %3481 = vmatpush1.msra.mxu0 %v3406
    %3482 = vmatprep.subr.mxu0 %v3405
    %3483 = vmatpush1.msra.mxu0 %v3404
    %3484 = vmatprep.subr.mxu0 %v3403
    %3485 = vmatpush1.msra.mxu0 %v3402
    %3486 = vmatprep.subr.mxu0 %v3401
    %3487 = vmatpush1.msra.mxu0 %v3400
    %3488 = vmatprep.subr.mxu0 %v3399
    %3489 = vmatpush1.msra.mxu0 %v3398
    %3490 = vmatprep.subr.mxu0 %v3397
    %3491 = vmatpush1.msra.mxu0 %v3396
    %3492 = vmatprep.subr.mxu0 %v3459
    %3493 = vmatpush2.msra.mxu0 %v3458
    %3494 = vmatprep.subr.mxu0 %v3457
    %3495 = vmatpush2.msra.mxu0 %v3456
    %3496 = vmatprep.subr.mxu0 %v3455
    %3497 = vmatpush2.msra.mxu0 %v3454
    %3498 = vmatprep.subr.mxu0 %v3453
    %3499 = vmatpush2.msra.mxu0 %v3452
    %3500 = vmatprep.subr.mxu0 %v3451
    %3501 = vmatpush2.msra.mxu0 %v3450
    %3502 = vmatprep.subr.mxu0 %v3449
    %3503 = vmatpush2.msra.mxu0 %v3448
    %3504 = vmatprep.subr.mxu0 %v3447
    %3505 = vmatpush2.msra.mxu0 %v3446
    %3506 = vmatprep.subr.mxu0 %v3445
    %3507 = vmatpush2.msra.mxu0 %v3444
    %3508 = vmatprep.subr.mxu0 %v3443
    %3509 = vmatpush2.msra.mxu0 %v3442
    %3510 = vmatprep.subr.mxu0 %v3441
    %3511 = vmatpush2.msra.mxu0 %v3440
    %3512 = vmatprep.subr.mxu0 %v3439
    %3513 = vmatpush2.msra.mxu0 %v3438
    %3514 = vmatprep.subr.mxu0 %v3437
    %3515 = vmatpush2.msra.mxu0 %v3436
    %3516 = vmatprep.subr.mxu0 %v3435
    %3517 = vmatpush2.msra.mxu0 %v3434
    %3518 = vmatprep.subr.mxu0 %v3433
    %3519 = vmatpush2.msra.mxu0 %v3432
    %3520 = vmatprep.subr.mxu0 %v3431
    %3521 = vmatpush2.msra.mxu0 %v3430
    %3522 = vmatprep.subr.mxu0 %v3429
    %3523 = vmatpush2.msra.mxu0 %v3428
    %3524 = vmatprep.mubr.f32.mxu0 %v3394
    %3525 = vmatmul.mubr.f32.gmra.mxu0 %v3392
    %v3526 = vpop.f32.mrf.mxu0
    %v3527 = vadd.f32 0.0, %v3526
    %v3528 = vpop.f32.mrf.mxu0
    %v3529 = vadd.f32 0.0, %v3528
    %3530 = vdwg.mxu0
    %v3531 = vsub.f32 %v3392, %v3527
    %v3532 = vsub.f32 %v3394, %v3529
    %v3533 = vmul.f32 %v3531, %v3531
    %v3534 = vmul.f32 %v3532, %v3532
    %3535 = vmatprep.subr.mxu0 %v3427
    %3536 = vmatpush1.msra.mxu0 %v3426
    %3537 = vmatprep.subr.mxu0 %v3425
    %3538 = vmatpush1.msra.mxu0 %v3424
    %3539 = vmatprep.subr.mxu0 %v3423
    %3540 = vmatpush1.msra.mxu0 %v3422
    %3541 = vmatprep.subr.mxu0 %v3421
    %3542 = vmatpush1.msra.mxu0 %v3420
    %3543 = vmatprep.subr.mxu0 %v3419
    %3544 = vmatpush1.msra.mxu0 %v3418
    %3545 = vmatprep.subr.mxu0 %v3417
    %3546 = vmatpush1.msra.mxu0 %v3416
    %3547 = vmatprep.subr.mxu0 %v3415
    %3548 = vmatpush1.msra.mxu0 %v3414
    %3549 = vmatprep.subr.mxu0 %v3413
    %3550 = vmatpush1.msra.mxu0 %v3412
    %3551 = vmatprep.subr.mxu0 %v3411
    %3552 = vmatpush1.msra.mxu0 %v3410
    %3553 = vmatprep.subr.mxu0 %v3409
    %3554 = vmatpush1.msra.mxu0 %v3408
    %3555 = vmatprep.subr.mxu0 %v3407
    %3556 = vmatpush1.msra.mxu0 %v3406
    %3557 = vmatprep.subr.mxu0 %v3405
    %3558 = vmatpush1.msra.mxu0 %v3404
    %3559 = vmatprep.subr.mxu0 %v3403
    %3560 = vmatpush1.msra.mxu0 %v3402
    %3561 = vmatprep.subr.mxu0 %v3401
    %3562 = vmatpush1.msra.mxu0 %v3400
    %3563 = vmatprep.subr.mxu0 %v3399
    %3564 = vmatpush1.msra.mxu0 %v3398
    %3565 = vmatprep.subr.mxu0 %v3397
    %3566 = vmatpush1.msra.mxu0 %v3396
    %3567 = vmatprep.subr.mxu0 %v3459
    %3568 = vmatpush2.msra.mxu0 %v3458
    %3569 = vmatprep.subr.mxu0 %v3457
    %3570 = vmatpush2.msra.mxu0 %v3456
    %3571 = vmatprep.subr.mxu0 %v3455
    %3572 = vmatpush2.msra.mxu0 %v3454
    %3573 = vmatprep.subr.mxu0 %v3453
    %3574 = vmatpush2.msra.mxu0 %v3452
    %3575 = vmatprep.subr.mxu0 %v3451
    %3576 = vmatpush2.msra.mxu0 %v3450
    %3577 = vmatprep.subr.mxu0 %v3449
    %3578 = vmatpush2.msra.mxu0 %v3448
    %3579 = vmatprep.subr.mxu0 %v3447
    %3580 = vmatpush2.msra.mxu0 %v3446
    %3581 = vmatprep.subr.mxu0 %v3445
    %3582 = vmatpush2.msra.mxu0 %v3444
    %3583 = vmatprep.subr.mxu0 %v3443
    %3584 = vmatpush2.msra.mxu0 %v3442
    %3585 = vmatprep.subr.mxu0 %v3441
    %3586 = vmatpush2.msra.mxu0 %v3440
    %3587 = vmatprep.subr.mxu0 %v3439
    %3588 = vmatpush2.msra.mxu0 %v3438
    %3589 = vmatprep.subr.mxu0 %v3437
    %3590 = vmatpush2.msra.mxu0 %v3436
    %3591 = vmatprep.subr.mxu0 %v3435
    %3592 = vmatpush2.msra.mxu0 %v3434
    %3593 = vmatprep.subr.mxu0 %v3433
    %3594 = vmatpush2.msra.mxu0 %v3432
    %3595 = vmatprep.subr.mxu0 %v3431
    %3596 = vmatpush2.msra.mxu0 %v3430
    %3597 = vmatprep.subr.mxu0 %v3429
    %3598 = vmatpush2.msra.mxu0 %v3428
    %3599 = vmatprep.mubr.f32.mxu0 %v3534
    %3600 = vmatmul.mubr.f32.gmra.mxu0 %v3533
    %v3601 = vpop.f32.mrf.mxu0
    %v3602 = vadd.f32 1e-05, %v3601
    %v3603 = vpop.f32.mrf.mxu0
    %v3604 = vadd.f32 1e-05, %v3603
    %3605 = vdwg.mxu0
    %v3606 = vrsqrt.pop %v3602
    %v3607 = vrsqrt.pop %v3604
    %v3608 = vmul.f32 %v3531, %v3606
    %v3609 = vmul.f32 %v3532, %v3607
    %v3610 = vld [vmem:[#allocation16] sm:$0xff]
    %v3611 = vld [vmem:[#allocation16 + $0x8] sm:$0xff]
    %v3612 = vld [vmem:[#allocation16 + $0x10] sm:$0xff]
    %v3613 = vld [vmem:[#allocation16 + $0x18] sm:$0xff]
    %v3614 = vld [vmem:[#allocation16 + $0x20] sm:$0xff]
    %v3615 = vld [vmem:[#allocation16 + $0x28] sm:$0xff]
    %v3616 = vld [vmem:[#allocation16 + $0x30] sm:$0xff]
    %v3617 = vld [vmem:[#allocation16 + $0x38] sm:$0xff]
    %v3618 = vld [vmem:[#allocation16 + $0x40] sm:$0xff]
    %v3619 = vld [vmem:[#allocation16 + $0x48] sm:$0xff]
    %v3620 = vld [vmem:[#allocation16 + $0x50] sm:$0xff]
    %v3621 = vld [vmem:[#allocation16 + $0x58] sm:$0xff]
    %v3622 = vld [vmem:[#allocation16 + $0x60] sm:$0xff]
    %v3623 = vld [vmem:[#allocation16 + $0x68] sm:$0xff]
    %v3624 = vld [vmem:[#allocation16 + $0x70] sm:$0xff]
    %v3625 = vld [vmem:[#allocation16 + $0x78] sm:$0xff]
    %v3626 = vld [vmem:[#allocation16 + $0x80] sm:$0xff]
    %v3627 = vld [vmem:[#allocation16 + $0x88] sm:$0xff]
    %v3628 = vld [vmem:[#allocation16 + $0x90] sm:$0xff]
    %v3629 = vld [vmem:[#allocation16 + $0x98] sm:$0xff]
    %v3630 = vld [vmem:[#allocation16 + $0xa0] sm:$0xff]
    %v3631 = vld [vmem:[#allocation16 + $0xa8] sm:$0xff]
    %v3632 = vld [vmem:[#allocation16 + $0xb0] sm:$0xff]
    %v3633 = vld [vmem:[#allocation16 + $0xb8] sm:$0xff]
    %v3634 = vld [vmem:[#allocation16 + $0xc0] sm:$0xff]
    %v3635 = vld [vmem:[#allocation16 + $0xc8] sm:$0xff]
    %v3636 = vld [vmem:[#allocation16 + $0xd0] sm:$0xff]
    %v3637 = vld [vmem:[#allocation16 + $0xd8] sm:$0xff]
    %v3638 = vld [vmem:[#allocation16 + $0xe0] sm:$0xff]
    %v3639 = vld [vmem:[#allocation16 + $0xe8] sm:$0xff]
    %v3640 = vld [vmem:[#allocation16 + $0xf0] sm:$0xff]
    %v3641 = vld [vmem:[#allocation16 + $0xf8] sm:$0xff]
    %v3642 = vld [vmem:[#allocation16 + $0x100] sm:$0xff]
    %v3643 = vld [vmem:[#allocation16 + $0x108] sm:$0xff]
    %v3644 = vld [vmem:[#allocation16 + $0x110] sm:$0xff]
    %v3645 = vld [vmem:[#allocation16 + $0x118] sm:$0xff]
    %v3646 = vld [vmem:[#allocation16 + $0x120] sm:$0xff]
    %v3647 = vld [vmem:[#allocation16 + $0x128] sm:$0xff]
    %v3648 = vld [vmem:[#allocation16 + $0x130] sm:$0xff]
    %v3649 = vld [vmem:[#allocation16 + $0x138] sm:$0xff]
    %v3650 = vld [vmem:[#allocation16 + $0x140] sm:$0xff]
    %v3651 = vld [vmem:[#allocation16 + $0x148] sm:$0xff]
    %v3652 = vld [vmem:[#allocation16 + $0x150] sm:$0xff]
    %v3653 = vld [vmem:[#allocation16 + $0x158] sm:$0xff]
    %v3654 = vld [vmem:[#allocation16 + $0x160] sm:$0xff]
    %v3655 = vld [vmem:[#allocation16 + $0x168] sm:$0xff]
    %v3656 = vld [vmem:[#allocation16 + $0x170] sm:$0xff]
    %v3657 = vld [vmem:[#allocation16 + $0x178] sm:$0xff]
    %v3658 = vld [vmem:[#allocation16 + $0x180] sm:$0xff]
    %v3659 = vld [vmem:[#allocation16 + $0x188] sm:$0xff]
    %v3660 = vld [vmem:[#allocation16 + $0x190] sm:$0xff]
    %v3661 = vld [vmem:[#allocation16 + $0x198] sm:$0xff]
    %v3662 = vld [vmem:[#allocation16 + $0x1a0] sm:$0xff]
    %v3663 = vld [vmem:[#allocation16 + $0x1a8] sm:$0xff]
    %v3664 = vld [vmem:[#allocation16 + $0x1b0] sm:$0xff]
    %v3665 = vld [vmem:[#allocation16 + $0x1b8] sm:$0xff]
    %v3666 = vld [vmem:[#allocation16 + $0x1c0] sm:$0xff]
    %v3667 = vld [vmem:[#allocation16 + $0x1c8] sm:$0xff]
    %v3668 = vld [vmem:[#allocation16 + $0x1d0] sm:$0xff]
    %v3669 = vld [vmem:[#allocation16 + $0x1d8] sm:$0xff]
    %v3670 = vld [vmem:[#allocation16 + $0x1e0] sm:$0xff]
    %v3671 = vld [vmem:[#allocation16 + $0x1e8] sm:$0xff]
    %v3672 = vld [vmem:[#allocation16 + $0x1f0] sm:$0xff]
    %v3673 = vld [vmem:[#allocation16 + $0x1f8] sm:$0xff]
    %v3674 = vld [vmem:[#allocation17] sm:$0x3]
    %v3676 = vlaneseq
    %v3677 = vshrl.u32 %v3676, 7
    %v3678 = vsub.s32 0, %v3677
    %v3679 = vrot.slane %v3674, %v3678
    %v3680 = vlaneseq
    %v3681 = vshrl.u32 %v3680, 7
    %v3682 = vsub.s32 1, %v3681
    %v3683 = vrot.slane %v3674, %v3682
    %3686 = vmatprep.subr.mxu0 %v3641
    %3687 = vmatpush1.msra.mxu0 %v3640
    %3688 = vmatprep.subr.mxu0 %v3639
    %3689 = vmatpush1.msra.mxu0 %v3638
    %3690 = vmatprep.subr.mxu0 %v3637
    %3691 = vmatpush1.msra.mxu0 %v3636
    %3692 = vmatprep.subr.mxu0 %v3635
    %3693 = vmatpush1.msra.mxu0 %v3634
    %3694 = vmatprep.subr.mxu0 %v3633
    %3695 = vmatpush1.msra.mxu0 %v3632
    %3696 = vmatprep.subr.mxu0 %v3631
    %3697 = vmatpush1.msra.mxu0 %v3630
    %3698 = vmatprep.subr.mxu0 %v3629
    %3699 = vmatpush1.msra.mxu0 %v3628
    %3700 = vmatprep.subr.mxu0 %v3627
    %3701 = vmatpush1.msra.mxu0 %v3626
    %3702 = vmatprep.subr.mxu0 %v3625
    %3703 = vmatpush1.msra.mxu0 %v3624
    %3704 = vmatprep.subr.mxu0 %v3623
    %3705 = vmatpush1.msra.mxu0 %v3622
    %3706 = vmatprep.subr.mxu0 %v3621
    %3707 = vmatpush1.msra.mxu0 %v3620
    %3708 = vmatprep.subr.mxu0 %v3619
    %3709 = vmatpush1.msra.mxu0 %v3618
    %3710 = vmatprep.subr.mxu0 %v3617
    %3711 = vmatpush1.msra.mxu0 %v3616
    %3712 = vmatprep.subr.mxu0 %v3615
    %3713 = vmatpush1.msra.mxu0 %v3614
    %3714 = vmatprep.subr.mxu0 %v3613
    %3715 = vmatpush1.msra.mxu0 %v3612
    %3716 = vmatprep.subr.mxu0 %v3611
    %3717 = vmatpush1.msra.mxu0 %v3610
    %3718 = vmatprep.subr.mxu0 %v3673
    %3719 = vmatpush2.msra.mxu0 %v3672
    %3720 = vmatprep.subr.mxu0 %v3671
    %3721 = vmatpush2.msra.mxu0 %v3670
    %3722 = vmatprep.subr.mxu0 %v3669
    %3723 = vmatpush2.msra.mxu0 %v3668
    %3724 = vmatprep.subr.mxu0 %v3667
    %3725 = vmatpush2.msra.mxu0 %v3666
    %3726 = vmatprep.subr.mxu0 %v3665
    %3727 = vmatpush2.msra.mxu0 %v3664
    %3728 = vmatprep.subr.mxu0 %v3663
    %3729 = vmatpush2.msra.mxu0 %v3662
    %3730 = vmatprep.subr.mxu0 %v3661
    %3731 = vmatpush2.msra.mxu0 %v3660
    %3732 = vmatprep.subr.mxu0 %v3659
    %3733 = vmatpush2.msra.mxu0 %v3658
    %3734 = vmatprep.subr.mxu0 %v3657
    %3735 = vmatpush2.msra.mxu0 %v3656
    %3736 = vmatprep.subr.mxu0 %v3655
    %3737 = vmatpush2.msra.mxu0 %v3654
    %3738 = vmatprep.subr.mxu0 %v3653
    %3739 = vmatpush2.msra.mxu0 %v3652
    %3740 = vmatprep.subr.mxu0 %v3651
    %3741 = vmatpush2.msra.mxu0 %v3650
    %3742 = vmatprep.subr.mxu0 %v3649
    %3743 = vmatpush2.msra.mxu0 %v3648
    %3744 = vmatprep.subr.mxu0 %v3647
    %3745 = vmatpush2.msra.mxu0 %v3646
    %3746 = vmatprep.subr.mxu0 %v3645
    %3747 = vmatpush2.msra.mxu0 %v3644
    %3748 = vmatprep.subr.mxu0 %v3643
    %3749 = vmatpush2.msra.mxu0 %v3642
    %3750 = vmatprep.mubr.f32.mxu0 %v3609
    %3751 = vmatmul.mubr.f32.gmra.mxu0 %v3608
    %v3752 = vpop.f32.mrf.mxu0
    %v3753 = vadd.f32 %v3679, %v3752
    %v3754 = vpop.f32.mrf.mxu0
    %v3755 = vadd.f32 %v3683, %v3754
    %3756 = vdwg.mxu0
    %3757 = vst [vmem:[#allocation19] sm:$0xff] %v3753
    %3758 = vst [vmem:[#allocation19 + $0x8] sm:$0xff] %v3755
    // Predicated region
    $region82: #{tpu_custom_call.1} parent=1 // pred_check
      _
    $region83: #{tpu_custom_call.1} parent=1 // pred_check_branch
      %3760 = sbr.rel (0) target = $region85
    $region84: #{tpu_custom_call.1} parent=1 // pred_region
      %s3762 = ssub.s32 256, 256
      %3763 = vsyncadd [#allocation4], %s3762
      %s3765 = sshll.u32 [#allocation19], 4
      %s3766 = int_to_ptr.vmem [resolvable:$true] %s3765
      %3768 = dma.vmem_to_hbm [thread:$0]  %s3766, 256, %s10, [#allocation4]
    $region85: #{tpu_custom_call.1} parent=1 // pred_fallthru
      _
    // Predicated region
    $region86: #{tpu_custom_call.1} parent=1 // pred_check
      _
    $region87: #{tpu_custom_call.1} parent=1 // pred_check_branch
      %3770 = sbr.rel (0) target = $region89
    $region88: #{tpu_custom_call.1} parent=1 // pred_region
      %3771 = dma.done [#allocation4], 256
    $region89: #{tpu_custom_call.1} parent=1 // pred_fallthru
      _
    %3772 = vsyncpa [#allocation3], 1
    %3773 = vsyncpa [#allocation6], 1
    %3774 = vsyncpa [#allocation9], 1
    %3775 = vsyncpa [#allocation12], 1
    %3776 = vsyncpa [#allocation15], 1
    %3777 = vsyncpa [#allocation18], 1
    %3778 = vsyncpa [#allocation4], 1

</llo_original>
